<compile_context>
chip_gen: v7x
topology: tpu7x:2x2x1
jax: 0.10.0
libtpu: 0.0.40
codegen_flags: <defaults>
</compile_context>

<pallas_src>
import jax
import jax.numpy as jnp
from jax.experimental import pallas as pl
from jax.experimental.pallas import tpu as pltpu

LANE = 128


def _round_up(x, m):
    return (x + m - 1) // m * m


def _pick_th(h_p8, w, target_rows=512):
    """Largest multiple-of-8 divisor of h_p8 with TH*W <= max(target_rows, 8*w)."""
    cap = max(target_rows, 8 * w)
    best = 8
    for th in range(8, h_p8 + 1, 8):
        if h_p8 % th == 0 and th * w <= cap:
            best = th
    return best


def conv_block_forward(x_nchw, w_oihw, conv_bias, gamma, beta,
                       running_mean, running_var, eps=1e-5, padding=1):
    """Conv2d(k, stride=1, 'same' padding) + BatchNorm2d(eval) + ReLU, fused on TPU."""
    N, Cin, H, W = x_nchw.shape
    Cout, _, KH, KW = w_oihw.shape
    if KH != KW or KH % 2 != 1 or padding != (KH - 1) // 2:
        raise NotImplementedError("kernel assumes stride=1, odd kernel, 'same' padding")

    # ---- tiling choices -------------------------------------------------------
    Cout_p = _round_up(Cout, LANE)
    TN = 256 if Cout_p % 256 == 0 else LANE            # Cout tile (MXU output width)
    n_c = Cout_p // TN

    H_p8 = _round_up(H, 8)                              # output rows, padded to 8
    TH = _pick_th(H_p8, W)                              # output rows per grid step
    n_h = H_p8 // TH
    M = TH * W                                          # matmul rows per step
    rows = TH + KH - 1                                  # halo-tile height
    Wp = W + 2 * padding
    Kdim = KH * KW * Cin                                # fused contraction, dense Cin

    # ---- wrapper-side layout glue (cheap XLA; bf16 halves HBM traffic) --------
    x_nhwc = jnp.transpose(x_nchw, (0, 2, 3, 1)).astype(jnp.bfloat16)
    x_sp = jnp.pad(
        x_nhwc,
        ((0, 0), (padding, padding + H_p8 - H), (padding, padding), (0, 0)))
    # Halo row tiles: tile t holds padded rows [t*TH, t*TH + rows).  Bounds the
    # kernel's resident input VMEM to one double-buffered tile.
    x_tiles = jnp.stack(
        [x_sp[:, t * TH:t * TH + rows] for t in range(n_h)], axis=1)
    # x_tiles: (N, n_h, rows, Wp, Cin)

    # Weights -> (Kdim, Cout_p); column order (kh, kw, cin) matches the patch build.
    w_hwio = jnp.transpose(w_oihw, (2, 3, 1, 0))        # (KH, KW, Cin, Cout)
    w2d = jnp.pad(w_hwio.reshape(Kdim, Cout), ((0, 0), (0, Cout_p - Cout)))
    w2d = w2d.astype(jnp.bfloat16)

    # Fold eval-mode BatchNorm (+ conv bias) into per-channel scale/shift.
    scale = gamma / jnp.sqrt(running_var + eps)         # (Cout,)
    shift = beta + scale * (conv_bias - running_mean)   # (Cout,)
    scale2 = jnp.pad(scale, (0, Cout_p - Cout)).reshape(1, Cout_p).astype(jnp.float32)
    shift2 = jnp.pad(shift, (0, Cout_p - Cout)).reshape(1, Cout_p).astype(jnp.float32)

    def kernel(x_ref, w_ref, scale_ref, shift_ref, o_ref, patch_ref):
        # x_ref:     (1, 1, rows, Wp, Cin) bf16  halo row tile for (n, h)
        # w_ref:     (Kdim, TN)            bf16  weight slab for Cout tile c
        # scale_ref: (1, TN) f32                 folded BN scale
        # shift_ref: (1, TN) f32                 folded BN shift (includes conv bias)
        # o_ref:     (1, M, TN)            bf16  lane-dense output slab
        # patch_ref: (M, Kdim)             bf16  im2col scratch, reused across c
        c = pl.program_id(2)

        # Build the im2col patch once per (n, h) tile; Cout tiles c > 0 reuse it.
        @pl.when(c == 0)
        def _build_patch():
            for kh in range(KH):
                for kw in range(KW):
                    col = (kh * KW + kw) * Cin
                    tap = x_ref[0, 0, kh:kh + TH, kw:kw + W, :]      # (TH, W, Cin)
                    patch_ref[:, col:col + Cin] = tap.reshape(M, Cin)

        # Single fused MXU matmul per Cout tile (bf16 in, f32 accumulate).
        acc = jnp.dot(patch_ref[...], w_ref[...],
                      preferred_element_type=jnp.float32)            # (M, TN) f32

        # Fused BatchNorm (eval) + ReLU epilogue on full-width f32 vregs.
        y = jnp.maximum(acc * scale_ref[0] + shift_ref[0], 0.0)
        o_ref[0] = y.astype(o_ref.dtype)

    # Weight / BN blocks never change across the grid when there is a single Cout
    # tile -> single-buffer them to save VMEM.
    def _bcast_spec(shape, index_map):
        if n_c == 1:
            return pl.BlockSpec(shape, index_map, pipeline_mode=pl.Buffered(1))
        return pl.BlockSpec(shape, index_map)

    flops = 2 * N * H_p8 * W * Kdim * Cout_p
    bytes_accessed = int(x_tiles.size * 2 + w2d.size * 2
                         + N * H_p8 * W * Cout_p * 2 + 2 * Cout_p * 4)

    out = pl.pallas_call(
        kernel,
        out_shape=jax.ShapeDtypeStruct((N, H_p8 * W, Cout_p), jnp.bfloat16),
        grid=(N, n_h, n_c),
        in_specs=[
            pl.BlockSpec((1, 1, rows, Wp, Cin), lambda n, h, c: (n, h, 0, 0, 0)),
            _bcast_spec((Kdim, TN), lambda n, h, c: (0, c)),
            _bcast_spec((1, TN), lambda n, h, c: (0, c)),
            _bcast_spec((1, TN), lambda n, h, c: (0, c)),
        ],
        out_specs=pl.BlockSpec((1, M, TN), lambda n, h, c: (n, h, c)),
        scratch_shapes=[pltpu.VMEM((M, Kdim), jnp.bfloat16)],
        compiler_params=pltpu.CompilerParams(
            dimension_semantics=("parallel", "parallel", "arbitrary"),
            vmem_limit_bytes=64 * 1024 * 1024),
        cost_estimate=pl.CostEstimate(
            flops=flops, transcendentals=0, bytes_accessed=bytes_accessed),
    )(x_tiles, w2d, scale2, shift2)

    # Cheap wrapper-side layout: drop row/channel padding, back to NCHW, orig dtype.
    out = out.reshape(N, H_p8, W, Cout_p)[:, :H, :, :Cout]
    return jnp.transpose(out, (0, 3, 1, 2)).astype(x_nchw.dtype)


def reference_forward(x, w, b, gamma, beta, mean, var, eps=1e-5):
    y = jax.lax.conv_general_dilated(
        x, w, window_strides=(1, 1), padding=((1, 1), (1, 1)),
        dimension_numbers=("NCHW", "OIHW", "NCHW"))
    y = y + b[None, :, None, None]
    y = (y - mean[None, :, None, None]) / jnp.sqrt(var + eps)[None, :, None, None]
    y = y * gamma[None, :, None, None] + beta[None, :, None, None]
    return jnp.maximum(y, 0.0)


if __name__ == "__main__":
    key = jax.random.PRNGKey(0)
    k1, k2, k3, k4, k5, k6, k7 = jax.random.split(key, 7)

    N, Cin, Cout, H, W, K = 2, 4, 8, 16, 16, 3

    x = jax.random.normal(k1, (N, Cin, H, W), jnp.float32)
    # Conv2d params (deterministic init, synthetic)
    w = jax.random.normal(k2, (Cout, Cin, K, K), jnp.float32) * 0.1
    b = jax.random.normal(k3, (Cout,), jnp.float32) * 0.1
    # BatchNorm2d params (eval mode)
    gamma = 1.0 + 0.1 * jax.random.normal(k4, (Cout,), jnp.float32)
    beta = 0.1 * jax.random.normal(k5, (Cout,), jnp.float32)
    running_mean = 0.1 * jax.random.normal(k6, (Cout,), jnp.float32)
    running_var = 1.0 + 0.1 * jax.random.uniform(k7, (Cout,), jnp.float32)

    out = conv_block_forward(x, w, b, gamma, beta, running_mean, running_var)
    out = jax.block_until_ready(out)

    ref = reference_forward(x, w, b, gamma, beta, running_mean, running_var)
    assert out.shape == (N, Cout, H, W)
    # bf16 matmul inputs + bf16 output slab -> relaxed tolerance vs f32 reference.
    assert jnp.allclose(out, ref, atol=5e-2, rtol=5e-2), "mismatch vs reference"

    print("KERNEL_OK")
</pallas_src>

<mosaic_0001>
module attributes {stable_mosaic.version = 11 : i64} {
  func.func @kernel(%arg0: i32, %arg1: i32, %arg2: i32, %arg3: memref<1x1x18x18x4xbf16, #tpu.memory_space<vmem>>, %arg4: memref<36x128xbf16, #tpu.memory_space<vmem>>, %arg5: memref<1x128xf32, #tpu.memory_space<vmem>>, %arg6: memref<1x128xf32, #tpu.memory_space<vmem>>, %arg7: memref<1x256x128xbf16, #tpu.memory_space<vmem>>, %arg8: memref<256x36xbf16, #tpu.memory_space<vmem>>) attributes {dimension_semantics = [#tpu.dimension_semantics<parallel>, #tpu.dimension_semantics<parallel>, #tpu.dimension_semantics<arbitrary>], iteration_bounds = array<i64: 2, 1, 1>, scalar_prefetch = 0 : i64, scratch_operands = 1 : i64, tpu.core_type = #tpu.core_type<tc>, window_params = [{transform_indices = @transform_0, window_bounds = array<i64: 1, 1, 18, 18, 4>}, {pipeline_mode = #tpu.pipeline_mode<synchronous>, transform_indices = @transform_1, window_bounds = array<i64: 36, 128>}, {pipeline_mode = #tpu.pipeline_mode<synchronous>, transform_indices = @transform_2, window_bounds = array<i64: 1, 128>}, {pipeline_mode = #tpu.pipeline_mode<synchronous>, transform_indices = @transform_3, window_bounds = array<i64: 1, 128>}, {transform_indices = @transform_4, window_bounds = array<i64: 1, 256, 128>}]} {
    %c0_i32 = arith.constant 0 : i32
    %0 = arith.cmpi eq, %arg2, %c0_i32 : i32
    %1 = arith.extui %0 : i1 to i32
    %c0_i32_0 = arith.constant 0 : i32
    %2 = arith.cmpi ne, %1, %c0_i32_0 : i32
    scf.if %2 {
      %c0_12 = arith.constant 0 : index
      %c0_13 = arith.constant 0 : index
      %c0_14 = arith.constant 0 : index
      %c0_15 = arith.constant 0 : index
      %c0_16 = arith.constant 0 : index
      %22 = vector.load %arg3[%c0_12, %c0_13, %c0_14, %c0_15, %c0_16] : memref<1x1x18x18x4xbf16, #tpu.memory_space<vmem>>, vector<1x1x16x16x4xbf16>
      %23 = vector.shape_cast %22 : vector<1x1x16x16x4xbf16> to vector<16x16x4xbf16>
      %24 = vector.shape_cast %23 : vector<16x16x4xbf16> to vector<256x4xbf16>
      %c0_17 = arith.constant 0 : index
      %c0_18 = arith.constant 0 : index
      %25 = vector.load %arg8[%c0_17, %c0_18] : memref<256x36xbf16, #tpu.memory_space<vmem>>, vector<256x4xbf16>
      tpu.vector_store %arg8[%c0_17, %c0_18], %24 {strides = array<i32>} : memref<256x36xbf16, #tpu.memory_space<vmem>>, vector<256x4xbf16>,
      %c0_19 = arith.constant 0 : index
      %c0_20 = arith.constant 0 : index
      %c0_21 = arith.constant 0 : index
      %c1 = arith.constant 1 : index
      %c0_22 = arith.constant 0 : index
      %26 = vector.load %arg3[%c0_19, %c0_20, %c0_21, %c1, %c0_22] : memref<1x1x18x18x4xbf16, #tpu.memory_space<vmem>>, vector<1x1x16x16x4xbf16>
      %27 = vector.shape_cast %26 : vector<1x1x16x16x4xbf16> to vector<16x16x4xbf16>
      %28 = vector.shape_cast %27 : vector<16x16x4xbf16> to vector<256x4xbf16>
      %c0_23 = arith.constant 0 : index
      %c4 = arith.constant 4 : index
      %29 = vector.load %arg8[%c0_23, %c4] : memref<256x36xbf16, #tpu.memory_space<vmem>>, vector<256x4xbf16>
      tpu.vector_store %arg8[%c0_23, %c4], %28 {strides = array<i32>} : memref<256x36xbf16, #tpu.memory_space<vmem>>, vector<256x4xbf16>,
      %c0_24 = arith.constant 0 : index
      %c0_25 = arith.constant 0 : index
      %c0_26 = arith.constant 0 : index
      %c2 = arith.constant 2 : index
      %c0_27 = arith.constant 0 : index
      %30 = vector.load %arg3[%c0_24, %c0_25, %c0_26, %c2, %c0_27] : memref<1x1x18x18x4xbf16, #tpu.memory_space<vmem>>, vector<1x1x16x16x4xbf16>
      %31 = vector.shape_cast %30 : vector<1x1x16x16x4xbf16> to vector<16x16x4xbf16>
      %32 = vector.shape_cast %31 : vector<16x16x4xbf16> to vector<256x4xbf16>
      %c0_28 = arith.constant 0 : index
      %c8 = arith.constant 8 : index
      %33 = vector.load %arg8[%c0_28, %c8] : memref<256x36xbf16, #tpu.memory_space<vmem>>, vector<256x4xbf16>
      tpu.vector_store %arg8[%c0_28, %c8], %32 {strides = array<i32>} : memref<256x36xbf16, #tpu.memory_space<vmem>>, vector<256x4xbf16>,
      %c0_29 = arith.constant 0 : index
      %c0_30 = arith.constant 0 : index
      %c1_31 = arith.constant 1 : index
      %c0_32 = arith.constant 0 : index
      %c0_33 = arith.constant 0 : index
      %34 = vector.load %arg3[%c0_29, %c0_30, %c1_31, %c0_32, %c0_33] : memref<1x1x18x18x4xbf16, #tpu.memory_space<vmem>>, vector<1x1x16x16x4xbf16>
      %35 = vector.shape_cast %34 : vector<1x1x16x16x4xbf16> to vector<16x16x4xbf16>
      %36 = vector.shape_cast %35 : vector<16x16x4xbf16> to vector<256x4xbf16>
      %c0_34 = arith.constant 0 : index
      %c12 = arith.constant 12 : index
      %37 = vector.load %arg8[%c0_34, %c12] : memref<256x36xbf16, #tpu.memory_space<vmem>>, vector<256x4xbf16>
      tpu.vector_store %arg8[%c0_34, %c12], %36 {strides = array<i32>} : memref<256x36xbf16, #tpu.memory_space<vmem>>, vector<256x4xbf16>,
      %c0_35 = arith.constant 0 : index
      %c0_36 = arith.constant 0 : index
      %c1_37 = arith.constant 1 : index
      %c1_38 = arith.constant 1 : index
      %c0_39 = arith.constant 0 : index
      %38 = vector.load %arg3[%c0_35, %c0_36, %c1_37, %c1_38, %c0_39] : memref<1x1x18x18x4xbf16, #tpu.memory_space<vmem>>, vector<1x1x16x16x4xbf16>
      %39 = vector.shape_cast %38 : vector<1x1x16x16x4xbf16> to vector<16x16x4xbf16>
      %40 = vector.shape_cast %39 : vector<16x16x4xbf16> to vector<256x4xbf16>
      %c0_40 = arith.constant 0 : index
      %c16 = arith.constant 16 : index
      %41 = vector.load %arg8[%c0_40, %c16] : memref<256x36xbf16, #tpu.memory_space<vmem>>, vector<256x4xbf16>
      tpu.vector_store %arg8[%c0_40, %c16], %40 {strides = array<i32>} : memref<256x36xbf16, #tpu.memory_space<vmem>>, vector<256x4xbf16>,
      %c0_41 = arith.constant 0 : index
      %c0_42 = arith.constant 0 : index
      %c1_43 = arith.constant 1 : index
      %c2_44 = arith.constant 2 : index
      %c0_45 = arith.constant 0 : index
      %42 = vector.load %arg3[%c0_41, %c0_42, %c1_43, %c2_44, %c0_45] : memref<1x1x18x18x4xbf16, #tpu.memory_space<vmem>>, vector<1x1x16x16x4xbf16>
      %43 = vector.shape_cast %42 : vector<1x1x16x16x4xbf16> to vector<16x16x4xbf16>
      %44 = vector.shape_cast %43 : vector<16x16x4xbf16> to vector<256x4xbf16>
      %c0_46 = arith.constant 0 : index
      %c20 = arith.constant 20 : index
      %45 = vector.load %arg8[%c0_46, %c20] : memref<256x36xbf16, #tpu.memory_space<vmem>>, vector<256x4xbf16>
      tpu.vector_store %arg8[%c0_46, %c20], %44 {strides = array<i32>} : memref<256x36xbf16, #tpu.memory_space<vmem>>, vector<256x4xbf16>,
      %c0_47 = arith.constant 0 : index
      %c0_48 = arith.constant 0 : index
      %c2_49 = arith.constant 2 : index
      %c0_50 = arith.constant 0 : index
      %c0_51 = arith.constant 0 : index
      %46 = vector.load %arg3[%c0_47, %c0_48, %c2_49, %c0_50, %c0_51] : memref<1x1x18x18x4xbf16, #tpu.memory_space<vmem>>, vector<1x1x16x16x4xbf16>
      %47 = vector.shape_cast %46 : vector<1x1x16x16x4xbf16> to vector<16x16x4xbf16>
      %48 = vector.shape_cast %47 : vector<16x16x4xbf16> to vector<256x4xbf16>
      %c0_52 = arith.constant 0 : index
      %c24 = arith.constant 24 : index
      %49 = vector.load %arg8[%c0_52, %c24] : memref<256x36xbf16, #tpu.memory_space<vmem>>, vector<256x4xbf16>
      tpu.vector_store %arg8[%c0_52, %c24], %48 {strides = array<i32>} : memref<256x36xbf16, #tpu.memory_space<vmem>>, vector<256x4xbf16>,
      %c0_53 = arith.constant 0 : index
      %c0_54 = arith.constant 0 : index
      %c2_55 = arith.constant 2 : index
      %c1_56 = arith.constant 1 : index
      %c0_57 = arith.constant 0 : index
      %50 = vector.load %arg3[%c0_53, %c0_54, %c2_55, %c1_56, %c0_57] : memref<1x1x18x18x4xbf16, #tpu.memory_space<vmem>>, vector<1x1x16x16x4xbf16>
      %51 = vector.shape_cast %50 : vector<1x1x16x16x4xbf16> to vector<16x16x4xbf16>
      %52 = vector.shape_cast %51 : vector<16x16x4xbf16> to vector<256x4xbf16>
      %c0_58 = arith.constant 0 : index
      %c28 = arith.constant 28 : index
      %53 = vector.load %arg8[%c0_58, %c28] : memref<256x36xbf16, #tpu.memory_space<vmem>>, vector<256x4xbf16>
      tpu.vector_store %arg8[%c0_58, %c28], %52 {strides = array<i32>} : memref<256x36xbf16, #tpu.memory_space<vmem>>, vector<256x4xbf16>,
      %c0_59 = arith.constant 0 : index
      %c0_60 = arith.constant 0 : index
      %c2_61 = arith.constant 2 : index
      %c2_62 = arith.constant 2 : index
      %c0_63 = arith.constant 0 : index
      %54 = vector.load %arg3[%c0_59, %c0_60, %c2_61, %c2_62, %c0_63] : memref<1x1x18x18x4xbf16, #tpu.memory_space<vmem>>, vector<1x1x16x16x4xbf16>
      %55 = vector.shape_cast %54 : vector<1x1x16x16x4xbf16> to vector<16x16x4xbf16>
      %56 = vector.shape_cast %55 : vector<16x16x4xbf16> to vector<256x4xbf16>
      %c0_64 = arith.constant 0 : index
      %c32 = arith.constant 32 : index
      %57 = vector.load %arg8[%c0_64, %c32] : memref<256x36xbf16, #tpu.memory_space<vmem>>, vector<256x4xbf16>
      tpu.vector_store %arg8[%c0_64, %c32], %56 {strides = array<i32>} : memref<256x36xbf16, #tpu.memory_space<vmem>>, vector<256x4xbf16>,
    } else {
    }
    %c0 = arith.constant 0 : index
    %c0_1 = arith.constant 0 : index
    %3 = vector.load %arg8[%c0, %c0_1] : memref<256x36xbf16, #tpu.memory_space<vmem>>, vector<256x36xbf16>
    %c0_2 = arith.constant 0 : index
    %c0_3 = arith.constant 0 : index
    %4 = vector.load %arg4[%c0_2, %c0_3] : memref<36x128xbf16, #tpu.memory_space<vmem>>, vector<36x128xbf16>
    %cst = arith.constant dense<0.000000e+00> : vector<256x128xf32>
    %5 = tpu.matmul %3, %4, %cst {dimension_numbers = #tpu.dot_dimension_numbers<[1], [0], [0], [1], [0, 0, 1, 1], [], []>} : vector<256x36xbf16>, vector<36x128xbf16>, vector<256x128xf32> -> vector<256x128xf32>
    %c0_4 = arith.constant 0 : index
    %c0_5 = arith.constant 0 : index
    %6 = vector.load %arg5[%c0_4, %c0_5] : memref<1x128xf32, #tpu.memory_space<vmem>>, vector<1x128xf32>
    %7 = vector.shape_cast %6 : vector<1x128xf32> to vector<128xf32>
    %8 = vector.shape_cast %7 : vector<128xf32> to vector<1x128xf32>
    %9 = vector.broadcast %8 : vector<1x128xf32> to vector<256x128xf32>
    %10 = arith.mulf %5, %9 : vector<256x128xf32>
    %c0_6 = arith.constant 0 : index
    %c0_7 = arith.constant 0 : index
    %11 = vector.load %arg6[%c0_6, %c0_7] : memref<1x128xf32, #tpu.memory_space<vmem>>, vector<1x128xf32>
    %12 = vector.shape_cast %11 : vector<1x128xf32> to vector<128xf32>
    %13 = vector.shape_cast %12 : vector<128xf32> to vector<1x128xf32>
    %14 = vector.broadcast %13 : vector<1x128xf32> to vector<256x128xf32>
    %15 = arith.addf %10, %14 : vector<256x128xf32>
    %cst_8 = arith.constant 0.000000e+00 : f32
    %16 = vector.broadcast %cst_8 : f32 to vector<256x128xf32>
    %17 = arith.maximumf %15, %16 : vector<256x128xf32>
    %18 = arith.truncf %17 : vector<256x128xf32> to vector<256x128xbf16>
    %c0_9 = arith.constant 0 : index
    %c0_10 = arith.constant 0 : index
    %c0_11 = arith.constant 0 : index
    %19 = vector.load %arg7[%c0_9, %c0_10, %c0_11] : memref<1x256x128xbf16, #tpu.memory_space<vmem>>, vector<1x256x128xbf16>
    %20 = vector.shape_cast %19 : vector<1x256x128xbf16> to vector<256x128xbf16>
    %21 = vector.shape_cast %18 : vector<256x128xbf16> to vector<1x256x128xbf16>
    tpu.vector_store %arg7[%c0_9, %c0_10, %c0_11], %21 {strides = array<i32>} : memref<1x256x128xbf16, #tpu.memory_space<vmem>>, vector<1x256x128xbf16>,
    return
  }
  func.func @transform_0(%arg0: i32, %arg1: i32, %arg2: i32) -> (i32, i32, i32, i32, i32) {
    %c0_i32 = arith.constant 0 : i32
    %c0_i32_0 = arith.constant 0 : i32
    %c0_i32_1 = arith.constant 0 : i32
    %c0_i32_2 = arith.constant 0 : i32
    return %arg0, %arg1, %c0_i32, %c0_i32_0, %c0_i32_1 : i32, i32, i32, i32, i32
  }
  func.func @transform_1(%arg0: i32, %arg1: i32, %arg2: i32) -> (i32, i32) {
    %c0_i32 = arith.constant 0 : i32
    %c0_i32_0 = arith.constant 0 : i32
    return %c0_i32, %arg2 : i32, i32
  }
  func.func @transform_2(%arg0: i32, %arg1: i32, %arg2: i32) -> (i32, i32) {
    %c0_i32 = arith.constant 0 : i32
    %c0_i32_0 = arith.constant 0 : i32
    return %c0_i32, %arg2 : i32, i32
  }
  func.func @transform_3(%arg0: i32, %arg1: i32, %arg2: i32) -> (i32, i32) {
    %c0_i32 = arith.constant 0 : i32
    %c0_i32_0 = arith.constant 0 : i32
    return %c0_i32, %arg2 : i32, i32
  }
  func.func @transform_4(%arg0: i32, %arg1: i32, %arg2: i32) -> (i32, i32, i32) {
    %c0_i32 = arith.constant 0 : i32
    return %arg0, %arg1, %arg2 : i32, i32, i32
  }
}

</mosaic_0001>

<llo_original>
// kernel: tpu_custom_call.1
$region0: #{tpu_custom_call.1}
  #allocation0 [shape = 'u32[]', space=smem, size = 0x4, offset = 0x4, fixed_abs, tag = 'smem constant byte address 0x4 - core index']
  #allocation1 [shape = 'u32[144,128]{1,0:T(1,128)}', space=vmem, size = 0x12000, scoped, tag = 'internal scratch']
  #allocation2 [shape = 'bf16[256,36]{1,0:T(16,128)(2,1)}', space=vmem, size = 0x10000, scoped, tag = 'scratch operand']
  %s0 = inlined_call_operand.hbm [shape: bf16[2,1,18,18,4], index: 0, kind: input, shape index: {}]
  %s1 = inlined_call_operand.hbm [shape: bf16[36,128], index: 1, kind: input, shape index: {}]
  %s2 = inlined_call_operand.hbm [shape: f32[1,128], index: 2, kind: input, shape index: {}]
  %s3 = inlined_call_operand.hbm [shape: f32[1,128], index: 3, kind: input, shape index: {}]
  %s4 = inlined_call_operand.hbm [shape: bf16[2,256,128], index: 4, kind: output, shape index: {}]
  %s5 = sld [smem:[#allocation0]]
  $region69: #{tpu_custom_call.1} parent=0
    _
  %s7 = ssub.s32 1, %s5
  %s8 = scalar_select 0, %s7, %s5
  $region1: #{tpu_custom_call.1} parent=0
    #allocation3 [shape = 'u8[221184]{0}', space=vmem, size = 0x36000, scoped, tag = 'input window, operand 0']
    #allocation4 [shape = 's32[2]{0}', space=sflag, size = 0x8, scoped, tag = 'scoped memory for tpu_custom_call.1']
    #allocation5 [shape = 's32[2]{0}', space=sflag, size = 0x8, scoped, tag = 'scoped memory for tpu_custom_call.1']
    #allocation6 [shape = 'u8[10240]{0}', space=vmem, size = 0x2800, scoped, tag = 'input window, operand 1, single buffered']
    #allocation7 [shape = 's32[1]{0}', space=sflag, size = 0x4, scoped, tag = 'scoped memory for tpu_custom_call.1']
    #allocation8 [shape = 'u8[512]{0}', space=vmem, size = 0x400, scoped, tag = 'input window, operand 2, single buffered']
    #allocation9 [shape = 'u8[512]{0}', space=vmem, size = 0x400, scoped, tag = 'input window, operand 3, single buffered']
    #allocation10 [shape = 's32[1]{0}', space=sflag, size = 0x4, scoped, tag = 'scoped memory for tpu_custom_call.1']
    #allocation11 [shape = 'u8[131072]{0}', space=vmem, size = 0x20000, scoped, tag = 'output window, operand 0']
    %9 = vsyncpa [#allocation4], 0
    %s10 = scalar_lea.sflag [#allocation4], 1
    %11 = vsyncpa %s10, 0
    %12 = vsyncpa [#allocation7], 0
    %13 = vsyncpa [#allocation10], 0
    %14 = vsyncpa [#allocation5], 0
    %s15 = scalar_lea.sflag [#allocation5], 1
    %16 = vsyncpa %s15, 0
    loop: start=0, step=1, limit=4
    $region2: #{tpu_custom_call.1} parent=1 // loop_pre_header
      _
    $region3: #{tpu_custom_call.1} parent=1 // loop_header
      %s18 = sphi 0, %s22
      %p19 = scmp.ge.s32.totalorder %s18, 4
      %s25 = sphi 0, %s44
      %s26 = sphi 0, %s40
      %s27 = sphi 0, %s36
      %s28 = sphi 0, %s25
      %s29 = sphi 0, %s26
      %s30 = sphi 0, %s27
      %s31 = sphi 0, %s28
      %s32 = sphi 0, %s29
      %s33 = sphi 0, %s30
      %s49 = sphi 0, %s51
      %s52 = sphi 0, %s49
      %s53 = sphi 0, %s52
      %s69 = sphi 0, %s53
      %s75 = sphi 0, %s77
      %s78 = sphi 0, %s75
      %s79 = sphi 0, %s78
      %s95 = sphi 0, %s79
      %s101 = sphi 0, %s103
      %s104 = sphi 0, %s101
      %s105 = sphi 0, %s104
      %s121 = sphi 0, %s105
      %s127 = sphi 0, %s129
      %s130 = sphi 0, %s127
      %s131 = sphi 0, %s130
      %s147 = sphi 0, %s131
      %s157 = sphi 0, %s159
      %s160 = sphi 0, %s157
      %s161 = sphi 0, %s160
      %s177 = sphi 0, %s161
    $region4: #{tpu_custom_call.1} parent=1 // loop_header_branch
      %21 = sbr.rel (%p19) target = $region8
    $region5: #{tpu_custom_call.1} parent=1 // loop_body
      %s23 = ssub.s32 %s18, 1
      %s24 = ssub.s32 %s18, 2
      %s34 = sadd.s32 1, %s27
      %p35 = scmp.ge.s32.totalorder %s34, 1
      %s36 = scalar_select %p35, 0, %s34
      %s37 = sadd.s32 1, %s26
      %s38 = scalar_select %p35, %s37, %s26
      %p39 = scmp.ge.s32.totalorder %s38, 1
      %s40 = scalar_select %p39, 0, %s38
      %s41 = sadd.s32 1, %s25
      %s42 = scalar_select %p39, %s41, %s25
      %p43 = scmp.ge.s32.totalorder %s42, 2
      %s44 = scalar_select %p43, 0, %s42
      %s45 = ssub.s32 %s25, %s44
      %s46 = ssub.s32 %s26, %s40
      %s47 = sor.u32 %s45, %s46
      %p48 = scmp.eq.s32.totalorder %s47, 0
      %s50 = sadd.s32 %s49, 1
      %s51 = scalar_select %p48, %s49, %s50
      %p54 = pneg %p48
      %p55 = scmp.eq.s32.totalorder %s18, 1
      %p56 = por %p54, %p55
      %p57 = scmp.ne.s32.totalorder %s49, %s52
      %p58 = scmp.eq.s32.totalorder %s18, 0
      %p59 = por %p57, %p58
      %p60 = scmp.ne.s32.totalorder %s49, %s52
      %p61 = scmp.eq.s32.totalorder %s23, 1
      %p62 = por %p60, %p61
      %p63 = scmp.ne.s32.totalorder %s52, %s53
      %p64 = scmp.eq.s32.totalorder %s23, 0
      %p65 = por %p63, %p64
      %p66 = scmp.ne.s32.totalorder %s52, %s53
      %p67 = scmp.eq.s32.totalorder %s24, 1
      %p68 = por %p66, %p67
      %p70 = scmp.ne.s32.totalorder %s53, %s69
      %p71 = scmp.eq.s32.totalorder %s24, 0
      %p72 = por %p70, %p71
      %s73 = ssub.s32 %s27, %s36
      %p74 = scmp.eq.s32.totalorder %s73, 0
      %s76 = sadd.s32 %s75, 1
      %s77 = scalar_select %p74, %s75, %s76
      %p80 = pneg %p74
      %p81 = scmp.eq.s32.totalorder %s18, 1
      %p82 = por %p80, %p81
      %p83 = scmp.ne.s32.totalorder %s75, %s78
      %p84 = scmp.eq.s32.totalorder %s18, 0
      %p85 = por %p83, %p84
      %p86 = scmp.ne.s32.totalorder %s75, %s78
      %p87 = scmp.eq.s32.totalorder %s23, 1
      %p88 = por %p86, %p87
      %p89 = scmp.ne.s32.totalorder %s78, %s79
      %p90 = scmp.eq.s32.totalorder %s23, 0
      %p91 = por %p89, %p90
      %p92 = scmp.ne.s32.totalorder %s78, %s79
      %p93 = scmp.eq.s32.totalorder %s24, 1
      %p94 = por %p92, %p93
      %p96 = scmp.ne.s32.totalorder %s79, %s95
      %p97 = scmp.eq.s32.totalorder %s24, 0
      %p98 = por %p96, %p97
      %s99 = ssub.s32 %s27, %s36
      %p100 = scmp.eq.s32.totalorder %s99, 0
      %s102 = sadd.s32 %s101, 1
      %s103 = scalar_select %p100, %s101, %s102
      %p106 = pneg %p100
      %p107 = scmp.eq.s32.totalorder %s18, 1
      %p108 = por %p106, %p107
      %p109 = scmp.ne.s32.totalorder %s101, %s104
      %p110 = scmp.eq.s32.totalorder %s18, 0
      %p111 = por %p109, %p110
      %p112 = scmp.ne.s32.totalorder %s101, %s104
      %p113 = scmp.eq.s32.totalorder %s23, 1
      %p114 = por %p112, %p113
      %p115 = scmp.ne.s32.totalorder %s104, %s105
      %p116 = scmp.eq.s32.totalorder %s23, 0
      %p117 = por %p115, %p116
      %p118 = scmp.ne.s32.totalorder %s104, %s105
      %p119 = scmp.eq.s32.totalorder %s24, 1
      %p120 = por %p118, %p119
      %p122 = scmp.ne.s32.totalorder %s105, %s121
      %p123 = scmp.eq.s32.totalorder %s24, 0
      %p124 = por %p122, %p123
      %s125 = ssub.s32 %s27, %s36
      %p126 = scmp.eq.s32.totalorder %s125, 0
      %s128 = sadd.s32 %s127, 1
      %s129 = scalar_select %p126, %s127, %s128
      %p132 = pneg %p126
      %p133 = scmp.eq.s32.totalorder %s18, 1
      %p134 = por %p132, %p133
      %p135 = scmp.ne.s32.totalorder %s127, %s130
      %p136 = scmp.eq.s32.totalorder %s18, 0
      %p137 = por %p135, %p136
      %p138 = scmp.ne.s32.totalorder %s127, %s130
      %p139 = scmp.eq.s32.totalorder %s23, 1
      %p140 = por %p138, %p139
      %p141 = scmp.ne.s32.totalorder %s130, %s131
      %p142 = scmp.eq.s32.totalorder %s23, 0
      %p143 = por %p141, %p142
      %p144 = scmp.ne.s32.totalorder %s130, %s131
      %p145 = scmp.eq.s32.totalorder %s24, 1
      %p146 = por %p144, %p145
      %p148 = scmp.ne.s32.totalorder %s131, %s147
      %p149 = scmp.eq.s32.totalorder %s24, 0
      %p150 = por %p148, %p149
      %s151 = ssub.s32 %s25, %s44
      %s152 = ssub.s32 %s26, %s40
      %s153 = sor.u32 %s151, %s152
      %s154 = ssub.s32 %s27, %s36
      %s155 = sor.u32 %s153, %s154
      %p156 = scmp.eq.s32.totalorder %s155, 0
      %s158 = sadd.s32 %s157, 1
      %s159 = scalar_select %p156, %s157, %s158
      %p162 = pneg %p156
      %p163 = scmp.eq.s32.totalorder %s18, 1
      %p164 = por %p162, %p163
      %p165 = scmp.ne.s32.totalorder %s157, %s160
      %p166 = scmp.eq.s32.totalorder %s18, 0
      %p167 = por %p165, %p166
      %p168 = scmp.ne.s32.totalorder %s157, %s160
      %p169 = scmp.eq.s32.totalorder %s23, 1
      %p170 = por %p168, %p169
      %p171 = scmp.ne.s32.totalorder %s160, %s161
      %p172 = scmp.eq.s32.totalorder %s23, 0
      %p173 = por %p171, %p172
      %p174 = scmp.ne.s32.totalorder %s160, %s161
      %p175 = scmp.eq.s32.totalorder %s24, 1
      %p176 = por %p174, %p175
      %p178 = scmp.ne.s32.totalorder %s161, %s177
      %p179 = scmp.eq.s32.totalorder %s24, 0
      %p180 = por %p178, %p179
      %p181 = scmp.le.s32.totalorder 1, %s18
      %p182 = scmp.lt.s32.totalorder %s18, 3
      %p183 = pnand %p181, %p182
      %p184 = pneg %p183
      // Predicated region
      $region9: #{tpu_custom_call.1} parent=5 // pred_check
        _
      $region10: #{tpu_custom_call.1} parent=5 // pred_check_branch
        %186 = sbr.rel (%p183) target = $region12
      $region11: #{tpu_custom_call.1} parent=5 // pred_region
        %s187 = ssub.s32 %s18, 1
        // Predicated region
        $region13: #{tpu_custom_call.1} parent=11 // pred_check
          %p188 = pneg %p91
        $region14: #{tpu_custom_call.1} parent=11 // pred_check_branch
          %190 = sbr.rel (%p188) target = $region16
        $region15: #{tpu_custom_call.1} parent=11 // pred_region
          %s192 = ssub.s32 320, 320
          %193 = vsyncadd [#allocation7], %s192
          %s194 = smul.addr %s30, 64
          %s195 = scalar_lea.hbm %s1, %s194
          %s196 = sshll.u32 [#allocation6], 4
          %s197 = int_to_ptr.vmem [resolvable:$true] %s196
          %202 = dma.hbm_to_vmem [thread:$0]  %s195, 320, %s197, [#allocation7], 64, 64, 4
        $region16: #{tpu_custom_call.1} parent=11 // pred_fallthru
          _
        // Predicated region
        $region17: #{tpu_custom_call.1} parent=11 // pred_check
          %p203 = pneg %p117
        $region18: #{tpu_custom_call.1} parent=11 // pred_check_branch
          %205 = sbr.rel (%p203) target = $region20
        $region19: #{tpu_custom_call.1} parent=11 // pred_region
          %s207 = ssub.s32 16, 16
          %208 = vsyncadd [#allocation7], %s207
          %s209 = smul.addr %s30, 16
          %s210 = scalar_lea.hbm %s2, %s209
          %s212 = sshll.u32 [#allocation8], 4
          %s213 = int_to_ptr.vmem [resolvable:$true] %s212
          %215 = dma.hbm_to_vmem [thread:$0]  %s210, 16, %s213, [#allocation7]
        $region20: #{tpu_custom_call.1} parent=11 // pred_fallthru
          _
        // Predicated region
        $region21: #{tpu_custom_call.1} parent=11 // pred_check
          %p216 = pneg %p143
        $region22: #{tpu_custom_call.1} parent=11 // pred_check_branch
          %218 = sbr.rel (%p216) target = $region24
        $region23: #{tpu_custom_call.1} parent=11 // pred_region
          %s220 = ssub.s32 16, 16
          %221 = vsyncadd [#allocation10], %s220
          %s222 = smul.addr %s30, 16
          %s223 = scalar_lea.hbm %s3, %s222
          %s225 = sshll.u32 [#allocation9], 4
          %s226 = int_to_ptr.vmem [resolvable:$true] %s225
          %228 = dma.hbm_to_vmem [thread:$0]  %s223, 16, %s226, [#allocation10]
        $region24: #{tpu_custom_call.1} parent=11 // pred_fallthru
          _
      $region12: #{tpu_custom_call.1} parent=5 // pred_fallthru
        _
      %p229 = scmp.lt.s32.totalorder %s18, 2
      // Predicated region
      $region25: #{tpu_custom_call.1} parent=5 // pred_check
        %p230 = pneg %p229
      $region26: #{tpu_custom_call.1} parent=5 // pred_check_branch
        %232 = sbr.rel (%p230) target = $region28
      $region27: #{tpu_custom_call.1} parent=5 // pred_region
        // Predicated region
        $region29: #{tpu_custom_call.1} parent=27 // pred_check
          %p233 = pneg %p59
        $region30: #{tpu_custom_call.1} parent=27 // pred_check_branch
          %235 = sbr.rel (%p233) target = $region32
        $region31: #{tpu_custom_call.1} parent=27 // pred_region
          %s236 = sand.u32 %s49, 1
          %s237 = scalar_lea.sflag [#allocation4], %s236
          %s238 = sand.u32 %s49, 1
          %s239 = smul.addr %s238, 216
          %s240 = scalar_lea.vmem [#allocation3], %s239
          %s242 = ssub.s32 3456, 3456
          %243 = vsyncadd %s237, %s242
          %s244 = smul.addr %s26, 54
          %s245 = smul.addr %s25, 54
          %s246 = sadd.s32 %s244, %s245
          %s247 = smul.addr %s246, 64
          %s248 = scalar_lea.hbm %s0, %s247
          %s249 = sshll.u32 %s240, 4
          %s250 = int_to_ptr.vmem [resolvable:$true] %s249
          %255 = dma.hbm_to_vmem [thread:$0]  %s248, 3456, %s250, %s237, 64, 64, 4
        $region32: #{tpu_custom_call.1} parent=27 // pred_fallthru
          _
      $region28: #{tpu_custom_call.1} parent=5 // pred_fallthru
        _
      %p256 = scmp.le.s32.totalorder 1, %s18
      %p257 = scmp.lt.s32.totalorder %s18, 3
      %p258 = pnand %p256, %p257
      %p259 = pneg %p258
      // Predicated region
      $region33: #{tpu_custom_call.1} parent=5 // pred_check
        _
      $region34: #{tpu_custom_call.1} parent=5 // pred_check_branch
        %261 = sbr.rel (%p258) target = $region36
      $region35: #{tpu_custom_call.1} parent=5 // pred_region
        %s262 = ssub.s32 %s18, 1
        %s263 = sand.u32 %s52, 1
        %s264 = scalar_lea.sflag [#allocation4], %s263
        %s265 = sand.u32 %s52, 1
        %s266 = smul.addr %s265, 216
        %s267 = scalar_lea.vmem [#allocation3], %s266
        // Predicated region
        $region37: #{tpu_custom_call.1} parent=35 // pred_check
          %p268 = pneg %p65
        $region38: #{tpu_custom_call.1} parent=35 // pred_check_branch
          %270 = sbr.rel (%p268) target = $region40
        $region39: #{tpu_custom_call.1} parent=35 // pred_region
          %271 = dma.done %s264, 3456
        $region40: #{tpu_custom_call.1} parent=35 // pred_fallthru
          _
        // Predicated region
        $region41: #{tpu_custom_call.1} parent=35 // pred_check
          %p272 = pneg %p91
        $region42: #{tpu_custom_call.1} parent=35 // pred_check_branch
          %274 = sbr.rel (%p272) target = $region44
        $region43: #{tpu_custom_call.1} parent=35 // pred_region
          %275 = dma.done [#allocation7], 320
        $region44: #{tpu_custom_call.1} parent=35 // pred_fallthru
          _
        // Predicated region
        $region45: #{tpu_custom_call.1} parent=35 // pred_check
          %p276 = pneg %p117
        $region46: #{tpu_custom_call.1} parent=35 // pred_check_branch
          %278 = sbr.rel (%p276) target = $region48
        $region47: #{tpu_custom_call.1} parent=35 // pred_region
          %279 = dma.done [#allocation7], 16
        $region48: #{tpu_custom_call.1} parent=35 // pred_fallthru
          _
        // Predicated region
        $region49: #{tpu_custom_call.1} parent=35 // pred_check
          %p280 = pneg %p143
        $region50: #{tpu_custom_call.1} parent=35 // pred_check_branch
          %282 = sbr.rel (%p280) target = $region52
        $region51: #{tpu_custom_call.1} parent=35 // pred_region
          %283 = dma.done [#allocation10], 16
        $region52: #{tpu_custom_call.1} parent=35 // pred_fallthru
          _
        %s284 = sand.u32 %s52, 1
        %s285 = scalar_lea.sflag [#allocation4], %s284
        %s286 = sand.u32 %s52, 1
        %s287 = smul.addr %s286, 216
        %s288 = scalar_lea.vmem [#allocation3], %s287
        %p289 = pneg %p65
        %p290 = pneg %p62
        %p291 = pneg %p91
        %p292 = pneg %p88
        %p293 = pneg %p117
        %p294 = pneg %p114
        %p295 = pneg %p143
        %p296 = pneg %p140
        %p297 = pneg %p173
        %p298 = pneg %p170
        %s299 = sand.u32 %s160, 1
        %s300 = scalar_lea.sflag [#allocation5], %s299
        %s301 = sand.u32 %s160, 1
        %s302 = smul.addr %s301, 128
        %s303 = scalar_lea.vmem [#allocation11], %s302
        %s304 = smul.u32 32, %s29
        %p306 = scmp.eq.s32.totalorder %s30, 0
        // Predicated region
        $region53: #{tpu_custom_call.1} parent=35 // pred_check
          %p307 = pneg %p306
        $region54: #{tpu_custom_call.1} parent=35 // pred_check_branch
          %309 = sbr.rel (%p307) target = $region56
        $region55: #{tpu_custom_call.1} parent=35 // pred_region
          %v310 = vld [vmem:[%s267] sm:$0xf]
          %v311 = vld [vmem:[%s267 + $0x4] sm:$0xf]
          %v312 = vld [vmem:[%s267 + $0xc] sm:$0xf]
          %v313 = vld [vmem:[%s267 + $0x10] sm:$0xf]
          %v314 = vld [vmem:[%s267 + $0x18] sm:$0xf]
          %v315 = vld [vmem:[%s267 + $0x1c] sm:$0xf]
          %v316 = vld [vmem:[%s267 + $0x24] sm:$0xf]
          %v317 = vld [vmem:[%s267 + $0x28] sm:$0xf]
          %v318 = vld [vmem:[%s267 + $0x30] sm:$0xf]
          %v319 = vld [vmem:[%s267 + $0x34] sm:$0xf]
          %v320 = vld [vmem:[%s267 + $0x3c] sm:$0xf]
          %v321 = vld [vmem:[%s267 + $0x40] sm:$0xf]
          %v322 = vld [vmem:[%s267 + $0x48] sm:$0xf]
          %v323 = vld [vmem:[%s267 + $0x4c] sm:$0xf]
          %v324 = vld [vmem:[%s267 + $0x54] sm:$0xf]
          %v325 = vld [vmem:[%s267 + $0x58] sm:$0xf]
          %v326 = vld [vmem:[%s267 + $0x60] sm:$0xf]
          %v327 = vld [vmem:[%s267 + $0x64] sm:$0xf]
          %v328 = vld [vmem:[%s267 + $0x6c] sm:$0xf]
          %v329 = vld [vmem:[%s267 + $0x70] sm:$0xf]
          %v330 = vld [vmem:[%s267 + $0x78] sm:$0xf]
          %v331 = vld [vmem:[%s267 + $0x7c] sm:$0xf]
          %v332 = vld [vmem:[%s267 + $0x84] sm:$0xf]
          %v333 = vld [vmem:[%s267 + $0x88] sm:$0xf]
          %v334 = vld [vmem:[%s267 + $0x90] sm:$0xf]
          %v335 = vld [vmem:[%s267 + $0x94] sm:$0xf]
          %v336 = vld [vmem:[%s267 + $0x9c] sm:$0xf]
          %v337 = vld [vmem:[%s267 + $0xa0] sm:$0xf]
          %v338 = vld [vmem:[%s267 + $0xa8] sm:$0xf]
          %v339 = vld [vmem:[%s267 + $0xac] sm:$0xf]
          %v340 = vld [vmem:[%s267 + $0xb4] sm:$0xf]
          %v341 = vld [vmem:[%s267 + $0xb8] sm:$0xf]
          %v374 = vunpack.c.l.b16 %v310
          %v375 = vunpack.c.l.b16 %v311
          %v376 = vunpack.c.l.b16 %v312
          %v377 = vunpack.c.l.b16 %v313
          %v378 = vunpack.c.l.b16 %v314
          %v379 = vunpack.c.l.b16 %v315
          %v380 = vunpack.c.l.b16 %v316
          %v381 = vunpack.c.l.b16 %v317
          %v382 = vunpack.c.l.b16 %v318
          %v383 = vunpack.c.l.b16 %v319
          %v384 = vunpack.c.l.b16 %v320
          %v385 = vunpack.c.l.b16 %v321
          %v386 = vunpack.c.l.b16 %v322
          %v387 = vunpack.c.l.b16 %v323
          %v388 = vunpack.c.l.b16 %v324
          %v389 = vunpack.c.l.b16 %v325
          %v390 = vunpack.c.l.b16 %v326
          %v391 = vunpack.c.l.b16 %v327
          %v392 = vunpack.c.l.b16 %v328
          %v393 = vunpack.c.l.b16 %v329
          %v394 = vunpack.c.l.b16 %v330
          %v395 = vunpack.c.l.b16 %v331
          %v396 = vunpack.c.l.b16 %v332
          %v397 = vunpack.c.l.b16 %v333
          %v398 = vunpack.c.l.b16 %v334
          %v399 = vunpack.c.l.b16 %v335
          %v400 = vunpack.c.l.b16 %v336
          %v401 = vunpack.c.l.b16 %v337
          %v402 = vunpack.c.l.b16 %v338
          %v403 = vunpack.c.l.b16 %v339
          %v404 = vunpack.c.l.b16 %v340
          %v405 = vunpack.c.l.b16 %v341
          %v406 = vpack.c.b16 %v375, %v374
          %v407 = vpack.c.b16 %v377, %v376
          %v408 = vpack.c.b16 %v379, %v378
          %v409 = vpack.c.b16 %v381, %v380
          %v410 = vpack.c.b16 %v383, %v382
          %v411 = vpack.c.b16 %v385, %v384
          %v412 = vpack.c.b16 %v387, %v386
          %v413 = vpack.c.b16 %v389, %v388
          %v414 = vpack.c.b16 %v391, %v390
          %v415 = vpack.c.b16 %v393, %v392
          %v416 = vpack.c.b16 %v395, %v394
          %v417 = vpack.c.b16 %v397, %v396
          %v418 = vpack.c.b16 %v399, %v398
          %v419 = vpack.c.b16 %v401, %v400
          %v420 = vpack.c.b16 %v403, %v402
          %v421 = vpack.c.b16 %v405, %v404
          %vm438 = vcmask 31744
          %439 = vst.msk [vmem:[#allocation2] sm:$0xff] %vm438, %v406
          %440 = vst.msk [vmem:[#allocation2 + $0x8] sm:$0xff] %vm438, %v407
          %441 = vst.msk [vmem:[#allocation2 + $0x10] sm:$0xff] %vm438, %v408
          %442 = vst.msk [vmem:[#allocation2 + $0x18] sm:$0xff] %vm438, %v409
          %443 = vst.msk [vmem:[#allocation2 + $0x20] sm:$0xff] %vm438, %v410
          %444 = vst.msk [vmem:[#allocation2 + $0x28] sm:$0xff] %vm438, %v411
          %445 = vst.msk [vmem:[#allocation2 + $0x30] sm:$0xff] %vm438, %v412
          %446 = vst.msk [vmem:[#allocation2 + $0x38] sm:$0xff] %vm438, %v413
          %447 = vst.msk [vmem:[#allocation2 + $0x40] sm:$0xff] %vm438, %v414
          %448 = vst.msk [vmem:[#allocation2 + $0x48] sm:$0xff] %vm438, %v415
          %449 = vst.msk [vmem:[#allocation2 + $0x50] sm:$0xff] %vm438, %v416
          %450 = vst.msk [vmem:[#allocation2 + $0x58] sm:$0xff] %vm438, %v417
          %451 = vst.msk [vmem:[#allocation2 + $0x60] sm:$0xff] %vm438, %v418
          %452 = vst.msk [vmem:[#allocation2 + $0x68] sm:$0xff] %vm438, %v419
          %453 = vst.msk [vmem:[#allocation2 + $0x70] sm:$0xff] %vm438, %v420
          %454 = vst.msk [vmem:[#allocation2 + $0x78] sm:$0xff] %vm438, %v421
          %v455 = vld [vmem:[%s267] sm:$0xf]
          %v456 = vld [vmem:[%s267 + $0x4] sm:$0xf]
          %v457 = vld [vmem:[%s267 + $0x8] sm:$0x1]
          %v458 = vld [vmem:[%s267 + $0xc] sm:$0xf]
          %v459 = vld [vmem:[%s267 + $0x10] sm:$0xf]
          %v460 = vld [vmem:[%s267 + $0x14] sm:$0x1]
          %v461 = vld [vmem:[%s267 + $0x18] sm:$0xf]
          %v462 = vld [vmem:[%s267 + $0x1c] sm:$0xf]
          %v463 = vld [vmem:[%s267 + $0x20] sm:$0x1]
          %v464 = vld [vmem:[%s267 + $0x24] sm:$0xf]
          %v465 = vld [vmem:[%s267 + $0x28] sm:$0xf]
          %v466 = vld [vmem:[%s267 + $0x2c] sm:$0x1]
          %v467 = vld [vmem:[%s267 + $0x30] sm:$0xf]
          %v468 = vld [vmem:[%s267 + $0x34] sm:$0xf]
          %v469 = vld [vmem:[%s267 + $0x38] sm:$0x1]
          %v470 = vld [vmem:[%s267 + $0x3c] sm:$0xf]
          %v471 = vld [vmem:[%s267 + $0x40] sm:$0xf]
          %v472 = vld [vmem:[%s267 + $0x44] sm:$0x1]
          %v473 = vld [vmem:[%s267 + $0x48] sm:$0xf]
          %v474 = vld [vmem:[%s267 + $0x4c] sm:$0xf]
          %v475 = vld [vmem:[%s267 + $0x50] sm:$0x1]
          %v476 = vld [vmem:[%s267 + $0x54] sm:$0xf]
          %v477 = vld [vmem:[%s267 + $0x58] sm:$0xf]
          %v478 = vld [vmem:[%s267 + $0x5c] sm:$0x1]
          %v479 = vld [vmem:[%s267 + $0x60] sm:$0xf]
          %v480 = vld [vmem:[%s267 + $0x64] sm:$0xf]
          %v481 = vld [vmem:[%s267 + $0x68] sm:$0x1]
          %v482 = vld [vmem:[%s267 + $0x6c] sm:$0xf]
          %v483 = vld [vmem:[%s267 + $0x70] sm:$0xf]
          %v484 = vld [vmem:[%s267 + $0x74] sm:$0x1]
          %v485 = vld [vmem:[%s267 + $0x78] sm:$0xf]
          %v486 = vld [vmem:[%s267 + $0x7c] sm:$0xf]
          %v487 = vld [vmem:[%s267 + $0x80] sm:$0x1]
          %v488 = vld [vmem:[%s267 + $0x84] sm:$0xf]
          %v489 = vld [vmem:[%s267 + $0x88] sm:$0xf]
          %v490 = vld [vmem:[%s267 + $0x8c] sm:$0x1]
          %v491 = vld [vmem:[%s267 + $0x90] sm:$0xf]
          %v492 = vld [vmem:[%s267 + $0x94] sm:$0xf]
          %v493 = vld [vmem:[%s267 + $0x98] sm:$0x1]
          %v494 = vld [vmem:[%s267 + $0x9c] sm:$0xf]
          %v495 = vld [vmem:[%s267 + $0xa0] sm:$0xf]
          %v496 = vld [vmem:[%s267 + $0xa4] sm:$0x1]
          %v497 = vld [vmem:[%s267 + $0xa8] sm:$0xf]
          %v498 = vld [vmem:[%s267 + $0xac] sm:$0xf]
          %v499 = vld [vmem:[%s267 + $0xb0] sm:$0x1]
          %v500 = vld [vmem:[%s267 + $0xb4] sm:$0xf]
          %v501 = vld [vmem:[%s267 + $0xb8] sm:$0xf]
          %v502 = vld [vmem:[%s267 + $0xbc] sm:$0x1]
          %vm503 = vsmask.f32 3328
          %vm504 = vsmask.f32 7440
          %vm505 = vmor %vm503, %vm504
          %v507 = vshrl.u32 %v455, 16
          %v509 = vrot.slane %v507, 4
          %v510 = vshll.u32 %v455, 16
          %v512 = vrot.slane %v510, 5
          %v513 = vor.u32 %v509, %v512
          %v514 = vrot.slane %v513, 4
          %v516 = vshll.u32 %v456, 16
          %v518 = vrot.slane %v516, 5
          %v519 = vsel %vm505, %v514, %v518
          %v520 = vshrl.u32 %v456, 16
          %v522 = vrot.slane %v520, 4
          %v523 = vor.u32 %v522, %v518
          %v524 = vrot.slane %v523, 4
          %v526 = vshll.u32 %v457, 16
          %v528 = vrot.slane %v526, 5
          %v529 = vsel %vm505, %v524, %v528
          %v531 = vshrl.u32 %v458, 16
          %v533 = vrot.slane %v531, 4
          %v534 = vshll.u32 %v458, 16
          %v536 = vrot.slane %v534, 5
          %v537 = vor.u32 %v533, %v536
          %v538 = vrot.slane %v537, 4
          %v540 = vshll.u32 %v459, 16
          %v542 = vrot.slane %v540, 5
          %v543 = vsel %vm505, %v538, %v542
          %v544 = vshrl.u32 %v459, 16
          %v546 = vrot.slane %v544, 4
          %v547 = vor.u32 %v546, %v542
          %v548 = vrot.slane %v547, 4
          %v550 = vshll.u32 %v460, 16
          %v552 = vrot.slane %v550, 5
          %v553 = vsel %vm505, %v548, %v552
          %v555 = vshrl.u32 %v461, 16
          %v557 = vrot.slane %v555, 4
          %v558 = vshll.u32 %v461, 16
          %v560 = vrot.slane %v558, 5
          %v561 = vor.u32 %v557, %v560
          %v562 = vrot.slane %v561, 4
          %v564 = vshll.u32 %v462, 16
          %v566 = vrot.slane %v564, 5
          %v567 = vsel %vm505, %v562, %v566
          %v568 = vshrl.u32 %v462, 16
          %v570 = vrot.slane %v568, 4
          %v571 = vor.u32 %v570, %v566
          %v572 = vrot.slane %v571, 4
          %v574 = vshll.u32 %v463, 16
          %v576 = vrot.slane %v574, 5
          %v577 = vsel %vm505, %v572, %v576
          %v579 = vshrl.u32 %v464, 16
          %v581 = vrot.slane %v579, 4
          %v582 = vshll.u32 %v464, 16
          %v584 = vrot.slane %v582, 5
          %v585 = vor.u32 %v581, %v584
          %v586 = vrot.slane %v585, 4
          %v588 = vshll.u32 %v465, 16
          %v590 = vrot.slane %v588, 5
          %v591 = vsel %vm505, %v586, %v590
          %v592 = vshrl.u32 %v465, 16
          %v594 = vrot.slane %v592, 4
          %v595 = vor.u32 %v594, %v590
          %v596 = vrot.slane %v595, 4
          %v598 = vshll.u32 %v466, 16
          %v600 = vrot.slane %v598, 5
          %v601 = vsel %vm505, %v596, %v600
          %v603 = vshrl.u32 %v467, 16
          %v605 = vrot.slane %v603, 4
          %v606 = vshll.u32 %v467, 16
          %v608 = vrot.slane %v606, 5
          %v609 = vor.u32 %v605, %v608
          %v610 = vrot.slane %v609, 4
          %v612 = vshll.u32 %v468, 16
          %v614 = vrot.slane %v612, 5
          %v615 = vsel %vm505, %v610, %v614
          %v616 = vshrl.u32 %v468, 16
          %v618 = vrot.slane %v616, 4
          %v619 = vor.u32 %v618, %v614
          %v620 = vrot.slane %v619, 4
          %v622 = vshll.u32 %v469, 16
          %v624 = vrot.slane %v622, 5
          %v625 = vsel %vm505, %v620, %v624
          %v627 = vshrl.u32 %v470, 16
          %v629 = vrot.slane %v627, 4
          %v630 = vshll.u32 %v470, 16
          %v632 = vrot.slane %v630, 5
          %v633 = vor.u32 %v629, %v632
          %v634 = vrot.slane %v633, 4
          %v636 = vshll.u32 %v471, 16
          %v638 = vrot.slane %v636, 5
          %v639 = vsel %vm505, %v634, %v638
          %v640 = vshrl.u32 %v471, 16
          %v642 = vrot.slane %v640, 4
          %v643 = vor.u32 %v642, %v638
          %v644 = vrot.slane %v643, 4
          %v646 = vshll.u32 %v472, 16
          %v648 = vrot.slane %v646, 5
          %v649 = vsel %vm505, %v644, %v648
          %v651 = vshrl.u32 %v473, 16
          %v653 = vrot.slane %v651, 4
          %v654 = vshll.u32 %v473, 16
          %v656 = vrot.slane %v654, 5
          %v657 = vor.u32 %v653, %v656
          %v658 = vrot.slane %v657, 4
          %v660 = vshll.u32 %v474, 16
          %v662 = vrot.slane %v660, 5
          %v663 = vsel %vm505, %v658, %v662
          %v664 = vshrl.u32 %v474, 16
          %v666 = vrot.slane %v664, 4
          %v667 = vor.u32 %v666, %v662
          %v668 = vrot.slane %v667, 4
          %v670 = vshll.u32 %v475, 16
          %v672 = vrot.slane %v670, 5
          %v673 = vsel %vm505, %v668, %v672
          %v675 = vshrl.u32 %v476, 16
          %v677 = vrot.slane %v675, 4
          %v678 = vshll.u32 %v476, 16
          %v680 = vrot.slane %v678, 5
          %v681 = vor.u32 %v677, %v680
          %v682 = vrot.slane %v681, 4
          %v684 = vshll.u32 %v477, 16
          %v686 = vrot.slane %v684, 5
          %v687 = vsel %vm505, %v682, %v686
          %v688 = vshrl.u32 %v477, 16
          %v690 = vrot.slane %v688, 4
          %v691 = vor.u32 %v690, %v686
          %v692 = vrot.slane %v691, 4
          %v694 = vshll.u32 %v478, 16
          %v696 = vrot.slane %v694, 5
          %v697 = vsel %vm505, %v692, %v696
          %v699 = vshrl.u32 %v479, 16
          %v701 = vrot.slane %v699, 4
          %v702 = vshll.u32 %v479, 16
          %v704 = vrot.slane %v702, 5
          %v705 = vor.u32 %v701, %v704
          %v706 = vrot.slane %v705, 4
          %v708 = vshll.u32 %v480, 16
          %v710 = vrot.slane %v708, 5
          %v711 = vsel %vm505, %v706, %v710
          %v712 = vshrl.u32 %v480, 16
          %v714 = vrot.slane %v712, 4
          %v715 = vor.u32 %v714, %v710
          %v716 = vrot.slane %v715, 4
          %v718 = vshll.u32 %v481, 16
          %v720 = vrot.slane %v718, 5
          %v721 = vsel %vm505, %v716, %v720
          %v723 = vshrl.u32 %v482, 16
          %v725 = vrot.slane %v723, 4
          %v726 = vshll.u32 %v482, 16
          %v728 = vrot.slane %v726, 5
          %v729 = vor.u32 %v725, %v728
          %v730 = vrot.slane %v729, 4
          %v732 = vshll.u32 %v483, 16
          %v734 = vrot.slane %v732, 5
          %v735 = vsel %vm505, %v730, %v734
          %v736 = vshrl.u32 %v483, 16
          %v738 = vrot.slane %v736, 4
          %v739 = vor.u32 %v738, %v734
          %v740 = vrot.slane %v739, 4
          %v742 = vshll.u32 %v484, 16
          %v744 = vrot.slane %v742, 5
          %v745 = vsel %vm505, %v740, %v744
          %v747 = vshrl.u32 %v485, 16
          %v749 = vrot.slane %v747, 4
          %v750 = vshll.u32 %v485, 16
          %v752 = vrot.slane %v750, 5
          %v753 = vor.u32 %v749, %v752
          %v754 = vrot.slane %v753, 4
          %v756 = vshll.u32 %v486, 16
          %v758 = vrot.slane %v756, 5
          %v759 = vsel %vm505, %v754, %v758
          %v760 = vshrl.u32 %v486, 16
          %v762 = vrot.slane %v760, 4
          %v763 = vor.u32 %v762, %v758
          %v764 = vrot.slane %v763, 4
          %v766 = vshll.u32 %v487, 16
          %v768 = vrot.slane %v766, 5
          %v769 = vsel %vm505, %v764, %v768
          %v771 = vshrl.u32 %v488, 16
          %v773 = vrot.slane %v771, 4
          %v774 = vshll.u32 %v488, 16
          %v776 = vrot.slane %v774, 5
          %v777 = vor.u32 %v773, %v776
          %v778 = vrot.slane %v777, 4
          %v780 = vshll.u32 %v489, 16
          %v782 = vrot.slane %v780, 5
          %v783 = vsel %vm505, %v778, %v782
          %v784 = vshrl.u32 %v489, 16
          %v786 = vrot.slane %v784, 4
          %v787 = vor.u32 %v786, %v782
          %v788 = vrot.slane %v787, 4
          %v790 = vshll.u32 %v490, 16
          %v792 = vrot.slane %v790, 5
          %v793 = vsel %vm505, %v788, %v792
          %v795 = vshrl.u32 %v491, 16
          %v797 = vrot.slane %v795, 4
          %v798 = vshll.u32 %v491, 16
          %v800 = vrot.slane %v798, 5
          %v801 = vor.u32 %v797, %v800
          %v802 = vrot.slane %v801, 4
          %v804 = vshll.u32 %v492, 16
          %v806 = vrot.slane %v804, 5
          %v807 = vsel %vm505, %v802, %v806
          %v808 = vshrl.u32 %v492, 16
          %v810 = vrot.slane %v808, 4
          %v811 = vor.u32 %v810, %v806
          %v812 = vrot.slane %v811, 4
          %v814 = vshll.u32 %v493, 16
          %v816 = vrot.slane %v814, 5
          %v817 = vsel %vm505, %v812, %v816
          %v819 = vshrl.u32 %v494, 16
          %v821 = vrot.slane %v819, 4
          %v822 = vshll.u32 %v494, 16
          %v824 = vrot.slane %v822, 5
          %v825 = vor.u32 %v821, %v824
          %v826 = vrot.slane %v825, 4
          %v828 = vshll.u32 %v495, 16
          %v830 = vrot.slane %v828, 5
          %v831 = vsel %vm505, %v826, %v830
          %v832 = vshrl.u32 %v495, 16
          %v834 = vrot.slane %v832, 4
          %v835 = vor.u32 %v834, %v830
          %v836 = vrot.slane %v835, 4
          %v838 = vshll.u32 %v496, 16
          %v840 = vrot.slane %v838, 5
          %v841 = vsel %vm505, %v836, %v840
          %v843 = vshrl.u32 %v497, 16
          %v845 = vrot.slane %v843, 4
          %v846 = vshll.u32 %v497, 16
          %v848 = vrot.slane %v846, 5
          %v849 = vor.u32 %v845, %v848
          %v850 = vrot.slane %v849, 4
          %v852 = vshll.u32 %v498, 16
          %v854 = vrot.slane %v852, 5
          %v855 = vsel %vm505, %v850, %v854
          %v856 = vshrl.u32 %v498, 16
          %v858 = vrot.slane %v856, 4
          %v859 = vor.u32 %v858, %v854
          %v860 = vrot.slane %v859, 4
          %v862 = vshll.u32 %v499, 16
          %v864 = vrot.slane %v862, 5
          %v865 = vsel %vm505, %v860, %v864
          %v867 = vshrl.u32 %v500, 16
          %v869 = vrot.slane %v867, 4
          %v870 = vshll.u32 %v500, 16
          %v872 = vrot.slane %v870, 5
          %v873 = vor.u32 %v869, %v872
          %v874 = vrot.slane %v873, 4
          %v876 = vshll.u32 %v501, 16
          %v878 = vrot.slane %v876, 5
          %v879 = vsel %vm505, %v874, %v878
          %v880 = vshrl.u32 %v501, 16
          %v882 = vrot.slane %v880, 4
          %v883 = vor.u32 %v882, %v878
          %v884 = vrot.slane %v883, 4
          %v886 = vshll.u32 %v502, 16
          %v888 = vrot.slane %v886, 5
          %v889 = vsel %vm505, %v884, %v888
          %v890 = vunpack.c.l.b16 %v519
          %v891 = vunpack.c.l.b16 %v529
          %v892 = vunpack.c.l.b16 %v543
          %v893 = vunpack.c.l.b16 %v553
          %v894 = vunpack.c.l.b16 %v567
          %v895 = vunpack.c.l.b16 %v577
          %v896 = vunpack.c.l.b16 %v591
          %v897 = vunpack.c.l.b16 %v601
          %v898 = vunpack.c.l.b16 %v615
          %v899 = vunpack.c.l.b16 %v625
          %v900 = vunpack.c.l.b16 %v639
          %v901 = vunpack.c.l.b16 %v649
          %v902 = vunpack.c.l.b16 %v663
          %v903 = vunpack.c.l.b16 %v673
          %v904 = vunpack.c.l.b16 %v687
          %v905 = vunpack.c.l.b16 %v697
          %v906 = vunpack.c.l.b16 %v711
          %v907 = vunpack.c.l.b16 %v721
          %v908 = vunpack.c.l.b16 %v735
          %v909 = vunpack.c.l.b16 %v745
          %v910 = vunpack.c.l.b16 %v759
          %v911 = vunpack.c.l.b16 %v769
          %v912 = vunpack.c.l.b16 %v783
          %v913 = vunpack.c.l.b16 %v793
          %v914 = vunpack.c.l.b16 %v807
          %v915 = vunpack.c.l.b16 %v817
          %v916 = vunpack.c.l.b16 %v831
          %v917 = vunpack.c.l.b16 %v841
          %v918 = vunpack.c.l.b16 %v855
          %v919 = vunpack.c.l.b16 %v865
          %v920 = vunpack.c.l.b16 %v879
          %v921 = vunpack.c.l.b16 %v889
          %v922 = vpack.c.b16 %v891, %v890
          %v923 = vpack.c.b16 %v893, %v892
          %v924 = vpack.c.b16 %v895, %v894
          %v925 = vpack.c.b16 %v897, %v896
          %v926 = vpack.c.b16 %v899, %v898
          %v927 = vpack.c.b16 %v901, %v900
          %v928 = vpack.c.b16 %v903, %v902
          %v929 = vpack.c.b16 %v905, %v904
          %v930 = vpack.c.b16 %v907, %v906
          %v931 = vpack.c.b16 %v909, %v908
          %v932 = vpack.c.b16 %v911, %v910
          %v933 = vpack.c.b16 %v913, %v912
          %v934 = vpack.c.b16 %v915, %v914
          %v935 = vpack.c.b16 %v917, %v916
          %v936 = vpack.c.b16 %v919, %v918
          %v937 = vpack.c.b16 %v921, %v920
          %938 = vrot.lane.b32.xlu0 %v922, 4
          %v939 = vpop.permute.xlu0 %938
          %940 = vrot.lane.b32.xlu0 %v923, 4
          %v941 = vpop.permute.xlu0 %940
          %942 = vrot.lane.b32.xlu0 %v924, 4
          %v943 = vpop.permute.xlu0 %942
          %944 = vrot.lane.b32.xlu0 %v925, 4
          %v945 = vpop.permute.xlu0 %944
          %946 = vrot.lane.b32.xlu0 %v926, 4
          %v947 = vpop.permute.xlu0 %946
          %948 = vrot.lane.b32.xlu0 %v927, 4
          %v949 = vpop.permute.xlu0 %948
          %950 = vrot.lane.b32.xlu0 %v928, 4
          %v951 = vpop.permute.xlu0 %950
          %952 = vrot.lane.b32.xlu0 %v929, 4
          %v953 = vpop.permute.xlu0 %952
          %954 = vrot.lane.b32.xlu0 %v930, 4
          %v955 = vpop.permute.xlu0 %954
          %956 = vrot.lane.b32.xlu0 %v931, 4
          %v957 = vpop.permute.xlu0 %956
          %958 = vrot.lane.b32.xlu0 %v932, 4
          %v959 = vpop.permute.xlu0 %958
          %960 = vrot.lane.b32.xlu0 %v933, 4
          %v961 = vpop.permute.xlu0 %960
          %962 = vrot.lane.b32.xlu0 %v934, 4
          %v963 = vpop.permute.xlu0 %962
          %964 = vrot.lane.b32.xlu0 %v935, 4
          %v965 = vpop.permute.xlu0 %964
          %966 = vrot.lane.b32.xlu0 %v936, 4
          %v967 = vpop.permute.xlu0 %966
          %968 = vrot.lane.b32.xlu0 %v937, 4
          %v969 = vpop.permute.xlu0 %968
          %vm986 = vcmask 64544
          %987 = vst.msk [vmem:[#allocation2] sm:$0xff] %vm986, %v939
          %988 = vst.msk [vmem:[#allocation2 + $0x8] sm:$0xff] %vm986, %v941
          %989 = vst.msk [vmem:[#allocation2 + $0x10] sm:$0xff] %vm986, %v943
          %990 = vst.msk [vmem:[#allocation2 + $0x18] sm:$0xff] %vm986, %v945
          %991 = vst.msk [vmem:[#allocation2 + $0x20] sm:$0xff] %vm986, %v947
          %992 = vst.msk [vmem:[#allocation2 + $0x28] sm:$0xff] %vm986, %v949
          %993 = vst.msk [vmem:[#allocation2 + $0x30] sm:$0xff] %vm986, %v951
          %994 = vst.msk [vmem:[#allocation2 + $0x38] sm:$0xff] %vm986, %v953
          %995 = vst.msk [vmem:[#allocation2 + $0x40] sm:$0xff] %vm986, %v955
          %996 = vst.msk [vmem:[#allocation2 + $0x48] sm:$0xff] %vm986, %v957
          %997 = vst.msk [vmem:[#allocation2 + $0x50] sm:$0xff] %vm986, %v959
          %998 = vst.msk [vmem:[#allocation2 + $0x58] sm:$0xff] %vm986, %v961
          %999 = vst.msk [vmem:[#allocation2 + $0x60] sm:$0xff] %vm986, %v963
          %1000 = vst.msk [vmem:[#allocation2 + $0x68] sm:$0xff] %vm986, %v965
          %1001 = vst.msk [vmem:[#allocation2 + $0x70] sm:$0xff] %vm986, %v967
          %1002 = vst.msk [vmem:[#allocation2 + $0x78] sm:$0xff] %vm986, %v969
          %v1003 = vld [vmem:[%s267] sm:$0xe]
          %v1004 = vld [vmem:[%s267 + $0x4] sm:$0xf]
          %v1005 = vld [vmem:[%s267 + $0x8] sm:$0x1]
          %v1006 = vld [vmem:[%s267 + $0xc] sm:$0xe]
          %v1007 = vld [vmem:[%s267 + $0x10] sm:$0xf]
          %v1008 = vld [vmem:[%s267 + $0x14] sm:$0x1]
          %v1009 = vld [vmem:[%s267 + $0x18] sm:$0xe]
          %v1010 = vld [vmem:[%s267 + $0x1c] sm:$0xf]
          %v1011 = vld [vmem:[%s267 + $0x20] sm:$0x1]
          %v1012 = vld [vmem:[%s267 + $0x24] sm:$0xe]
          %v1013 = vld [vmem:[%s267 + $0x28] sm:$0xf]
          %v1014 = vld [vmem:[%s267 + $0x2c] sm:$0x1]
          %v1015 = vld [vmem:[%s267 + $0x30] sm:$0xe]
          %v1016 = vld [vmem:[%s267 + $0x34] sm:$0xf]
          %v1017 = vld [vmem:[%s267 + $0x38] sm:$0x1]
          %v1018 = vld [vmem:[%s267 + $0x3c] sm:$0xe]
          %v1019 = vld [vmem:[%s267 + $0x40] sm:$0xf]
          %v1020 = vld [vmem:[%s267 + $0x44] sm:$0x1]
          %v1021 = vld [vmem:[%s267 + $0x48] sm:$0xe]
          %v1022 = vld [vmem:[%s267 + $0x4c] sm:$0xf]
          %v1023 = vld [vmem:[%s267 + $0x50] sm:$0x1]
          %v1024 = vld [vmem:[%s267 + $0x54] sm:$0xe]
          %v1025 = vld [vmem:[%s267 + $0x58] sm:$0xf]
          %v1026 = vld [vmem:[%s267 + $0x5c] sm:$0x1]
          %v1027 = vld [vmem:[%s267 + $0x60] sm:$0xe]
          %v1028 = vld [vmem:[%s267 + $0x64] sm:$0xf]
          %v1029 = vld [vmem:[%s267 + $0x68] sm:$0x1]
          %v1030 = vld [vmem:[%s267 + $0x6c] sm:$0xe]
          %v1031 = vld [vmem:[%s267 + $0x70] sm:$0xf]
          %v1032 = vld [vmem:[%s267 + $0x74] sm:$0x1]
          %v1033 = vld [vmem:[%s267 + $0x78] sm:$0xe]
          %v1034 = vld [vmem:[%s267 + $0x7c] sm:$0xf]
          %v1035 = vld [vmem:[%s267 + $0x80] sm:$0x1]
          %v1036 = vld [vmem:[%s267 + $0x84] sm:$0xe]
          %v1037 = vld [vmem:[%s267 + $0x88] sm:$0xf]
          %v1038 = vld [vmem:[%s267 + $0x8c] sm:$0x1]
          %v1039 = vld [vmem:[%s267 + $0x90] sm:$0xe]
          %v1040 = vld [vmem:[%s267 + $0x94] sm:$0xf]
          %v1041 = vld [vmem:[%s267 + $0x98] sm:$0x1]
          %v1042 = vld [vmem:[%s267 + $0x9c] sm:$0xe]
          %v1043 = vld [vmem:[%s267 + $0xa0] sm:$0xf]
          %v1044 = vld [vmem:[%s267 + $0xa4] sm:$0x1]
          %v1045 = vld [vmem:[%s267 + $0xa8] sm:$0xe]
          %v1046 = vld [vmem:[%s267 + $0xac] sm:$0xf]
          %v1047 = vld [vmem:[%s267 + $0xb0] sm:$0x1]
          %v1048 = vld [vmem:[%s267 + $0xb4] sm:$0xe]
          %v1049 = vld [vmem:[%s267 + $0xb8] sm:$0xf]
          %v1050 = vld [vmem:[%s267 + $0xbc] sm:$0x1]
          %vm1099 = vcmask 1042432
          %vm1100 = vcmask 1046532
          %vm1101 = vmor %vm1099, %vm1100
          %v1102 = vrot.slane %v1003, 5
          %v1103 = vrot.slane %v1102, 4
          %v1104 = vrot.slane %v1004, 5
          %v1105 = vsel %vm1101, %v1103, %v1104
          %v1106 = vrot.slane %v1104, 4
          %v1107 = vrot.slane %v1005, 5
          %v1108 = vsel %vm1101, %v1106, %v1107
          %v1109 = vrot.slane %v1006, 5
          %v1110 = vrot.slane %v1109, 4
          %v1111 = vrot.slane %v1007, 5
          %v1112 = vsel %vm1101, %v1110, %v1111
          %v1113 = vrot.slane %v1111, 4
          %v1114 = vrot.slane %v1008, 5
          %v1115 = vsel %vm1101, %v1113, %v1114
          %v1116 = vrot.slane %v1009, 5
          %v1117 = vrot.slane %v1116, 4
          %v1118 = vrot.slane %v1010, 5
          %v1119 = vsel %vm1101, %v1117, %v1118
          %v1120 = vrot.slane %v1118, 4
          %v1121 = vrot.slane %v1011, 5
          %v1122 = vsel %vm1101, %v1120, %v1121
          %v1123 = vrot.slane %v1012, 5
          %v1124 = vrot.slane %v1123, 4
          %v1125 = vrot.slane %v1013, 5
          %v1126 = vsel %vm1101, %v1124, %v1125
          %v1127 = vrot.slane %v1125, 4
          %v1128 = vrot.slane %v1014, 5
          %v1129 = vsel %vm1101, %v1127, %v1128
          %v1130 = vrot.slane %v1015, 5
          %v1131 = vrot.slane %v1130, 4
          %v1132 = vrot.slane %v1016, 5
          %v1133 = vsel %vm1101, %v1131, %v1132
          %v1134 = vrot.slane %v1132, 4
          %v1135 = vrot.slane %v1017, 5
          %v1136 = vsel %vm1101, %v1134, %v1135
          %v1137 = vrot.slane %v1018, 5
          %v1138 = vrot.slane %v1137, 4
          %v1139 = vrot.slane %v1019, 5
          %v1140 = vsel %vm1101, %v1138, %v1139
          %v1141 = vrot.slane %v1139, 4
          %v1142 = vrot.slane %v1020, 5
          %v1143 = vsel %vm1101, %v1141, %v1142
          %v1144 = vrot.slane %v1021, 5
          %v1145 = vrot.slane %v1144, 4
          %v1146 = vrot.slane %v1022, 5
          %v1147 = vsel %vm1101, %v1145, %v1146
          %v1148 = vrot.slane %v1146, 4
          %v1149 = vrot.slane %v1023, 5
          %v1150 = vsel %vm1101, %v1148, %v1149
          %v1151 = vrot.slane %v1024, 5
          %v1152 = vrot.slane %v1151, 4
          %v1153 = vrot.slane %v1025, 5
          %v1154 = vsel %vm1101, %v1152, %v1153
          %v1155 = vrot.slane %v1153, 4
          %v1156 = vrot.slane %v1026, 5
          %v1157 = vsel %vm1101, %v1155, %v1156
          %v1158 = vrot.slane %v1027, 5
          %v1159 = vrot.slane %v1158, 4
          %v1160 = vrot.slane %v1028, 5
          %v1161 = vsel %vm1101, %v1159, %v1160
          %v1162 = vrot.slane %v1160, 4
          %v1163 = vrot.slane %v1029, 5
          %v1164 = vsel %vm1101, %v1162, %v1163
          %v1165 = vrot.slane %v1030, 5
          %v1166 = vrot.slane %v1165, 4
          %v1167 = vrot.slane %v1031, 5
          %v1168 = vsel %vm1101, %v1166, %v1167
          %v1169 = vrot.slane %v1167, 4
          %v1170 = vrot.slane %v1032, 5
          %v1171 = vsel %vm1101, %v1169, %v1170
          %v1172 = vrot.slane %v1033, 5
          %v1173 = vrot.slane %v1172, 4
          %v1174 = vrot.slane %v1034, 5
          %v1175 = vsel %vm1101, %v1173, %v1174
          %v1176 = vrot.slane %v1174, 4
          %v1177 = vrot.slane %v1035, 5
          %v1178 = vsel %vm1101, %v1176, %v1177
          %v1179 = vrot.slane %v1036, 5
          %v1180 = vrot.slane %v1179, 4
          %v1181 = vrot.slane %v1037, 5
          %v1182 = vsel %vm1101, %v1180, %v1181
          %v1183 = vrot.slane %v1181, 4
          %v1184 = vrot.slane %v1038, 5
          %v1185 = vsel %vm1101, %v1183, %v1184
          %v1186 = vrot.slane %v1039, 5
          %v1187 = vrot.slane %v1186, 4
          %v1188 = vrot.slane %v1040, 5
          %v1189 = vsel %vm1101, %v1187, %v1188
          %v1190 = vrot.slane %v1188, 4
          %v1191 = vrot.slane %v1041, 5
          %v1192 = vsel %vm1101, %v1190, %v1191
          %v1193 = vrot.slane %v1042, 5
          %v1194 = vrot.slane %v1193, 4
          %v1195 = vrot.slane %v1043, 5
          %v1196 = vsel %vm1101, %v1194, %v1195
          %v1197 = vrot.slane %v1195, 4
          %v1198 = vrot.slane %v1044, 5
          %v1199 = vsel %vm1101, %v1197, %v1198
          %v1200 = vrot.slane %v1045, 5
          %v1201 = vrot.slane %v1200, 4
          %v1202 = vrot.slane %v1046, 5
          %v1203 = vsel %vm1101, %v1201, %v1202
          %v1204 = vrot.slane %v1202, 4
          %v1205 = vrot.slane %v1047, 5
          %v1206 = vsel %vm1101, %v1204, %v1205
          %v1207 = vrot.slane %v1048, 5
          %v1208 = vrot.slane %v1207, 4
          %v1209 = vrot.slane %v1049, 5
          %v1210 = vsel %vm1101, %v1208, %v1209
          %v1211 = vrot.slane %v1209, 4
          %v1212 = vrot.slane %v1050, 5
          %v1213 = vsel %vm1101, %v1211, %v1212
          %v1214 = vunpack.c.l.b16 %v1105
          %v1215 = vunpack.c.l.b16 %v1108
          %v1216 = vunpack.c.l.b16 %v1112
          %v1217 = vunpack.c.l.b16 %v1115
          %v1218 = vunpack.c.l.b16 %v1119
          %v1219 = vunpack.c.l.b16 %v1122
          %v1220 = vunpack.c.l.b16 %v1126
          %v1221 = vunpack.c.l.b16 %v1129
          %v1222 = vunpack.c.l.b16 %v1133
          %v1223 = vunpack.c.l.b16 %v1136
          %v1224 = vunpack.c.l.b16 %v1140
          %v1225 = vunpack.c.l.b16 %v1143
          %v1226 = vunpack.c.l.b16 %v1147
          %v1227 = vunpack.c.l.b16 %v1150
          %v1228 = vunpack.c.l.b16 %v1154
          %v1229 = vunpack.c.l.b16 %v1157
          %v1230 = vunpack.c.l.b16 %v1161
          %v1231 = vunpack.c.l.b16 %v1164
          %v1232 = vunpack.c.l.b16 %v1168
          %v1233 = vunpack.c.l.b16 %v1171
          %v1234 = vunpack.c.l.b16 %v1175
          %v1235 = vunpack.c.l.b16 %v1178
          %v1236 = vunpack.c.l.b16 %v1182
          %v1237 = vunpack.c.l.b16 %v1185
          %v1238 = vunpack.c.l.b16 %v1189
          %v1239 = vunpack.c.l.b16 %v1192
          %v1240 = vunpack.c.l.b16 %v1196
          %v1241 = vunpack.c.l.b16 %v1199
          %v1242 = vunpack.c.l.b16 %v1203
          %v1243 = vunpack.c.l.b16 %v1206
          %v1244 = vunpack.c.l.b16 %v1210
          %v1245 = vunpack.c.l.b16 %v1213
          %v1246 = vpack.c.b16 %v1215, %v1214
          %v1247 = vpack.c.b16 %v1217, %v1216
          %v1248 = vpack.c.b16 %v1219, %v1218
          %v1249 = vpack.c.b16 %v1221, %v1220
          %v1250 = vpack.c.b16 %v1223, %v1222
          %v1251 = vpack.c.b16 %v1225, %v1224
          %v1252 = vpack.c.b16 %v1227, %v1226
          %v1253 = vpack.c.b16 %v1229, %v1228
          %v1254 = vpack.c.b16 %v1231, %v1230
          %v1255 = vpack.c.b16 %v1233, %v1232
          %v1256 = vpack.c.b16 %v1235, %v1234
          %v1257 = vpack.c.b16 %v1237, %v1236
          %v1258 = vpack.c.b16 %v1239, %v1238
          %v1259 = vpack.c.b16 %v1241, %v1240
          %v1260 = vpack.c.b16 %v1243, %v1242
          %v1261 = vpack.c.b16 %v1245, %v1244
          %1262 = vrot.lane.b32.xlu0 %v1246, 8
          %v1263 = vpop.permute.xlu0 %1262
          %1264 = vrot.lane.b32.xlu0 %v1247, 8
          %v1265 = vpop.permute.xlu0 %1264
          %1266 = vrot.lane.b32.xlu0 %v1248, 8
          %v1267 = vpop.permute.xlu0 %1266
          %1268 = vrot.lane.b32.xlu0 %v1249, 8
          %v1269 = vpop.permute.xlu0 %1268
          %1270 = vrot.lane.b32.xlu0 %v1250, 8
          %v1271 = vpop.permute.xlu0 %1270
          %1272 = vrot.lane.b32.xlu0 %v1251, 8
          %v1273 = vpop.permute.xlu0 %1272
          %1274 = vrot.lane.b32.xlu0 %v1252, 8
          %v1275 = vpop.permute.xlu0 %1274
          %1276 = vrot.lane.b32.xlu0 %v1253, 8
          %v1277 = vpop.permute.xlu0 %1276
          %1278 = vrot.lane.b32.xlu0 %v1254, 8
          %v1279 = vpop.permute.xlu0 %1278
          %1280 = vrot.lane.b32.xlu0 %v1255, 8
          %v1281 = vpop.permute.xlu0 %1280
          %1282 = vrot.lane.b32.xlu0 %v1256, 8
          %v1283 = vpop.permute.xlu0 %1282
          %1284 = vrot.lane.b32.xlu0 %v1257, 8
          %v1285 = vpop.permute.xlu0 %1284
          %1286 = vrot.lane.b32.xlu0 %v1258, 8
          %v1287 = vpop.permute.xlu0 %1286
          %1288 = vrot.lane.b32.xlu0 %v1259, 8
          %v1289 = vpop.permute.xlu0 %1288
          %1290 = vrot.lane.b32.xlu0 %v1260, 8
          %v1291 = vpop.permute.xlu0 %1290
          %1292 = vrot.lane.b32.xlu0 %v1261, 8
          %v1293 = vpop.permute.xlu0 %1292
          %vm1310 = vcmask 97344
          %1311 = vst.msk [vmem:[#allocation2] sm:$0xff] %vm1310, %v1263
          %1312 = vst.msk [vmem:[#allocation2 + $0x8] sm:$0xff] %vm1310, %v1265
          %1313 = vst.msk [vmem:[#allocation2 + $0x10] sm:$0xff] %vm1310, %v1267
          %1314 = vst.msk [vmem:[#allocation2 + $0x18] sm:$0xff] %vm1310, %v1269
          %1315 = vst.msk [vmem:[#allocation2 + $0x20] sm:$0xff] %vm1310, %v1271
          %1316 = vst.msk [vmem:[#allocation2 + $0x28] sm:$0xff] %vm1310, %v1273
          %1317 = vst.msk [vmem:[#allocation2 + $0x30] sm:$0xff] %vm1310, %v1275
          %1318 = vst.msk [vmem:[#allocation2 + $0x38] sm:$0xff] %vm1310, %v1277
          %1319 = vst.msk [vmem:[#allocation2 + $0x40] sm:$0xff] %vm1310, %v1279
          %1320 = vst.msk [vmem:[#allocation2 + $0x48] sm:$0xff] %vm1310, %v1281
          %1321 = vst.msk [vmem:[#allocation2 + $0x50] sm:$0xff] %vm1310, %v1283
          %1322 = vst.msk [vmem:[#allocation2 + $0x58] sm:$0xff] %vm1310, %v1285
          %1323 = vst.msk [vmem:[#allocation2 + $0x60] sm:$0xff] %vm1310, %v1287
          %1324 = vst.msk [vmem:[#allocation2 + $0x68] sm:$0xff] %vm1310, %v1289
          %1325 = vst.msk [vmem:[#allocation2 + $0x70] sm:$0xff] %vm1310, %v1291
          %1326 = vst.msk [vmem:[#allocation2 + $0x78] sm:$0xff] %vm1310, %v1293
          %s1327 = scalar_lea.vmem %s267, 12 [#allocation3]
          %v1328 = vld [vmem:[%s1327] sm:$0xf]
          %v1329 = vld [vmem:[%s1327 + $0x4] sm:$0xf]
          %v1330 = vld [vmem:[%s1327 + $0xc] sm:$0xf]
          %v1331 = vld [vmem:[%s1327 + $0x10] sm:$0xf]
          %v1332 = vld [vmem:[%s1327 + $0x18] sm:$0xf]
          %v1333 = vld [vmem:[%s1327 + $0x1c] sm:$0xf]
          %v1334 = vld [vmem:[%s1327 + $0x24] sm:$0xf]
          %v1335 = vld [vmem:[%s1327 + $0x28] sm:$0xf]
          %v1336 = vld [vmem:[%s1327 + $0x30] sm:$0xf]
          %v1337 = vld [vmem:[%s1327 + $0x34] sm:$0xf]
          %v1338 = vld [vmem:[%s1327 + $0x3c] sm:$0xf]
          %v1339 = vld [vmem:[%s1327 + $0x40] sm:$0xf]
          %v1340 = vld [vmem:[%s1327 + $0x48] sm:$0xf]
          %v1341 = vld [vmem:[%s1327 + $0x4c] sm:$0xf]
          %v1342 = vld [vmem:[%s1327 + $0x54] sm:$0xf]
          %v1343 = vld [vmem:[%s1327 + $0x58] sm:$0xf]
          %v1344 = vld [vmem:[%s1327 + $0x60] sm:$0xf]
          %v1345 = vld [vmem:[%s1327 + $0x64] sm:$0xf]
          %v1346 = vld [vmem:[%s1327 + $0x6c] sm:$0xf]
          %v1347 = vld [vmem:[%s1327 + $0x70] sm:$0xf]
          %v1348 = vld [vmem:[%s1327 + $0x78] sm:$0xf]
          %v1349 = vld [vmem:[%s1327 + $0x7c] sm:$0xf]
          %v1350 = vld [vmem:[%s1327 + $0x84] sm:$0xf]
          %v1351 = vld [vmem:[%s1327 + $0x88] sm:$0xf]
          %v1352 = vld [vmem:[%s1327 + $0x90] sm:$0xf]
          %v1353 = vld [vmem:[%s1327 + $0x94] sm:$0xf]
          %v1354 = vld [vmem:[%s1327 + $0x9c] sm:$0xf]
          %v1355 = vld [vmem:[%s1327 + $0xa0] sm:$0xf]
          %v1356 = vld [vmem:[%s1327 + $0xa8] sm:$0xf]
          %v1357 = vld [vmem:[%s1327 + $0xac] sm:$0xf]
          %v1358 = vld [vmem:[%s1327 + $0xb4] sm:$0xf]
          %v1359 = vld [vmem:[%s1327 + $0xb8] sm:$0xf]
          %v1392 = vunpack.c.l.b16 %v1328
          %v1393 = vunpack.c.l.b16 %v1329
          %v1394 = vunpack.c.l.b16 %v1330
          %v1395 = vunpack.c.l.b16 %v1331
          %v1396 = vunpack.c.l.b16 %v1332
          %v1397 = vunpack.c.l.b16 %v1333
          %v1398 = vunpack.c.l.b16 %v1334
          %v1399 = vunpack.c.l.b16 %v1335
          %v1400 = vunpack.c.l.b16 %v1336
          %v1401 = vunpack.c.l.b16 %v1337
          %v1402 = vunpack.c.l.b16 %v1338
          %v1403 = vunpack.c.l.b16 %v1339
          %v1404 = vunpack.c.l.b16 %v1340
          %v1405 = vunpack.c.l.b16 %v1341
          %v1406 = vunpack.c.l.b16 %v1342
          %v1407 = vunpack.c.l.b16 %v1343
          %v1408 = vunpack.c.l.b16 %v1344
          %v1409 = vunpack.c.l.b16 %v1345
          %v1410 = vunpack.c.l.b16 %v1346
          %v1411 = vunpack.c.l.b16 %v1347
          %v1412 = vunpack.c.l.b16 %v1348
          %v1413 = vunpack.c.l.b16 %v1349
          %v1414 = vunpack.c.l.b16 %v1350
          %v1415 = vunpack.c.l.b16 %v1351
          %v1416 = vunpack.c.l.b16 %v1352
          %v1417 = vunpack.c.l.b16 %v1353
          %v1418 = vunpack.c.l.b16 %v1354
          %v1419 = vunpack.c.l.b16 %v1355
          %v1420 = vunpack.c.l.b16 %v1356
          %v1421 = vunpack.c.l.b16 %v1357
          %v1422 = vunpack.c.l.b16 %v1358
          %v1423 = vunpack.c.l.b16 %v1359
          %v1424 = vpack.c.b16 %v1393, %v1392
          %v1425 = vpack.c.b16 %v1395, %v1394
          %v1426 = vpack.c.b16 %v1397, %v1396
          %v1427 = vpack.c.b16 %v1399, %v1398
          %v1428 = vpack.c.b16 %v1401, %v1400
          %v1429 = vpack.c.b16 %v1403, %v1402
          %v1430 = vpack.c.b16 %v1405, %v1404
          %v1431 = vpack.c.b16 %v1407, %v1406
          %v1432 = vpack.c.b16 %v1409, %v1408
          %v1433 = vpack.c.b16 %v1411, %v1410
          %v1434 = vpack.c.b16 %v1413, %v1412
          %v1435 = vpack.c.b16 %v1415, %v1414
          %v1436 = vpack.c.b16 %v1417, %v1416
          %v1437 = vpack.c.b16 %v1419, %v1418
          %v1438 = vpack.c.b16 %v1421, %v1420
          %v1439 = vpack.c.b16 %v1423, %v1422
          %1440 = vrot.lane.b32.xlu0 %v1424, 12
          %v1441 = vpop.permute.xlu0 %1440
          %1442 = vrot.lane.b32.xlu0 %v1425, 12
          %v1443 = vpop.permute.xlu0 %1442
          %1444 = vrot.lane.b32.xlu0 %v1426, 12
          %v1445 = vpop.permute.xlu0 %1444
          %1446 = vrot.lane.b32.xlu0 %v1427, 12
          %v1447 = vpop.permute.xlu0 %1446
          %1448 = vrot.lane.b32.xlu0 %v1428, 12
          %v1449 = vpop.permute.xlu0 %1448
          %1450 = vrot.lane.b32.xlu0 %v1429, 12
          %v1451 = vpop.permute.xlu0 %1450
          %1452 = vrot.lane.b32.xlu0 %v1430, 12
          %v1453 = vpop.permute.xlu0 %1452
          %1454 = vrot.lane.b32.xlu0 %v1431, 12
          %v1455 = vpop.permute.xlu0 %1454
          %1456 = vrot.lane.b32.xlu0 %v1432, 12
          %v1457 = vpop.permute.xlu0 %1456
          %1458 = vrot.lane.b32.xlu0 %v1433, 12
          %v1459 = vpop.permute.xlu0 %1458
          %1460 = vrot.lane.b32.xlu0 %v1434, 12
          %v1461 = vpop.permute.xlu0 %1460
          %1462 = vrot.lane.b32.xlu0 %v1435, 12
          %v1463 = vpop.permute.xlu0 %1462
          %1464 = vrot.lane.b32.xlu0 %v1436, 12
          %v1465 = vpop.permute.xlu0 %1464
          %1466 = vrot.lane.b32.xlu0 %v1437, 12
          %v1467 = vpop.permute.xlu0 %1466
          %1468 = vrot.lane.b32.xlu0 %v1438, 12
          %v1469 = vpop.permute.xlu0 %1468
          %1470 = vrot.lane.b32.xlu0 %v1439, 12
          %v1471 = vpop.permute.xlu0 %1470
          %vm1488 = vcmask 130144
          %1489 = vst.msk [vmem:[#allocation2] sm:$0xff] %vm1488, %v1441
          %1490 = vst.msk [vmem:[#allocation2 + $0x8] sm:$0xff] %vm1488, %v1443
          %1491 = vst.msk [vmem:[#allocation2 + $0x10] sm:$0xff] %vm1488, %v1445
          %1492 = vst.msk [vmem:[#allocation2 + $0x18] sm:$0xff] %vm1488, %v1447
          %1493 = vst.msk [vmem:[#allocation2 + $0x20] sm:$0xff] %vm1488, %v1449
          %1494 = vst.msk [vmem:[#allocation2 + $0x28] sm:$0xff] %vm1488, %v1451
          %1495 = vst.msk [vmem:[#allocation2 + $0x30] sm:$0xff] %vm1488, %v1453
          %1496 = vst.msk [vmem:[#allocation2 + $0x38] sm:$0xff] %vm1488, %v1455
          %1497 = vst.msk [vmem:[#allocation2 + $0x40] sm:$0xff] %vm1488, %v1457
          %1498 = vst.msk [vmem:[#allocation2 + $0x48] sm:$0xff] %vm1488, %v1459
          %1499 = vst.msk [vmem:[#allocation2 + $0x50] sm:$0xff] %vm1488, %v1461
          %1500 = vst.msk [vmem:[#allocation2 + $0x58] sm:$0xff] %vm1488, %v1463
          %1501 = vst.msk [vmem:[#allocation2 + $0x60] sm:$0xff] %vm1488, %v1465
          %1502 = vst.msk [vmem:[#allocation2 + $0x68] sm:$0xff] %vm1488, %v1467
          %1503 = vst.msk [vmem:[#allocation2 + $0x70] sm:$0xff] %vm1488, %v1469
          %1504 = vst.msk [vmem:[#allocation2 + $0x78] sm:$0xff] %vm1488, %v1471
          %v1505 = vld [vmem:[%s1327] sm:$0xf]
          %v1506 = vld [vmem:[%s1327 + $0x4] sm:$0xf]
          %v1507 = vld [vmem:[%s1327 + $0x8] sm:$0x1]
          %v1508 = vld [vmem:[%s1327 + $0xc] sm:$0xf]
          %v1509 = vld [vmem:[%s1327 + $0x10] sm:$0xf]
          %v1510 = vld [vmem:[%s1327 + $0x14] sm:$0x1]
          %v1511 = vld [vmem:[%s1327 + $0x18] sm:$0xf]
          %v1512 = vld [vmem:[%s1327 + $0x1c] sm:$0xf]
          %v1513 = vld [vmem:[%s1327 + $0x20] sm:$0x1]
          %v1514 = vld [vmem:[%s1327 + $0x24] sm:$0xf]
          %v1515 = vld [vmem:[%s1327 + $0x28] sm:$0xf]
          %v1516 = vld [vmem:[%s1327 + $0x2c] sm:$0x1]
          %v1517 = vld [vmem:[%s1327 + $0x30] sm:$0xf]
          %v1518 = vld [vmem:[%s1327 + $0x34] sm:$0xf]
          %v1519 = vld [vmem:[%s1327 + $0x38] sm:$0x1]
          %v1520 = vld [vmem:[%s1327 + $0x3c] sm:$0xf]
          %v1521 = vld [vmem:[%s1327 + $0x40] sm:$0xf]
          %v1522 = vld [vmem:[%s1327 + $0x44] sm:$0x1]
          %v1523 = vld [vmem:[%s1327 + $0x48] sm:$0xf]
          %v1524 = vld [vmem:[%s1327 + $0x4c] sm:$0xf]
          %v1525 = vld [vmem:[%s1327 + $0x50] sm:$0x1]
          %v1526 = vld [vmem:[%s1327 + $0x54] sm:$0xf]
          %v1527 = vld [vmem:[%s1327 + $0x58] sm:$0xf]
          %v1528 = vld [vmem:[%s1327 + $0x5c] sm:$0x1]
          %v1529 = vld [vmem:[%s1327 + $0x60] sm:$0xf]
          %v1530 = vld [vmem:[%s1327 + $0x64] sm:$0xf]
          %v1531 = vld [vmem:[%s1327 + $0x68] sm:$0x1]
          %v1532 = vld [vmem:[%s1327 + $0x6c] sm:$0xf]
          %v1533 = vld [vmem:[%s1327 + $0x70] sm:$0xf]
          %v1534 = vld [vmem:[%s1327 + $0x74] sm:$0x1]
          %v1535 = vld [vmem:[%s1327 + $0x78] sm:$0xf]
          %v1536 = vld [vmem:[%s1327 + $0x7c] sm:$0xf]
          %v1537 = vld [vmem:[%s1327 + $0x80] sm:$0x1]
          %v1538 = vld [vmem:[%s1327 + $0x84] sm:$0xf]
          %v1539 = vld [vmem:[%s1327 + $0x88] sm:$0xf]
          %v1540 = vld [vmem:[%s1327 + $0x8c] sm:$0x1]
          %v1541 = vld [vmem:[%s1327 + $0x90] sm:$0xf]
          %v1542 = vld [vmem:[%s1327 + $0x94] sm:$0xf]
          %v1543 = vld [vmem:[%s1327 + $0x98] sm:$0x1]
          %v1544 = vld [vmem:[%s1327 + $0x9c] sm:$0xf]
          %v1545 = vld [vmem:[%s1327 + $0xa0] sm:$0xf]
          %v1546 = vld [vmem:[%s1327 + $0xa4] sm:$0x1]
          %v1547 = vld [vmem:[%s1327 + $0xa8] sm:$0xf]
          %v1548 = vld [vmem:[%s1327 + $0xac] sm:$0xf]
          %v1549 = vld [vmem:[%s1327 + $0xb0] sm:$0x1]
          %v1550 = vld [vmem:[%s1327 + $0xb4] sm:$0xf]
          %v1551 = vld [vmem:[%s1327 + $0xb8] sm:$0xf]
          %v1552 = vld [vmem:[%s1327 + $0xbc] sm:$0x1]
          %v1554 = vshrl.u32 %v1505, 16
          %v1556 = vrot.slane %v1554, 4
          %v1557 = vshll.u32 %v1505, 16
          %v1559 = vrot.slane %v1557, 5
          %v1560 = vor.u32 %v1556, %v1559
          %v1561 = vrot.slane %v1560, 4
          %v1563 = vshll.u32 %v1506, 16
          %v1565 = vrot.slane %v1563, 5
          %v1566 = vsel %vm505, %v1561, %v1565
          %v1567 = vshrl.u32 %v1506, 16
          %v1569 = vrot.slane %v1567, 4
          %v1570 = vor.u32 %v1569, %v1565
          %v1571 = vrot.slane %v1570, 4
          %v1573 = vshll.u32 %v1507, 16
          %v1575 = vrot.slane %v1573, 5
          %v1576 = vsel %vm505, %v1571, %v1575
          %v1578 = vshrl.u32 %v1508, 16
          %v1580 = vrot.slane %v1578, 4
          %v1581 = vshll.u32 %v1508, 16
          %v1583 = vrot.slane %v1581, 5
          %v1584 = vor.u32 %v1580, %v1583
          %v1585 = vrot.slane %v1584, 4
          %v1587 = vshll.u32 %v1509, 16
          %v1589 = vrot.slane %v1587, 5
          %v1590 = vsel %vm505, %v1585, %v1589
          %v1591 = vshrl.u32 %v1509, 16
          %v1593 = vrot.slane %v1591, 4
          %v1594 = vor.u32 %v1593, %v1589
          %v1595 = vrot.slane %v1594, 4
          %v1597 = vshll.u32 %v1510, 16
          %v1599 = vrot.slane %v1597, 5
          %v1600 = vsel %vm505, %v1595, %v1599
          %v1602 = vshrl.u32 %v1511, 16
          %v1604 = vrot.slane %v1602, 4
          %v1605 = vshll.u32 %v1511, 16
          %v1607 = vrot.slane %v1605, 5
          %v1608 = vor.u32 %v1604, %v1607
          %v1609 = vrot.slane %v1608, 4
          %v1611 = vshll.u32 %v1512, 16
          %v1613 = vrot.slane %v1611, 5
          %v1614 = vsel %vm505, %v1609, %v1613
          %v1615 = vshrl.u32 %v1512, 16
          %v1617 = vrot.slane %v1615, 4
          %v1618 = vor.u32 %v1617, %v1613
          %v1619 = vrot.slane %v1618, 4
          %v1621 = vshll.u32 %v1513, 16
          %v1623 = vrot.slane %v1621, 5
          %v1624 = vsel %vm505, %v1619, %v1623
          %v1626 = vshrl.u32 %v1514, 16
          %v1628 = vrot.slane %v1626, 4
          %v1629 = vshll.u32 %v1514, 16
          %v1631 = vrot.slane %v1629, 5
          %v1632 = vor.u32 %v1628, %v1631
          %v1633 = vrot.slane %v1632, 4
          %v1635 = vshll.u32 %v1515, 16
          %v1637 = vrot.slane %v1635, 5
          %v1638 = vsel %vm505, %v1633, %v1637
          %v1639 = vshrl.u32 %v1515, 16
          %v1641 = vrot.slane %v1639, 4
          %v1642 = vor.u32 %v1641, %v1637
          %v1643 = vrot.slane %v1642, 4
          %v1645 = vshll.u32 %v1516, 16
          %v1647 = vrot.slane %v1645, 5
          %v1648 = vsel %vm505, %v1643, %v1647
          %v1650 = vshrl.u32 %v1517, 16
          %v1652 = vrot.slane %v1650, 4
          %v1653 = vshll.u32 %v1517, 16
          %v1655 = vrot.slane %v1653, 5
          %v1656 = vor.u32 %v1652, %v1655
          %v1657 = vrot.slane %v1656, 4
          %v1659 = vshll.u32 %v1518, 16
          %v1661 = vrot.slane %v1659, 5
          %v1662 = vsel %vm505, %v1657, %v1661
          %v1663 = vshrl.u32 %v1518, 16
          %v1665 = vrot.slane %v1663, 4
          %v1666 = vor.u32 %v1665, %v1661
          %v1667 = vrot.slane %v1666, 4
          %v1669 = vshll.u32 %v1519, 16
          %v1671 = vrot.slane %v1669, 5
          %v1672 = vsel %vm505, %v1667, %v1671
          %v1674 = vshrl.u32 %v1520, 16
          %v1676 = vrot.slane %v1674, 4
          %v1677 = vshll.u32 %v1520, 16
          %v1679 = vrot.slane %v1677, 5
          %v1680 = vor.u32 %v1676, %v1679
          %v1681 = vrot.slane %v1680, 4
          %v1683 = vshll.u32 %v1521, 16
          %v1685 = vrot.slane %v1683, 5
          %v1686 = vsel %vm505, %v1681, %v1685
          %v1687 = vshrl.u32 %v1521, 16
          %v1689 = vrot.slane %v1687, 4
          %v1690 = vor.u32 %v1689, %v1685
          %v1691 = vrot.slane %v1690, 4
          %v1693 = vshll.u32 %v1522, 16
          %v1695 = vrot.slane %v1693, 5
          %v1696 = vsel %vm505, %v1691, %v1695
          %v1698 = vshrl.u32 %v1523, 16
          %v1700 = vrot.slane %v1698, 4
          %v1701 = vshll.u32 %v1523, 16
          %v1703 = vrot.slane %v1701, 5
          %v1704 = vor.u32 %v1700, %v1703
          %v1705 = vrot.slane %v1704, 4
          %v1707 = vshll.u32 %v1524, 16
          %v1709 = vrot.slane %v1707, 5
          %v1710 = vsel %vm505, %v1705, %v1709
          %v1711 = vshrl.u32 %v1524, 16
          %v1713 = vrot.slane %v1711, 4
          %v1714 = vor.u32 %v1713, %v1709
          %v1715 = vrot.slane %v1714, 4
          %v1717 = vshll.u32 %v1525, 16
          %v1719 = vrot.slane %v1717, 5
          %v1720 = vsel %vm505, %v1715, %v1719
          %v1722 = vshrl.u32 %v1526, 16
          %v1724 = vrot.slane %v1722, 4
          %v1725 = vshll.u32 %v1526, 16
          %v1727 = vrot.slane %v1725, 5
          %v1728 = vor.u32 %v1724, %v1727
          %v1729 = vrot.slane %v1728, 4
          %v1731 = vshll.u32 %v1527, 16
          %v1733 = vrot.slane %v1731, 5
          %v1734 = vsel %vm505, %v1729, %v1733
          %v1735 = vshrl.u32 %v1527, 16
          %v1737 = vrot.slane %v1735, 4
          %v1738 = vor.u32 %v1737, %v1733
          %v1739 = vrot.slane %v1738, 4
          %v1741 = vshll.u32 %v1528, 16
          %v1743 = vrot.slane %v1741, 5
          %v1744 = vsel %vm505, %v1739, %v1743
          %v1746 = vshrl.u32 %v1529, 16
          %v1748 = vrot.slane %v1746, 4
          %v1749 = vshll.u32 %v1529, 16
          %v1751 = vrot.slane %v1749, 5
          %v1752 = vor.u32 %v1748, %v1751
          %v1753 = vrot.slane %v1752, 4
          %v1755 = vshll.u32 %v1530, 16
          %v1757 = vrot.slane %v1755, 5
          %v1758 = vsel %vm505, %v1753, %v1757
          %v1759 = vshrl.u32 %v1530, 16
          %v1761 = vrot.slane %v1759, 4
          %v1762 = vor.u32 %v1761, %v1757
          %v1763 = vrot.slane %v1762, 4
          %v1765 = vshll.u32 %v1531, 16
          %v1767 = vrot.slane %v1765, 5
          %v1768 = vsel %vm505, %v1763, %v1767
          %v1770 = vshrl.u32 %v1532, 16
          %v1772 = vrot.slane %v1770, 4
          %v1773 = vshll.u32 %v1532, 16
          %v1775 = vrot.slane %v1773, 5
          %v1776 = vor.u32 %v1772, %v1775
          %v1777 = vrot.slane %v1776, 4
          %v1779 = vshll.u32 %v1533, 16
          %v1781 = vrot.slane %v1779, 5
          %v1782 = vsel %vm505, %v1777, %v1781
          %v1783 = vshrl.u32 %v1533, 16
          %v1785 = vrot.slane %v1783, 4
          %v1786 = vor.u32 %v1785, %v1781
          %v1787 = vrot.slane %v1786, 4
          %v1789 = vshll.u32 %v1534, 16
          %v1791 = vrot.slane %v1789, 5
          %v1792 = vsel %vm505, %v1787, %v1791
          %v1794 = vshrl.u32 %v1535, 16
          %v1796 = vrot.slane %v1794, 4
          %v1797 = vshll.u32 %v1535, 16
          %v1799 = vrot.slane %v1797, 5
          %v1800 = vor.u32 %v1796, %v1799
          %v1801 = vrot.slane %v1800, 4
          %v1803 = vshll.u32 %v1536, 16
          %v1805 = vrot.slane %v1803, 5
          %v1806 = vsel %vm505, %v1801, %v1805
          %v1807 = vshrl.u32 %v1536, 16
          %v1809 = vrot.slane %v1807, 4
          %v1810 = vor.u32 %v1809, %v1805
          %v1811 = vrot.slane %v1810, 4
          %v1813 = vshll.u32 %v1537, 16
          %v1815 = vrot.slane %v1813, 5
          %v1816 = vsel %vm505, %v1811, %v1815
          %v1818 = vshrl.u32 %v1538, 16
          %v1820 = vrot.slane %v1818, 4
          %v1821 = vshll.u32 %v1538, 16
          %v1823 = vrot.slane %v1821, 5
          %v1824 = vor.u32 %v1820, %v1823
          %v1825 = vrot.slane %v1824, 4
          %v1827 = vshll.u32 %v1539, 16
          %v1829 = vrot.slane %v1827, 5
          %v1830 = vsel %vm505, %v1825, %v1829
          %v1831 = vshrl.u32 %v1539, 16
          %v1833 = vrot.slane %v1831, 4
          %v1834 = vor.u32 %v1833, %v1829
          %v1835 = vrot.slane %v1834, 4
          %v1837 = vshll.u32 %v1540, 16
          %v1839 = vrot.slane %v1837, 5
          %v1840 = vsel %vm505, %v1835, %v1839
          %v1842 = vshrl.u32 %v1541, 16
          %v1844 = vrot.slane %v1842, 4
          %v1845 = vshll.u32 %v1541, 16
          %v1847 = vrot.slane %v1845, 5
          %v1848 = vor.u32 %v1844, %v1847
          %v1849 = vrot.slane %v1848, 4
          %v1851 = vshll.u32 %v1542, 16
          %v1853 = vrot.slane %v1851, 5
          %v1854 = vsel %vm505, %v1849, %v1853
          %v1855 = vshrl.u32 %v1542, 16
          %v1857 = vrot.slane %v1855, 4
          %v1858 = vor.u32 %v1857, %v1853
          %v1859 = vrot.slane %v1858, 4
          %v1861 = vshll.u32 %v1543, 16
          %v1863 = vrot.slane %v1861, 5
          %v1864 = vsel %vm505, %v1859, %v1863
          %v1866 = vshrl.u32 %v1544, 16
          %v1868 = vrot.slane %v1866, 4
          %v1869 = vshll.u32 %v1544, 16
          %v1871 = vrot.slane %v1869, 5
          %v1872 = vor.u32 %v1868, %v1871
          %v1873 = vrot.slane %v1872, 4
          %v1875 = vshll.u32 %v1545, 16
          %v1877 = vrot.slane %v1875, 5
          %v1878 = vsel %vm505, %v1873, %v1877
          %v1879 = vshrl.u32 %v1545, 16
          %v1881 = vrot.slane %v1879, 4
          %v1882 = vor.u32 %v1881, %v1877
          %v1883 = vrot.slane %v1882, 4
          %v1885 = vshll.u32 %v1546, 16
          %v1887 = vrot.slane %v1885, 5
          %v1888 = vsel %vm505, %v1883, %v1887
          %v1890 = vshrl.u32 %v1547, 16
          %v1892 = vrot.slane %v1890, 4
          %v1893 = vshll.u32 %v1547, 16
          %v1895 = vrot.slane %v1893, 5
          %v1896 = vor.u32 %v1892, %v1895
          %v1897 = vrot.slane %v1896, 4
          %v1899 = vshll.u32 %v1548, 16
          %v1901 = vrot.slane %v1899, 5
          %v1902 = vsel %vm505, %v1897, %v1901
          %v1903 = vshrl.u32 %v1548, 16
          %v1905 = vrot.slane %v1903, 4
          %v1906 = vor.u32 %v1905, %v1901
          %v1907 = vrot.slane %v1906, 4
          %v1909 = vshll.u32 %v1549, 16
          %v1911 = vrot.slane %v1909, 5
          %v1912 = vsel %vm505, %v1907, %v1911
          %v1914 = vshrl.u32 %v1550, 16
          %v1916 = vrot.slane %v1914, 4
          %v1917 = vshll.u32 %v1550, 16
          %v1919 = vrot.slane %v1917, 5
          %v1920 = vor.u32 %v1916, %v1919
          %v1921 = vrot.slane %v1920, 4
          %v1923 = vshll.u32 %v1551, 16
          %v1925 = vrot.slane %v1923, 5
          %v1926 = vsel %vm505, %v1921, %v1925
          %v1927 = vshrl.u32 %v1551, 16
          %v1929 = vrot.slane %v1927, 4
          %v1930 = vor.u32 %v1929, %v1925
          %v1931 = vrot.slane %v1930, 4
          %v1933 = vshll.u32 %v1552, 16
          %v1935 = vrot.slane %v1933, 5
          %v1936 = vsel %vm505, %v1931, %v1935
          %v1937 = vunpack.c.l.b16 %v1566
          %v1938 = vunpack.c.l.b16 %v1576
          %v1939 = vunpack.c.l.b16 %v1590
          %v1940 = vunpack.c.l.b16 %v1600
          %v1941 = vunpack.c.l.b16 %v1614
          %v1942 = vunpack.c.l.b16 %v1624
          %v1943 = vunpack.c.l.b16 %v1638
          %v1944 = vunpack.c.l.b16 %v1648
          %v1945 = vunpack.c.l.b16 %v1662
          %v1946 = vunpack.c.l.b16 %v1672
          %v1947 = vunpack.c.l.b16 %v1686
          %v1948 = vunpack.c.l.b16 %v1696
          %v1949 = vunpack.c.l.b16 %v1710
          %v1950 = vunpack.c.l.b16 %v1720
          %v1951 = vunpack.c.l.b16 %v1734
          %v1952 = vunpack.c.l.b16 %v1744
          %v1953 = vunpack.c.l.b16 %v1758
          %v1954 = vunpack.c.l.b16 %v1768
          %v1955 = vunpack.c.l.b16 %v1782
          %v1956 = vunpack.c.l.b16 %v1792
          %v1957 = vunpack.c.l.b16 %v1806
          %v1958 = vunpack.c.l.b16 %v1816
          %v1959 = vunpack.c.l.b16 %v1830
          %v1960 = vunpack.c.l.b16 %v1840
          %v1961 = vunpack.c.l.b16 %v1854
          %v1962 = vunpack.c.l.b16 %v1864
          %v1963 = vunpack.c.l.b16 %v1878
          %v1964 = vunpack.c.l.b16 %v1888
          %v1965 = vunpack.c.l.b16 %v1902
          %v1966 = vunpack.c.l.b16 %v1912
          %v1967 = vunpack.c.l.b16 %v1926
          %v1968 = vunpack.c.l.b16 %v1936
          %v1969 = vpack.c.b16 %v1938, %v1937
          %v1970 = vpack.c.b16 %v1940, %v1939
          %v1971 = vpack.c.b16 %v1942, %v1941
          %v1972 = vpack.c.b16 %v1944, %v1943
          %v1973 = vpack.c.b16 %v1946, %v1945
          %v1974 = vpack.c.b16 %v1948, %v1947
          %v1975 = vpack.c.b16 %v1950, %v1949
          %v1976 = vpack.c.b16 %v1952, %v1951
          %v1977 = vpack.c.b16 %v1954, %v1953
          %v1978 = vpack.c.b16 %v1956, %v1955
          %v1979 = vpack.c.b16 %v1958, %v1957
          %v1980 = vpack.c.b16 %v1960, %v1959
          %v1981 = vpack.c.b16 %v1962, %v1961
          %v1982 = vpack.c.b16 %v1964, %v1963
          %v1983 = vpack.c.b16 %v1966, %v1965
          %v1984 = vpack.c.b16 %v1968, %v1967
          %1985 = vrot.lane.b32.xlu0 %v1969, 16
          %v1986 = vpop.permute.xlu0 %1985
          %1987 = vrot.lane.b32.xlu0 %v1970, 16
          %v1988 = vpop.permute.xlu0 %1987
          %1989 = vrot.lane.b32.xlu0 %v1971, 16
          %v1990 = vpop.permute.xlu0 %1989
          %1991 = vrot.lane.b32.xlu0 %v1972, 16
          %v1992 = vpop.permute.xlu0 %1991
          %1993 = vrot.lane.b32.xlu0 %v1973, 16
          %v1994 = vpop.permute.xlu0 %1993
          %1995 = vrot.lane.b32.xlu0 %v1974, 16
          %v1996 = vpop.permute.xlu0 %1995
          %1997 = vrot.lane.b32.xlu0 %v1975, 16
          %v1998 = vpop.permute.xlu0 %1997
          %1999 = vrot.lane.b32.xlu0 %v1976, 16
          %v2000 = vpop.permute.xlu0 %1999
          %2001 = vrot.lane.b32.xlu0 %v1977, 16
          %v2002 = vpop.permute.xlu0 %2001
          %2003 = vrot.lane.b32.xlu0 %v1978, 16
          %v2004 = vpop.permute.xlu0 %2003
          %2005 = vrot.lane.b32.xlu0 %v1979, 16
          %v2006 = vpop.permute.xlu0 %2005
          %2007 = vrot.lane.b32.xlu0 %v1980, 16
          %v2008 = vpop.permute.xlu0 %2007
          %2009 = vrot.lane.b32.xlu0 %v1981, 16
          %v2010 = vpop.permute.xlu0 %2009
          %2011 = vrot.lane.b32.xlu0 %v1982, 16
          %v2012 = vpop.permute.xlu0 %2011
          %2013 = vrot.lane.b32.xlu0 %v1983, 16
          %v2014 = vpop.permute.xlu0 %2013
          %2015 = vrot.lane.b32.xlu0 %v1984, 16
          %v2016 = vpop.permute.xlu0 %2015
          %vm2033 = vcmask 162944
          %2034 = vst.msk [vmem:[#allocation2] sm:$0xff] %vm2033, %v1986
          %2035 = vst.msk [vmem:[#allocation2 + $0x8] sm:$0xff] %vm2033, %v1988
          %2036 = vst.msk [vmem:[#allocation2 + $0x10] sm:$0xff] %vm2033, %v1990
          %2037 = vst.msk [vmem:[#allocation2 + $0x18] sm:$0xff] %vm2033, %v1992
          %2038 = vst.msk [vmem:[#allocation2 + $0x20] sm:$0xff] %vm2033, %v1994
          %2039 = vst.msk [vmem:[#allocation2 + $0x28] sm:$0xff] %vm2033, %v1996
          %2040 = vst.msk [vmem:[#allocation2 + $0x30] sm:$0xff] %vm2033, %v1998
          %2041 = vst.msk [vmem:[#allocation2 + $0x38] sm:$0xff] %vm2033, %v2000
          %2042 = vst.msk [vmem:[#allocation2 + $0x40] sm:$0xff] %vm2033, %v2002
          %2043 = vst.msk [vmem:[#allocation2 + $0x48] sm:$0xff] %vm2033, %v2004
          %2044 = vst.msk [vmem:[#allocation2 + $0x50] sm:$0xff] %vm2033, %v2006
          %2045 = vst.msk [vmem:[#allocation2 + $0x58] sm:$0xff] %vm2033, %v2008
          %2046 = vst.msk [vmem:[#allocation2 + $0x60] sm:$0xff] %vm2033, %v2010
          %2047 = vst.msk [vmem:[#allocation2 + $0x68] sm:$0xff] %vm2033, %v2012
          %2048 = vst.msk [vmem:[#allocation2 + $0x70] sm:$0xff] %vm2033, %v2014
          %2049 = vst.msk [vmem:[#allocation2 + $0x78] sm:$0xff] %vm2033, %v2016
          %v2050 = vld [vmem:[%s1327] sm:$0xe]
          %v2051 = vld [vmem:[%s1327 + $0x4] sm:$0xf]
          %v2052 = vld [vmem:[%s1327 + $0x8] sm:$0x1]
          %v2053 = vld [vmem:[%s1327 + $0xc] sm:$0xe]
          %v2054 = vld [vmem:[%s1327 + $0x10] sm:$0xf]
          %v2055 = vld [vmem:[%s1327 + $0x14] sm:$0x1]
          %v2056 = vld [vmem:[%s1327 + $0x18] sm:$0xe]
          %v2057 = vld [vmem:[%s1327 + $0x1c] sm:$0xf]
          %v2058 = vld [vmem:[%s1327 + $0x20] sm:$0x1]
          %v2059 = vld [vmem:[%s1327 + $0x24] sm:$0xe]
          %v2060 = vld [vmem:[%s1327 + $0x28] sm:$0xf]
          %v2061 = vld [vmem:[%s1327 + $0x2c] sm:$0x1]
          %v2062 = vld [vmem:[%s1327 + $0x30] sm:$0xe]
          %v2063 = vld [vmem:[%s1327 + $0x34] sm:$0xf]
          %v2064 = vld [vmem:[%s1327 + $0x38] sm:$0x1]
          %v2065 = vld [vmem:[%s1327 + $0x3c] sm:$0xe]
          %v2066 = vld [vmem:[%s1327 + $0x40] sm:$0xf]
          %v2067 = vld [vmem:[%s1327 + $0x44] sm:$0x1]
          %v2068 = vld [vmem:[%s1327 + $0x48] sm:$0xe]
          %v2069 = vld [vmem:[%s1327 + $0x4c] sm:$0xf]
          %v2070 = vld [vmem:[%s1327 + $0x50] sm:$0x1]
          %v2071 = vld [vmem:[%s1327 + $0x54] sm:$0xe]
          %v2072 = vld [vmem:[%s1327 + $0x58] sm:$0xf]
          %v2073 = vld [vmem:[%s1327 + $0x5c] sm:$0x1]
          %v2074 = vld [vmem:[%s1327 + $0x60] sm:$0xe]
          %v2075 = vld [vmem:[%s1327 + $0x64] sm:$0xf]
          %v2076 = vld [vmem:[%s1327 + $0x68] sm:$0x1]
          %v2077 = vld [vmem:[%s1327 + $0x6c] sm:$0xe]
          %v2078 = vld [vmem:[%s1327 + $0x70] sm:$0xf]
          %v2079 = vld [vmem:[%s1327 + $0x74] sm:$0x1]
          %v2080 = vld [vmem:[%s1327 + $0x78] sm:$0xe]
          %v2081 = vld [vmem:[%s1327 + $0x7c] sm:$0xf]
          %v2082 = vld [vmem:[%s1327 + $0x80] sm:$0x1]
          %v2083 = vld [vmem:[%s1327 + $0x84] sm:$0xe]
          %v2084 = vld [vmem:[%s1327 + $0x88] sm:$0xf]
          %v2085 = vld [vmem:[%s1327 + $0x8c] sm:$0x1]
          %v2086 = vld [vmem:[%s1327 + $0x90] sm:$0xe]
          %v2087 = vld [vmem:[%s1327 + $0x94] sm:$0xf]
          %v2088 = vld [vmem:[%s1327 + $0x98] sm:$0x1]
          %v2089 = vld [vmem:[%s1327 + $0x9c] sm:$0xe]
          %v2090 = vld [vmem:[%s1327 + $0xa0] sm:$0xf]
          %v2091 = vld [vmem:[%s1327 + $0xa4] sm:$0x1]
          %v2092 = vld [vmem:[%s1327 + $0xa8] sm:$0xe]
          %v2093 = vld [vmem:[%s1327 + $0xac] sm:$0xf]
          %v2094 = vld [vmem:[%s1327 + $0xb0] sm:$0x1]
          %v2095 = vld [vmem:[%s1327 + $0xb4] sm:$0xe]
          %v2096 = vld [vmem:[%s1327 + $0xb8] sm:$0xf]
          %v2097 = vld [vmem:[%s1327 + $0xbc] sm:$0x1]
          %v2146 = vrot.slane %v2050, 5
          %v2147 = vrot.slane %v2146, 4
          %v2148 = vrot.slane %v2051, 5
          %v2149 = vsel %vm1101, %v2147, %v2148
          %v2150 = vrot.slane %v2148, 4
          %v2151 = vrot.slane %v2052, 5
          %v2152 = vsel %vm1101, %v2150, %v2151
          %v2153 = vrot.slane %v2053, 5
          %v2154 = vrot.slane %v2153, 4
          %v2155 = vrot.slane %v2054, 5
          %v2156 = vsel %vm1101, %v2154, %v2155
          %v2157 = vrot.slane %v2155, 4
          %v2158 = vrot.slane %v2055, 5
          %v2159 = vsel %vm1101, %v2157, %v2158
          %v2160 = vrot.slane %v2056, 5
          %v2161 = vrot.slane %v2160, 4
          %v2162 = vrot.slane %v2057, 5
          %v2163 = vsel %vm1101, %v2161, %v2162
          %v2164 = vrot.slane %v2162, 4
          %v2165 = vrot.slane %v2058, 5
          %v2166 = vsel %vm1101, %v2164, %v2165
          %v2167 = vrot.slane %v2059, 5
          %v2168 = vrot.slane %v2167, 4
          %v2169 = vrot.slane %v2060, 5
          %v2170 = vsel %vm1101, %v2168, %v2169
          %v2171 = vrot.slane %v2169, 4
          %v2172 = vrot.slane %v2061, 5
          %v2173 = vsel %vm1101, %v2171, %v2172
          %v2174 = vrot.slane %v2062, 5
          %v2175 = vrot.slane %v2174, 4
          %v2176 = vrot.slane %v2063, 5
          %v2177 = vsel %vm1101, %v2175, %v2176
          %v2178 = vrot.slane %v2176, 4
          %v2179 = vrot.slane %v2064, 5
          %v2180 = vsel %vm1101, %v2178, %v2179
          %v2181 = vrot.slane %v2065, 5
          %v2182 = vrot.slane %v2181, 4
          %v2183 = vrot.slane %v2066, 5
          %v2184 = vsel %vm1101, %v2182, %v2183
          %v2185 = vrot.slane %v2183, 4
          %v2186 = vrot.slane %v2067, 5
          %v2187 = vsel %vm1101, %v2185, %v2186
          %v2188 = vrot.slane %v2068, 5
          %v2189 = vrot.slane %v2188, 4
          %v2190 = vrot.slane %v2069, 5
          %v2191 = vsel %vm1101, %v2189, %v2190
          %v2192 = vrot.slane %v2190, 4
          %v2193 = vrot.slane %v2070, 5
          %v2194 = vsel %vm1101, %v2192, %v2193
          %v2195 = vrot.slane %v2071, 5
          %v2196 = vrot.slane %v2195, 4
          %v2197 = vrot.slane %v2072, 5
          %v2198 = vsel %vm1101, %v2196, %v2197
          %v2199 = vrot.slane %v2197, 4
          %v2200 = vrot.slane %v2073, 5
          %v2201 = vsel %vm1101, %v2199, %v2200
          %v2202 = vrot.slane %v2074, 5
          %v2203 = vrot.slane %v2202, 4
          %v2204 = vrot.slane %v2075, 5
          %v2205 = vsel %vm1101, %v2203, %v2204
          %v2206 = vrot.slane %v2204, 4
          %v2207 = vrot.slane %v2076, 5
          %v2208 = vsel %vm1101, %v2206, %v2207
          %v2209 = vrot.slane %v2077, 5
          %v2210 = vrot.slane %v2209, 4
          %v2211 = vrot.slane %v2078, 5
          %v2212 = vsel %vm1101, %v2210, %v2211
          %v2213 = vrot.slane %v2211, 4
          %v2214 = vrot.slane %v2079, 5
          %v2215 = vsel %vm1101, %v2213, %v2214
          %v2216 = vrot.slane %v2080, 5
          %v2217 = vrot.slane %v2216, 4
          %v2218 = vrot.slane %v2081, 5
          %v2219 = vsel %vm1101, %v2217, %v2218
          %v2220 = vrot.slane %v2218, 4
          %v2221 = vrot.slane %v2082, 5
          %v2222 = vsel %vm1101, %v2220, %v2221
          %v2223 = vrot.slane %v2083, 5
          %v2224 = vrot.slane %v2223, 4
          %v2225 = vrot.slane %v2084, 5
          %v2226 = vsel %vm1101, %v2224, %v2225
          %v2227 = vrot.slane %v2225, 4
          %v2228 = vrot.slane %v2085, 5
          %v2229 = vsel %vm1101, %v2227, %v2228
          %v2230 = vrot.slane %v2086, 5
          %v2231 = vrot.slane %v2230, 4
          %v2232 = vrot.slane %v2087, 5
          %v2233 = vsel %vm1101, %v2231, %v2232
          %v2234 = vrot.slane %v2232, 4
          %v2235 = vrot.slane %v2088, 5
          %v2236 = vsel %vm1101, %v2234, %v2235
          %v2237 = vrot.slane %v2089, 5
          %v2238 = vrot.slane %v2237, 4
          %v2239 = vrot.slane %v2090, 5
          %v2240 = vsel %vm1101, %v2238, %v2239
          %v2241 = vrot.slane %v2239, 4
          %v2242 = vrot.slane %v2091, 5
          %v2243 = vsel %vm1101, %v2241, %v2242
          %v2244 = vrot.slane %v2092, 5
          %v2245 = vrot.slane %v2244, 4
          %v2246 = vrot.slane %v2093, 5
          %v2247 = vsel %vm1101, %v2245, %v2246
          %v2248 = vrot.slane %v2246, 4
          %v2249 = vrot.slane %v2094, 5
          %v2250 = vsel %vm1101, %v2248, %v2249
          %v2251 = vrot.slane %v2095, 5
          %v2252 = vrot.slane %v2251, 4
          %v2253 = vrot.slane %v2096, 5
          %v2254 = vsel %vm1101, %v2252, %v2253
          %v2255 = vrot.slane %v2253, 4
          %v2256 = vrot.slane %v2097, 5
          %v2257 = vsel %vm1101, %v2255, %v2256
          %v2258 = vunpack.c.l.b16 %v2149
          %v2259 = vunpack.c.l.b16 %v2152
          %v2260 = vunpack.c.l.b16 %v2156
          %v2261 = vunpack.c.l.b16 %v2159
          %v2262 = vunpack.c.l.b16 %v2163
          %v2263 = vunpack.c.l.b16 %v2166
          %v2264 = vunpack.c.l.b16 %v2170
          %v2265 = vunpack.c.l.b16 %v2173
          %v2266 = vunpack.c.l.b16 %v2177
          %v2267 = vunpack.c.l.b16 %v2180
          %v2268 = vunpack.c.l.b16 %v2184
          %v2269 = vunpack.c.l.b16 %v2187
          %v2270 = vunpack.c.l.b16 %v2191
          %v2271 = vunpack.c.l.b16 %v2194
          %v2272 = vunpack.c.l.b16 %v2198
          %v2273 = vunpack.c.l.b16 %v2201
          %v2274 = vunpack.c.l.b16 %v2205
          %v2275 = vunpack.c.l.b16 %v2208
          %v2276 = vunpack.c.l.b16 %v2212
          %v2277 = vunpack.c.l.b16 %v2215
          %v2278 = vunpack.c.l.b16 %v2219
          %v2279 = vunpack.c.l.b16 %v2222
          %v2280 = vunpack.c.l.b16 %v2226
          %v2281 = vunpack.c.l.b16 %v2229
          %v2282 = vunpack.c.l.b16 %v2233
          %v2283 = vunpack.c.l.b16 %v2236
          %v2284 = vunpack.c.l.b16 %v2240
          %v2285 = vunpack.c.l.b16 %v2243
          %v2286 = vunpack.c.l.b16 %v2247
          %v2287 = vunpack.c.l.b16 %v2250
          %v2288 = vunpack.c.l.b16 %v2254
          %v2289 = vunpack.c.l.b16 %v2257
          %v2290 = vpack.c.b16 %v2259, %v2258
          %v2291 = vpack.c.b16 %v2261, %v2260
          %v2292 = vpack.c.b16 %v2263, %v2262
          %v2293 = vpack.c.b16 %v2265, %v2264
          %v2294 = vpack.c.b16 %v2267, %v2266
          %v2295 = vpack.c.b16 %v2269, %v2268
          %v2296 = vpack.c.b16 %v2271, %v2270
          %v2297 = vpack.c.b16 %v2273, %v2272
          %v2298 = vpack.c.b16 %v2275, %v2274
          %v2299 = vpack.c.b16 %v2277, %v2276
          %v2300 = vpack.c.b16 %v2279, %v2278
          %v2301 = vpack.c.b16 %v2281, %v2280
          %v2302 = vpack.c.b16 %v2283, %v2282
          %v2303 = vpack.c.b16 %v2285, %v2284
          %v2304 = vpack.c.b16 %v2287, %v2286
          %v2305 = vpack.c.b16 %v2289, %v2288
          %2306 = vrot.lane.b32.xlu0 %v2290, 20
          %v2307 = vpop.permute.xlu0 %2306
          %2308 = vrot.lane.b32.xlu0 %v2291, 20
          %v2309 = vpop.permute.xlu0 %2308
          %2310 = vrot.lane.b32.xlu0 %v2292, 20
          %v2311 = vpop.permute.xlu0 %2310
          %2312 = vrot.lane.b32.xlu0 %v2293, 20
          %v2313 = vpop.permute.xlu0 %2312
          %2314 = vrot.lane.b32.xlu0 %v2294, 20
          %v2315 = vpop.permute.xlu0 %2314
          %2316 = vrot.lane.b32.xlu0 %v2295, 20
          %v2317 = vpop.permute.xlu0 %2316
          %2318 = vrot.lane.b32.xlu0 %v2296, 20
          %v2319 = vpop.permute.xlu0 %2318
          %2320 = vrot.lane.b32.xlu0 %v2297, 20
          %v2321 = vpop.permute.xlu0 %2320
          %2322 = vrot.lane.b32.xlu0 %v2298, 20
          %v2323 = vpop.permute.xlu0 %2322
          %2324 = vrot.lane.b32.xlu0 %v2299, 20
          %v2325 = vpop.permute.xlu0 %2324
          %2326 = vrot.lane.b32.xlu0 %v2300, 20
          %v2327 = vpop.permute.xlu0 %2326
          %2328 = vrot.lane.b32.xlu0 %v2301, 20
          %v2329 = vpop.permute.xlu0 %2328
          %2330 = vrot.lane.b32.xlu0 %v2302, 20
          %v2331 = vpop.permute.xlu0 %2330
          %2332 = vrot.lane.b32.xlu0 %v2303, 20
          %v2333 = vpop.permute.xlu0 %2332
          %2334 = vrot.lane.b32.xlu0 %v2304, 20
          %v2335 = vpop.permute.xlu0 %2334
          %2336 = vrot.lane.b32.xlu0 %v2305, 20
          %v2337 = vpop.permute.xlu0 %2336
          %vm2354 = vcmask 195744
          %2355 = vst.msk [vmem:[#allocation2] sm:$0xff] %vm2354, %v2307
          %2356 = vst.msk [vmem:[#allocation2 + $0x8] sm:$0xff] %vm2354, %v2309
          %2357 = vst.msk [vmem:[#allocation2 + $0x10] sm:$0xff] %vm2354, %v2311
          %2358 = vst.msk [vmem:[#allocation2 + $0x18] sm:$0xff] %vm2354, %v2313
          %2359 = vst.msk [vmem:[#allocation2 + $0x20] sm:$0xff] %vm2354, %v2315
          %2360 = vst.msk [vmem:[#allocation2 + $0x28] sm:$0xff] %vm2354, %v2317
          %2361 = vst.msk [vmem:[#allocation2 + $0x30] sm:$0xff] %vm2354, %v2319
          %2362 = vst.msk [vmem:[#allocation2 + $0x38] sm:$0xff] %vm2354, %v2321
          %2363 = vst.msk [vmem:[#allocation2 + $0x40] sm:$0xff] %vm2354, %v2323
          %2364 = vst.msk [vmem:[#allocation2 + $0x48] sm:$0xff] %vm2354, %v2325
          %2365 = vst.msk [vmem:[#allocation2 + $0x50] sm:$0xff] %vm2354, %v2327
          %2366 = vst.msk [vmem:[#allocation2 + $0x58] sm:$0xff] %vm2354, %v2329
          %2367 = vst.msk [vmem:[#allocation2 + $0x60] sm:$0xff] %vm2354, %v2331
          %2368 = vst.msk [vmem:[#allocation2 + $0x68] sm:$0xff] %vm2354, %v2333
          %2369 = vst.msk [vmem:[#allocation2 + $0x70] sm:$0xff] %vm2354, %v2335
          %2370 = vst.msk [vmem:[#allocation2 + $0x78] sm:$0xff] %vm2354, %v2337
          %s2371 = scalar_lea.vmem %s267, 24 [#allocation3]
          %v2372 = vld [vmem:[%s2371] sm:$0xf]
          %v2373 = vld [vmem:[%s2371 + $0x4] sm:$0xf]
          %v2374 = vld [vmem:[%s2371 + $0xc] sm:$0xf]
          %v2375 = vld [vmem:[%s2371 + $0x10] sm:$0xf]
          %v2376 = vld [vmem:[%s2371 + $0x18] sm:$0xf]
          %v2377 = vld [vmem:[%s2371 + $0x1c] sm:$0xf]
          %v2378 = vld [vmem:[%s2371 + $0x24] sm:$0xf]
          %v2379 = vld [vmem:[%s2371 + $0x28] sm:$0xf]
          %v2380 = vld [vmem:[%s2371 + $0x30] sm:$0xf]
          %v2381 = vld [vmem:[%s2371 + $0x34] sm:$0xf]
          %v2382 = vld [vmem:[%s2371 + $0x3c] sm:$0xf]
          %v2383 = vld [vmem:[%s2371 + $0x40] sm:$0xf]
          %v2384 = vld [vmem:[%s2371 + $0x48] sm:$0xf]
          %v2385 = vld [vmem:[%s2371 + $0x4c] sm:$0xf]
          %v2386 = vld [vmem:[%s2371 + $0x54] sm:$0xf]
          %v2387 = vld [vmem:[%s2371 + $0x58] sm:$0xf]
          %v2388 = vld [vmem:[%s2371 + $0x60] sm:$0xf]
          %v2389 = vld [vmem:[%s2371 + $0x64] sm:$0xf]
          %v2390 = vld [vmem:[%s2371 + $0x6c] sm:$0xf]
          %v2391 = vld [vmem:[%s2371 + $0x70] sm:$0xf]
          %v2392 = vld [vmem:[%s2371 + $0x78] sm:$0xf]
          %v2393 = vld [vmem:[%s2371 + $0x7c] sm:$0xf]
          %v2394 = vld [vmem:[%s2371 + $0x84] sm:$0xf]
          %v2395 = vld [vmem:[%s2371 + $0x88] sm:$0xf]
          %v2396 = vld [vmem:[%s2371 + $0x90] sm:$0xf]
          %v2397 = vld [vmem:[%s2371 + $0x94] sm:$0xf]
          %v2398 = vld [vmem:[%s2371 + $0x9c] sm:$0xf]
          %v2399 = vld [vmem:[%s2371 + $0xa0] sm:$0xf]
          %v2400 = vld [vmem:[%s2371 + $0xa8] sm:$0xf]
          %v2401 = vld [vmem:[%s2371 + $0xac] sm:$0xf]
          %v2402 = vld [vmem:[%s2371 + $0xb4] sm:$0xf]
          %v2403 = vld [vmem:[%s2371 + $0xb8] sm:$0xf]
          %v2436 = vunpack.c.l.b16 %v2372
          %v2437 = vunpack.c.l.b16 %v2373
          %v2438 = vunpack.c.l.b16 %v2374
          %v2439 = vunpack.c.l.b16 %v2375
          %v2440 = vunpack.c.l.b16 %v2376
          %v2441 = vunpack.c.l.b16 %v2377
          %v2442 = vunpack.c.l.b16 %v2378
          %v2443 = vunpack.c.l.b16 %v2379
          %v2444 = vunpack.c.l.b16 %v2380
          %v2445 = vunpack.c.l.b16 %v2381
          %v2446 = vunpack.c.l.b16 %v2382
          %v2447 = vunpack.c.l.b16 %v2383
          %v2448 = vunpack.c.l.b16 %v2384
          %v2449 = vunpack.c.l.b16 %v2385
          %v2450 = vunpack.c.l.b16 %v2386
          %v2451 = vunpack.c.l.b16 %v2387
          %v2452 = vunpack.c.l.b16 %v2388
          %v2453 = vunpack.c.l.b16 %v2389
          %v2454 = vunpack.c.l.b16 %v2390
          %v2455 = vunpack.c.l.b16 %v2391
          %v2456 = vunpack.c.l.b16 %v2392
          %v2457 = vunpack.c.l.b16 %v2393
          %v2458 = vunpack.c.l.b16 %v2394
          %v2459 = vunpack.c.l.b16 %v2395
          %v2460 = vunpack.c.l.b16 %v2396
          %v2461 = vunpack.c.l.b16 %v2397
          %v2462 = vunpack.c.l.b16 %v2398
          %v2463 = vunpack.c.l.b16 %v2399
          %v2464 = vunpack.c.l.b16 %v2400
          %v2465 = vunpack.c.l.b16 %v2401
          %v2466 = vunpack.c.l.b16 %v2402
          %v2467 = vunpack.c.l.b16 %v2403
          %v2468 = vpack.c.b16 %v2437, %v2436
          %v2469 = vpack.c.b16 %v2439, %v2438
          %v2470 = vpack.c.b16 %v2441, %v2440
          %v2471 = vpack.c.b16 %v2443, %v2442
          %v2472 = vpack.c.b16 %v2445, %v2444
          %v2473 = vpack.c.b16 %v2447, %v2446
          %v2474 = vpack.c.b16 %v2449, %v2448
          %v2475 = vpack.c.b16 %v2451, %v2450
          %v2476 = vpack.c.b16 %v2453, %v2452
          %v2477 = vpack.c.b16 %v2455, %v2454
          %v2478 = vpack.c.b16 %v2457, %v2456
          %v2479 = vpack.c.b16 %v2459, %v2458
          %v2480 = vpack.c.b16 %v2461, %v2460
          %v2481 = vpack.c.b16 %v2463, %v2462
          %v2482 = vpack.c.b16 %v2465, %v2464
          %v2483 = vpack.c.b16 %v2467, %v2466
          %2484 = vrot.lane.b32.xlu0 %v2468, 24
          %v2485 = vpop.permute.xlu0 %2484
          %2486 = vrot.lane.b32.xlu0 %v2469, 24
          %v2487 = vpop.permute.xlu0 %2486
          %2488 = vrot.lane.b32.xlu0 %v2470, 24
          %v2489 = vpop.permute.xlu0 %2488
          %2490 = vrot.lane.b32.xlu0 %v2471, 24
          %v2491 = vpop.permute.xlu0 %2490
          %2492 = vrot.lane.b32.xlu0 %v2472, 24
          %v2493 = vpop.permute.xlu0 %2492
          %2494 = vrot.lane.b32.xlu0 %v2473, 24
          %v2495 = vpop.permute.xlu0 %2494
          %2496 = vrot.lane.b32.xlu0 %v2474, 24
          %v2497 = vpop.permute.xlu0 %2496
          %2498 = vrot.lane.b32.xlu0 %v2475, 24
          %v2499 = vpop.permute.xlu0 %2498
          %2500 = vrot.lane.b32.xlu0 %v2476, 24
          %v2501 = vpop.permute.xlu0 %2500
          %2502 = vrot.lane.b32.xlu0 %v2477, 24
          %v2503 = vpop.permute.xlu0 %2502
          %2504 = vrot.lane.b32.xlu0 %v2478, 24
          %v2505 = vpop.permute.xlu0 %2504
          %2506 = vrot.lane.b32.xlu0 %v2479, 24
          %v2507 = vpop.permute.xlu0 %2506
          %2508 = vrot.lane.b32.xlu0 %v2480, 24
          %v2509 = vpop.permute.xlu0 %2508
          %2510 = vrot.lane.b32.xlu0 %v2481, 24
          %v2511 = vpop.permute.xlu0 %2510
          %2512 = vrot.lane.b32.xlu0 %v2482, 24
          %v2513 = vpop.permute.xlu0 %2512
          %2514 = vrot.lane.b32.xlu0 %v2483, 24
          %v2515 = vpop.permute.xlu0 %2514
          %vm2532 = vcmask 228544
          %2533 = vst.msk [vmem:[#allocation2] sm:$0xff] %vm2532, %v2485
          %2534 = vst.msk [vmem:[#allocation2 + $0x8] sm:$0xff] %vm2532, %v2487
          %2535 = vst.msk [vmem:[#allocation2 + $0x10] sm:$0xff] %vm2532, %v2489
          %2536 = vst.msk [vmem:[#allocation2 + $0x18] sm:$0xff] %vm2532, %v2491
          %2537 = vst.msk [vmem:[#allocation2 + $0x20] sm:$0xff] %vm2532, %v2493
          %2538 = vst.msk [vmem:[#allocation2 + $0x28] sm:$0xff] %vm2532, %v2495
          %2539 = vst.msk [vmem:[#allocation2 + $0x30] sm:$0xff] %vm2532, %v2497
          %2540 = vst.msk [vmem:[#allocation2 + $0x38] sm:$0xff] %vm2532, %v2499
          %2541 = vst.msk [vmem:[#allocation2 + $0x40] sm:$0xff] %vm2532, %v2501
          %2542 = vst.msk [vmem:[#allocation2 + $0x48] sm:$0xff] %vm2532, %v2503
          %2543 = vst.msk [vmem:[#allocation2 + $0x50] sm:$0xff] %vm2532, %v2505
          %2544 = vst.msk [vmem:[#allocation2 + $0x58] sm:$0xff] %vm2532, %v2507
          %2545 = vst.msk [vmem:[#allocation2 + $0x60] sm:$0xff] %vm2532, %v2509
          %2546 = vst.msk [vmem:[#allocation2 + $0x68] sm:$0xff] %vm2532, %v2511
          %2547 = vst.msk [vmem:[#allocation2 + $0x70] sm:$0xff] %vm2532, %v2513
          %2548 = vst.msk [vmem:[#allocation2 + $0x78] sm:$0xff] %vm2532, %v2515
          %v2549 = vld [vmem:[%s2371] sm:$0xf]
          %v2550 = vld [vmem:[%s2371 + $0x4] sm:$0xf]
          %v2551 = vld [vmem:[%s2371 + $0x8] sm:$0x1]
          %v2552 = vld [vmem:[%s2371 + $0xc] sm:$0xf]
          %v2553 = vld [vmem:[%s2371 + $0x10] sm:$0xf]
          %v2554 = vld [vmem:[%s2371 + $0x14] sm:$0x1]
          %v2555 = vld [vmem:[%s2371 + $0x18] sm:$0xf]
          %v2556 = vld [vmem:[%s2371 + $0x1c] sm:$0xf]
          %v2557 = vld [vmem:[%s2371 + $0x20] sm:$0x1]
          %v2558 = vld [vmem:[%s2371 + $0x24] sm:$0xf]
          %v2559 = vld [vmem:[%s2371 + $0x28] sm:$0xf]
          %v2560 = vld [vmem:[%s2371 + $0x2c] sm:$0x1]
          %v2561 = vld [vmem:[%s2371 + $0x30] sm:$0xf]
          %v2562 = vld [vmem:[%s2371 + $0x34] sm:$0xf]
          %v2563 = vld [vmem:[%s2371 + $0x38] sm:$0x1]
          %v2564 = vld [vmem:[%s2371 + $0x3c] sm:$0xf]
          %v2565 = vld [vmem:[%s2371 + $0x40] sm:$0xf]
          %v2566 = vld [vmem:[%s2371 + $0x44] sm:$0x1]
          %v2567 = vld [vmem:[%s2371 + $0x48] sm:$0xf]
          %v2568 = vld [vmem:[%s2371 + $0x4c] sm:$0xf]
          %v2569 = vld [vmem:[%s2371 + $0x50] sm:$0x1]
          %v2570 = vld [vmem:[%s2371 + $0x54] sm:$0xf]
          %v2571 = vld [vmem:[%s2371 + $0x58] sm:$0xf]
          %v2572 = vld [vmem:[%s2371 + $0x5c] sm:$0x1]
          %v2573 = vld [vmem:[%s2371 + $0x60] sm:$0xf]
          %v2574 = vld [vmem:[%s2371 + $0x64] sm:$0xf]
          %v2575 = vld [vmem:[%s2371 + $0x68] sm:$0x1]
          %v2576 = vld [vmem:[%s2371 + $0x6c] sm:$0xf]
          %v2577 = vld [vmem:[%s2371 + $0x70] sm:$0xf]
          %v2578 = vld [vmem:[%s2371 + $0x74] sm:$0x1]
          %v2579 = vld [vmem:[%s2371 + $0x78] sm:$0xf]
          %v2580 = vld [vmem:[%s2371 + $0x7c] sm:$0xf]
          %v2581 = vld [vmem:[%s2371 + $0x80] sm:$0x1]
          %v2582 = vld [vmem:[%s2371 + $0x84] sm:$0xf]
          %v2583 = vld [vmem:[%s2371 + $0x88] sm:$0xf]
          %v2584 = vld [vmem:[%s2371 + $0x8c] sm:$0x1]
          %v2585 = vld [vmem:[%s2371 + $0x90] sm:$0xf]
          %v2586 = vld [vmem:[%s2371 + $0x94] sm:$0xf]
          %v2587 = vld [vmem:[%s2371 + $0x98] sm:$0x1]
          %v2588 = vld [vmem:[%s2371 + $0x9c] sm:$0xf]
          %v2589 = vld [vmem:[%s2371 + $0xa0] sm:$0xf]
          %v2590 = vld [vmem:[%s2371 + $0xa4] sm:$0x1]
          %v2591 = vld [vmem:[%s2371 + $0xa8] sm:$0xf]
          %v2592 = vld [vmem:[%s2371 + $0xac] sm:$0xf]
          %v2593 = vld [vmem:[%s2371 + $0xb0] sm:$0x1]
          %v2594 = vld [vmem:[%s2371 + $0xb4] sm:$0xf]
          %v2595 = vld [vmem:[%s2371 + $0xb8] sm:$0xf]
          %v2596 = vld [vmem:[%s2371 + $0xbc] sm:$0x1]
          %v2598 = vshrl.u32 %v2549, 16
          %v2600 = vrot.slane %v2598, 4
          %v2601 = vshll.u32 %v2549, 16
          %v2603 = vrot.slane %v2601, 5
          %v2604 = vor.u32 %v2600, %v2603
          %v2605 = vrot.slane %v2604, 4
          %v2607 = vshll.u32 %v2550, 16
          %v2609 = vrot.slane %v2607, 5
          %v2610 = vsel %vm505, %v2605, %v2609
          %v2611 = vshrl.u32 %v2550, 16
          %v2613 = vrot.slane %v2611, 4
          %v2614 = vor.u32 %v2613, %v2609
          %v2615 = vrot.slane %v2614, 4
          %v2617 = vshll.u32 %v2551, 16
          %v2619 = vrot.slane %v2617, 5
          %v2620 = vsel %vm505, %v2615, %v2619
          %v2622 = vshrl.u32 %v2552, 16
          %v2624 = vrot.slane %v2622, 4
          %v2625 = vshll.u32 %v2552, 16
          %v2627 = vrot.slane %v2625, 5
          %v2628 = vor.u32 %v2624, %v2627
          %v2629 = vrot.slane %v2628, 4
          %v2631 = vshll.u32 %v2553, 16
          %v2633 = vrot.slane %v2631, 5
          %v2634 = vsel %vm505, %v2629, %v2633
          %v2635 = vshrl.u32 %v2553, 16
          %v2637 = vrot.slane %v2635, 4
          %v2638 = vor.u32 %v2637, %v2633
          %v2639 = vrot.slane %v2638, 4
          %v2641 = vshll.u32 %v2554, 16
          %v2643 = vrot.slane %v2641, 5
          %v2644 = vsel %vm505, %v2639, %v2643
          %v2646 = vshrl.u32 %v2555, 16
          %v2648 = vrot.slane %v2646, 4
          %v2649 = vshll.u32 %v2555, 16
          %v2651 = vrot.slane %v2649, 5
          %v2652 = vor.u32 %v2648, %v2651
          %v2653 = vrot.slane %v2652, 4
          %v2655 = vshll.u32 %v2556, 16
          %v2657 = vrot.slane %v2655, 5
          %v2658 = vsel %vm505, %v2653, %v2657
          %v2659 = vshrl.u32 %v2556, 16
          %v2661 = vrot.slane %v2659, 4
          %v2662 = vor.u32 %v2661, %v2657
          %v2663 = vrot.slane %v2662, 4
          %v2665 = vshll.u32 %v2557, 16
          %v2667 = vrot.slane %v2665, 5
          %v2668 = vsel %vm505, %v2663, %v2667
          %v2670 = vshrl.u32 %v2558, 16
          %v2672 = vrot.slane %v2670, 4
          %v2673 = vshll.u32 %v2558, 16
          %v2675 = vrot.slane %v2673, 5
          %v2676 = vor.u32 %v2672, %v2675
          %v2677 = vrot.slane %v2676, 4
          %v2679 = vshll.u32 %v2559, 16
          %v2681 = vrot.slane %v2679, 5
          %v2682 = vsel %vm505, %v2677, %v2681
          %v2683 = vshrl.u32 %v2559, 16
          %v2685 = vrot.slane %v2683, 4
          %v2686 = vor.u32 %v2685, %v2681
          %v2687 = vrot.slane %v2686, 4
          %v2689 = vshll.u32 %v2560, 16
          %v2691 = vrot.slane %v2689, 5
          %v2692 = vsel %vm505, %v2687, %v2691
          %v2694 = vshrl.u32 %v2561, 16
          %v2696 = vrot.slane %v2694, 4
          %v2697 = vshll.u32 %v2561, 16
          %v2699 = vrot.slane %v2697, 5
          %v2700 = vor.u32 %v2696, %v2699
          %v2701 = vrot.slane %v2700, 4
          %v2703 = vshll.u32 %v2562, 16
          %v2705 = vrot.slane %v2703, 5
          %v2706 = vsel %vm505, %v2701, %v2705
          %v2707 = vshrl.u32 %v2562, 16
          %v2709 = vrot.slane %v2707, 4
          %v2710 = vor.u32 %v2709, %v2705
          %v2711 = vrot.slane %v2710, 4
          %v2713 = vshll.u32 %v2563, 16
          %v2715 = vrot.slane %v2713, 5
          %v2716 = vsel %vm505, %v2711, %v2715
          %v2718 = vshrl.u32 %v2564, 16
          %v2720 = vrot.slane %v2718, 4
          %v2721 = vshll.u32 %v2564, 16
          %v2723 = vrot.slane %v2721, 5
          %v2724 = vor.u32 %v2720, %v2723
          %v2725 = vrot.slane %v2724, 4
          %v2727 = vshll.u32 %v2565, 16
          %v2729 = vrot.slane %v2727, 5
          %v2730 = vsel %vm505, %v2725, %v2729
          %v2731 = vshrl.u32 %v2565, 16
          %v2733 = vrot.slane %v2731, 4
          %v2734 = vor.u32 %v2733, %v2729
          %v2735 = vrot.slane %v2734, 4
          %v2737 = vshll.u32 %v2566, 16
          %v2739 = vrot.slane %v2737, 5
          %v2740 = vsel %vm505, %v2735, %v2739
          %v2742 = vshrl.u32 %v2567, 16
          %v2744 = vrot.slane %v2742, 4
          %v2745 = vshll.u32 %v2567, 16
          %v2747 = vrot.slane %v2745, 5
          %v2748 = vor.u32 %v2744, %v2747
          %v2749 = vrot.slane %v2748, 4
          %v2751 = vshll.u32 %v2568, 16
          %v2753 = vrot.slane %v2751, 5
          %v2754 = vsel %vm505, %v2749, %v2753
          %v2755 = vshrl.u32 %v2568, 16
          %v2757 = vrot.slane %v2755, 4
          %v2758 = vor.u32 %v2757, %v2753
          %v2759 = vrot.slane %v2758, 4
          %v2761 = vshll.u32 %v2569, 16
          %v2763 = vrot.slane %v2761, 5
          %v2764 = vsel %vm505, %v2759, %v2763
          %v2766 = vshrl.u32 %v2570, 16
          %v2768 = vrot.slane %v2766, 4
          %v2769 = vshll.u32 %v2570, 16
          %v2771 = vrot.slane %v2769, 5
          %v2772 = vor.u32 %v2768, %v2771
          %v2773 = vrot.slane %v2772, 4
          %v2775 = vshll.u32 %v2571, 16
          %v2777 = vrot.slane %v2775, 5
          %v2778 = vsel %vm505, %v2773, %v2777
          %v2779 = vshrl.u32 %v2571, 16
          %v2781 = vrot.slane %v2779, 4
          %v2782 = vor.u32 %v2781, %v2777
          %v2783 = vrot.slane %v2782, 4
          %v2785 = vshll.u32 %v2572, 16
          %v2787 = vrot.slane %v2785, 5
          %v2788 = vsel %vm505, %v2783, %v2787
          %v2790 = vshrl.u32 %v2573, 16
          %v2792 = vrot.slane %v2790, 4
          %v2793 = vshll.u32 %v2573, 16
          %v2795 = vrot.slane %v2793, 5
          %v2796 = vor.u32 %v2792, %v2795
          %v2797 = vrot.slane %v2796, 4
          %v2799 = vshll.u32 %v2574, 16
          %v2801 = vrot.slane %v2799, 5
          %v2802 = vsel %vm505, %v2797, %v2801
          %v2803 = vshrl.u32 %v2574, 16
          %v2805 = vrot.slane %v2803, 4
          %v2806 = vor.u32 %v2805, %v2801
          %v2807 = vrot.slane %v2806, 4
          %v2809 = vshll.u32 %v2575, 16
          %v2811 = vrot.slane %v2809, 5
          %v2812 = vsel %vm505, %v2807, %v2811
          %v2814 = vshrl.u32 %v2576, 16
          %v2816 = vrot.slane %v2814, 4
          %v2817 = vshll.u32 %v2576, 16
          %v2819 = vrot.slane %v2817, 5
          %v2820 = vor.u32 %v2816, %v2819
          %v2821 = vrot.slane %v2820, 4
          %v2823 = vshll.u32 %v2577, 16
          %v2825 = vrot.slane %v2823, 5
          %v2826 = vsel %vm505, %v2821, %v2825
          %v2827 = vshrl.u32 %v2577, 16
          %v2829 = vrot.slane %v2827, 4
          %v2830 = vor.u32 %v2829, %v2825
          %v2831 = vrot.slane %v2830, 4
          %v2833 = vshll.u32 %v2578, 16
          %v2835 = vrot.slane %v2833, 5
          %v2836 = vsel %vm505, %v2831, %v2835
          %v2838 = vshrl.u32 %v2579, 16
          %v2840 = vrot.slane %v2838, 4
          %v2841 = vshll.u32 %v2579, 16
          %v2843 = vrot.slane %v2841, 5
          %v2844 = vor.u32 %v2840, %v2843
          %v2845 = vrot.slane %v2844, 4
          %v2847 = vshll.u32 %v2580, 16
          %v2849 = vrot.slane %v2847, 5
          %v2850 = vsel %vm505, %v2845, %v2849
          %v2851 = vshrl.u32 %v2580, 16
          %v2853 = vrot.slane %v2851, 4
          %v2854 = vor.u32 %v2853, %v2849
          %v2855 = vrot.slane %v2854, 4
          %v2857 = vshll.u32 %v2581, 16
          %v2859 = vrot.slane %v2857, 5
          %v2860 = vsel %vm505, %v2855, %v2859
          %v2862 = vshrl.u32 %v2582, 16
          %v2864 = vrot.slane %v2862, 4
          %v2865 = vshll.u32 %v2582, 16
          %v2867 = vrot.slane %v2865, 5
          %v2868 = vor.u32 %v2864, %v2867
          %v2869 = vrot.slane %v2868, 4
          %v2871 = vshll.u32 %v2583, 16
          %v2873 = vrot.slane %v2871, 5
          %v2874 = vsel %vm505, %v2869, %v2873
          %v2875 = vshrl.u32 %v2583, 16
          %v2877 = vrot.slane %v2875, 4
          %v2878 = vor.u32 %v2877, %v2873
          %v2879 = vrot.slane %v2878, 4
          %v2881 = vshll.u32 %v2584, 16
          %v2883 = vrot.slane %v2881, 5
          %v2884 = vsel %vm505, %v2879, %v2883
          %v2886 = vshrl.u32 %v2585, 16
          %v2888 = vrot.slane %v2886, 4
          %v2889 = vshll.u32 %v2585, 16
          %v2891 = vrot.slane %v2889, 5
          %v2892 = vor.u32 %v2888, %v2891
          %v2893 = vrot.slane %v2892, 4
          %v2895 = vshll.u32 %v2586, 16
          %v2897 = vrot.slane %v2895, 5
          %v2898 = vsel %vm505, %v2893, %v2897
          %v2899 = vshrl.u32 %v2586, 16
          %v2901 = vrot.slane %v2899, 4
          %v2902 = vor.u32 %v2901, %v2897
          %v2903 = vrot.slane %v2902, 4
          %v2905 = vshll.u32 %v2587, 16
          %v2907 = vrot.slane %v2905, 5
          %v2908 = vsel %vm505, %v2903, %v2907
          %v2910 = vshrl.u32 %v2588, 16
          %v2912 = vrot.slane %v2910, 4
          %v2913 = vshll.u32 %v2588, 16
          %v2915 = vrot.slane %v2913, 5
          %v2916 = vor.u32 %v2912, %v2915
          %v2917 = vrot.slane %v2916, 4
          %v2919 = vshll.u32 %v2589, 16
          %v2921 = vrot.slane %v2919, 5
          %v2922 = vsel %vm505, %v2917, %v2921
          %v2923 = vshrl.u32 %v2589, 16
          %v2925 = vrot.slane %v2923, 4
          %v2926 = vor.u32 %v2925, %v2921
          %v2927 = vrot.slane %v2926, 4
          %v2929 = vshll.u32 %v2590, 16
          %v2931 = vrot.slane %v2929, 5
          %v2932 = vsel %vm505, %v2927, %v2931
          %v2934 = vshrl.u32 %v2591, 16
          %v2936 = vrot.slane %v2934, 4
          %v2937 = vshll.u32 %v2591, 16
          %v2939 = vrot.slane %v2937, 5
          %v2940 = vor.u32 %v2936, %v2939
          %v2941 = vrot.slane %v2940, 4
          %v2943 = vshll.u32 %v2592, 16
          %v2945 = vrot.slane %v2943, 5
          %v2946 = vsel %vm505, %v2941, %v2945
          %v2947 = vshrl.u32 %v2592, 16
          %v2949 = vrot.slane %v2947, 4
          %v2950 = vor.u32 %v2949, %v2945
          %v2951 = vrot.slane %v2950, 4
          %v2953 = vshll.u32 %v2593, 16
          %v2955 = vrot.slane %v2953, 5
          %v2956 = vsel %vm505, %v2951, %v2955
          %v2958 = vshrl.u32 %v2594, 16
          %v2960 = vrot.slane %v2958, 4
          %v2961 = vshll.u32 %v2594, 16
          %v2963 = vrot.slane %v2961, 5
          %v2964 = vor.u32 %v2960, %v2963
          %v2965 = vrot.slane %v2964, 4
          %v2967 = vshll.u32 %v2595, 16
          %v2969 = vrot.slane %v2967, 5
          %v2970 = vsel %vm505, %v2965, %v2969
          %v2971 = vshrl.u32 %v2595, 16
          %v2973 = vrot.slane %v2971, 4
          %v2974 = vor.u32 %v2973, %v2969
          %v2975 = vrot.slane %v2974, 4
          %v2977 = vshll.u32 %v2596, 16
          %v2979 = vrot.slane %v2977, 5
          %v2980 = vsel %vm505, %v2975, %v2979
          %v2981 = vunpack.c.l.b16 %v2610
          %v2982 = vunpack.c.l.b16 %v2620
          %v2983 = vunpack.c.l.b16 %v2634
          %v2984 = vunpack.c.l.b16 %v2644
          %v2985 = vunpack.c.l.b16 %v2658
          %v2986 = vunpack.c.l.b16 %v2668
          %v2987 = vunpack.c.l.b16 %v2682
          %v2988 = vunpack.c.l.b16 %v2692
          %v2989 = vunpack.c.l.b16 %v2706
          %v2990 = vunpack.c.l.b16 %v2716
          %v2991 = vunpack.c.l.b16 %v2730
          %v2992 = vunpack.c.l.b16 %v2740
          %v2993 = vunpack.c.l.b16 %v2754
          %v2994 = vunpack.c.l.b16 %v2764
          %v2995 = vunpack.c.l.b16 %v2778
          %v2996 = vunpack.c.l.b16 %v2788
          %v2997 = vunpack.c.l.b16 %v2802
          %v2998 = vunpack.c.l.b16 %v2812
          %v2999 = vunpack.c.l.b16 %v2826
          %v3000 = vunpack.c.l.b16 %v2836
          %v3001 = vunpack.c.l.b16 %v2850
          %v3002 = vunpack.c.l.b16 %v2860
          %v3003 = vunpack.c.l.b16 %v2874
          %v3004 = vunpack.c.l.b16 %v2884
          %v3005 = vunpack.c.l.b16 %v2898
          %v3006 = vunpack.c.l.b16 %v2908
          %v3007 = vunpack.c.l.b16 %v2922
          %v3008 = vunpack.c.l.b16 %v2932
          %v3009 = vunpack.c.l.b16 %v2946
          %v3010 = vunpack.c.l.b16 %v2956
          %v3011 = vunpack.c.l.b16 %v2970
          %v3012 = vunpack.c.l.b16 %v2980
          %v3013 = vpack.c.b16 %v2982, %v2981
          %v3014 = vpack.c.b16 %v2984, %v2983
          %v3015 = vpack.c.b16 %v2986, %v2985
          %v3016 = vpack.c.b16 %v2988, %v2987
          %v3017 = vpack.c.b16 %v2990, %v2989
          %v3018 = vpack.c.b16 %v2992, %v2991
          %v3019 = vpack.c.b16 %v2994, %v2993
          %v3020 = vpack.c.b16 %v2996, %v2995
          %v3021 = vpack.c.b16 %v2998, %v2997
          %v3022 = vpack.c.b16 %v3000, %v2999
          %v3023 = vpack.c.b16 %v3002, %v3001
          %v3024 = vpack.c.b16 %v3004, %v3003
          %v3025 = vpack.c.b16 %v3006, %v3005
          %v3026 = vpack.c.b16 %v3008, %v3007
          %v3027 = vpack.c.b16 %v3010, %v3009
          %v3028 = vpack.c.b16 %v3012, %v3011
          %3029 = vrot.lane.b32.xlu0 %v3013, 28
          %v3030 = vpop.permute.xlu0 %3029
          %3031 = vrot.lane.b32.xlu0 %v3014, 28
          %v3032 = vpop.permute.xlu0 %3031
          %3033 = vrot.lane.b32.xlu0 %v3015, 28
          %v3034 = vpop.permute.xlu0 %3033
          %3035 = vrot.lane.b32.xlu0 %v3016, 28
          %v3036 = vpop.permute.xlu0 %3035
          %3037 = vrot.lane.b32.xlu0 %v3017, 28
          %v3038 = vpop.permute.xlu0 %3037
          %3039 = vrot.lane.b32.xlu0 %v3018, 28
          %v3040 = vpop.permute.xlu0 %3039
          %3041 = vrot.lane.b32.xlu0 %v3019, 28
          %v3042 = vpop.permute.xlu0 %3041
          %3043 = vrot.lane.b32.xlu0 %v3020, 28
          %v3044 = vpop.permute.xlu0 %3043
          %3045 = vrot.lane.b32.xlu0 %v3021, 28
          %v3046 = vpop.permute.xlu0 %3045
          %3047 = vrot.lane.b32.xlu0 %v3022, 28
          %v3048 = vpop.permute.xlu0 %3047
          %3049 = vrot.lane.b32.xlu0 %v3023, 28
          %v3050 = vpop.permute.xlu0 %3049
          %3051 = vrot.lane.b32.xlu0 %v3024, 28
          %v3052 = vpop.permute.xlu0 %3051
          %3053 = vrot.lane.b32.xlu0 %v3025, 28
          %v3054 = vpop.permute.xlu0 %3053
          %3055 = vrot.lane.b32.xlu0 %v3026, 28
          %v3056 = vpop.permute.xlu0 %3055
          %3057 = vrot.lane.b32.xlu0 %v3027, 28
          %v3058 = vpop.permute.xlu0 %3057
          %3059 = vrot.lane.b32.xlu0 %v3028, 28
          %v3060 = vpop.permute.xlu0 %3059
          %vm3077 = vcmask 261344
          %3078 = vst.msk [vmem:[#allocation2] sm:$0xff] %vm3077, %v3030
          %3079 = vst.msk [vmem:[#allocation2 + $0x8] sm:$0xff] %vm3077, %v3032
          %3080 = vst.msk [vmem:[#allocation2 + $0x10] sm:$0xff] %vm3077, %v3034
          %3081 = vst.msk [vmem:[#allocation2 + $0x18] sm:$0xff] %vm3077, %v3036
          %3082 = vst.msk [vmem:[#allocation2 + $0x20] sm:$0xff] %vm3077, %v3038
          %3083 = vst.msk [vmem:[#allocation2 + $0x28] sm:$0xff] %vm3077, %v3040
          %3084 = vst.msk [vmem:[#allocation2 + $0x30] sm:$0xff] %vm3077, %v3042
          %3085 = vst.msk [vmem:[#allocation2 + $0x38] sm:$0xff] %vm3077, %v3044
          %3086 = vst.msk [vmem:[#allocation2 + $0x40] sm:$0xff] %vm3077, %v3046
          %3087 = vst.msk [vmem:[#allocation2 + $0x48] sm:$0xff] %vm3077, %v3048
          %3088 = vst.msk [vmem:[#allocation2 + $0x50] sm:$0xff] %vm3077, %v3050
          %3089 = vst.msk [vmem:[#allocation2 + $0x58] sm:$0xff] %vm3077, %v3052
          %3090 = vst.msk [vmem:[#allocation2 + $0x60] sm:$0xff] %vm3077, %v3054
          %3091 = vst.msk [vmem:[#allocation2 + $0x68] sm:$0xff] %vm3077, %v3056
          %3092 = vst.msk [vmem:[#allocation2 + $0x70] sm:$0xff] %vm3077, %v3058
          %3093 = vst.msk [vmem:[#allocation2 + $0x78] sm:$0xff] %vm3077, %v3060
          %v3094 = vld [vmem:[%s2371] sm:$0xe]
          %v3095 = vld [vmem:[%s2371 + $0x4] sm:$0xf]
          %v3096 = vld [vmem:[%s2371 + $0x8] sm:$0x1]
          %v3097 = vld [vmem:[%s2371 + $0xc] sm:$0xe]
          %v3098 = vld [vmem:[%s2371 + $0x10] sm:$0xf]
          %v3099 = vld [vmem:[%s2371 + $0x14] sm:$0x1]
          %v3100 = vld [vmem:[%s2371 + $0x18] sm:$0xe]
          %v3101 = vld [vmem:[%s2371 + $0x1c] sm:$0xf]
          %v3102 = vld [vmem:[%s2371 + $0x20] sm:$0x1]
          %v3103 = vld [vmem:[%s2371 + $0x24] sm:$0xe]
          %v3104 = vld [vmem:[%s2371 + $0x28] sm:$0xf]
          %v3105 = vld [vmem:[%s2371 + $0x2c] sm:$0x1]
          %v3106 = vld [vmem:[%s2371 + $0x30] sm:$0xe]
          %v3107 = vld [vmem:[%s2371 + $0x34] sm:$0xf]
          %v3108 = vld [vmem:[%s2371 + $0x38] sm:$0x1]
          %v3109 = vld [vmem:[%s2371 + $0x3c] sm:$0xe]
          %v3110 = vld [vmem:[%s2371 + $0x40] sm:$0xf]
          %v3111 = vld [vmem:[%s2371 + $0x44] sm:$0x1]
          %v3112 = vld [vmem:[%s2371 + $0x48] sm:$0xe]
          %v3113 = vld [vmem:[%s2371 + $0x4c] sm:$0xf]
          %v3114 = vld [vmem:[%s2371 + $0x50] sm:$0x1]
          %v3115 = vld [vmem:[%s2371 + $0x54] sm:$0xe]
          %v3116 = vld [vmem:[%s2371 + $0x58] sm:$0xf]
          %v3117 = vld [vmem:[%s2371 + $0x5c] sm:$0x1]
          %v3118 = vld [vmem:[%s2371 + $0x60] sm:$0xe]
          %v3119 = vld [vmem:[%s2371 + $0x64] sm:$0xf]
          %v3120 = vld [vmem:[%s2371 + $0x68] sm:$0x1]
          %v3121 = vld [vmem:[%s2371 + $0x6c] sm:$0xe]
          %v3122 = vld [vmem:[%s2371 + $0x70] sm:$0xf]
          %v3123 = vld [vmem:[%s2371 + $0x74] sm:$0x1]
          %v3124 = vld [vmem:[%s2371 + $0x78] sm:$0xe]
          %v3125 = vld [vmem:[%s2371 + $0x7c] sm:$0xf]
          %v3126 = vld [vmem:[%s2371 + $0x80] sm:$0x1]
          %v3127 = vld [vmem:[%s2371 + $0x84] sm:$0xe]
          %v3128 = vld [vmem:[%s2371 + $0x88] sm:$0xf]
          %v3129 = vld [vmem:[%s2371 + $0x8c] sm:$0x1]
          %v3130 = vld [vmem:[%s2371 + $0x90] sm:$0xe]
          %v3131 = vld [vmem:[%s2371 + $0x94] sm:$0xf]
          %v3132 = vld [vmem:[%s2371 + $0x98] sm:$0x1]
          %v3133 = vld [vmem:[%s2371 + $0x9c] sm:$0xe]
          %v3134 = vld [vmem:[%s2371 + $0xa0] sm:$0xf]
          %v3135 = vld [vmem:[%s2371 + $0xa4] sm:$0x1]
          %v3136 = vld [vmem:[%s2371 + $0xa8] sm:$0xe]
          %v3137 = vld [vmem:[%s2371 + $0xac] sm:$0xf]
          %v3138 = vld [vmem:[%s2371 + $0xb0] sm:$0x1]
          %v3139 = vld [vmem:[%s2371 + $0xb4] sm:$0xe]
          %v3140 = vld [vmem:[%s2371 + $0xb8] sm:$0xf]
          %v3141 = vld [vmem:[%s2371 + $0xbc] sm:$0x1]
          %v3190 = vrot.slane %v3094, 5
          %v3191 = vrot.slane %v3190, 4
          %v3192 = vrot.slane %v3095, 5
          %v3193 = vsel %vm1101, %v3191, %v3192
          %v3194 = vrot.slane %v3192, 4
          %v3195 = vrot.slane %v3096, 5
          %v3196 = vsel %vm1101, %v3194, %v3195
          %v3197 = vrot.slane %v3097, 5
          %v3198 = vrot.slane %v3197, 4
          %v3199 = vrot.slane %v3098, 5
          %v3200 = vsel %vm1101, %v3198, %v3199
          %v3201 = vrot.slane %v3199, 4
          %v3202 = vrot.slane %v3099, 5
          %v3203 = vsel %vm1101, %v3201, %v3202
          %v3204 = vrot.slane %v3100, 5
          %v3205 = vrot.slane %v3204, 4
          %v3206 = vrot.slane %v3101, 5
          %v3207 = vsel %vm1101, %v3205, %v3206
          %v3208 = vrot.slane %v3206, 4
          %v3209 = vrot.slane %v3102, 5
          %v3210 = vsel %vm1101, %v3208, %v3209
          %v3211 = vrot.slane %v3103, 5
          %v3212 = vrot.slane %v3211, 4
          %v3213 = vrot.slane %v3104, 5
          %v3214 = vsel %vm1101, %v3212, %v3213
          %v3215 = vrot.slane %v3213, 4
          %v3216 = vrot.slane %v3105, 5
          %v3217 = vsel %vm1101, %v3215, %v3216
          %v3218 = vrot.slane %v3106, 5
          %v3219 = vrot.slane %v3218, 4
          %v3220 = vrot.slane %v3107, 5
          %v3221 = vsel %vm1101, %v3219, %v3220
          %v3222 = vrot.slane %v3220, 4
          %v3223 = vrot.slane %v3108, 5
          %v3224 = vsel %vm1101, %v3222, %v3223
          %v3225 = vrot.slane %v3109, 5
          %v3226 = vrot.slane %v3225, 4
          %v3227 = vrot.slane %v3110, 5
          %v3228 = vsel %vm1101, %v3226, %v3227
          %v3229 = vrot.slane %v3227, 4
          %v3230 = vrot.slane %v3111, 5
          %v3231 = vsel %vm1101, %v3229, %v3230
          %v3232 = vrot.slane %v3112, 5
          %v3233 = vrot.slane %v3232, 4
          %v3234 = vrot.slane %v3113, 5
          %v3235 = vsel %vm1101, %v3233, %v3234
          %v3236 = vrot.slane %v3234, 4
          %v3237 = vrot.slane %v3114, 5
          %v3238 = vsel %vm1101, %v3236, %v3237
          %v3239 = vrot.slane %v3115, 5
          %v3240 = vrot.slane %v3239, 4
          %v3241 = vrot.slane %v3116, 5
          %v3242 = vsel %vm1101, %v3240, %v3241
          %v3243 = vrot.slane %v3241, 4
          %v3244 = vrot.slane %v3117, 5
          %v3245 = vsel %vm1101, %v3243, %v3244
          %v3246 = vrot.slane %v3118, 5
          %v3247 = vrot.slane %v3246, 4
          %v3248 = vrot.slane %v3119, 5
          %v3249 = vsel %vm1101, %v3247, %v3248
          %v3250 = vrot.slane %v3248, 4
          %v3251 = vrot.slane %v3120, 5
          %v3252 = vsel %vm1101, %v3250, %v3251
          %v3253 = vrot.slane %v3121, 5
          %v3254 = vrot.slane %v3253, 4
          %v3255 = vrot.slane %v3122, 5
          %v3256 = vsel %vm1101, %v3254, %v3255
          %v3257 = vrot.slane %v3255, 4
          %v3258 = vrot.slane %v3123, 5
          %v3259 = vsel %vm1101, %v3257, %v3258
          %v3260 = vrot.slane %v3124, 5
          %v3261 = vrot.slane %v3260, 4
          %v3262 = vrot.slane %v3125, 5
          %v3263 = vsel %vm1101, %v3261, %v3262
          %v3264 = vrot.slane %v3262, 4
          %v3265 = vrot.slane %v3126, 5
          %v3266 = vsel %vm1101, %v3264, %v3265
          %v3267 = vrot.slane %v3127, 5
          %v3268 = vrot.slane %v3267, 4
          %v3269 = vrot.slane %v3128, 5
          %v3270 = vsel %vm1101, %v3268, %v3269
          %v3271 = vrot.slane %v3269, 4
          %v3272 = vrot.slane %v3129, 5
          %v3273 = vsel %vm1101, %v3271, %v3272
          %v3274 = vrot.slane %v3130, 5
          %v3275 = vrot.slane %v3274, 4
          %v3276 = vrot.slane %v3131, 5
          %v3277 = vsel %vm1101, %v3275, %v3276
          %v3278 = vrot.slane %v3276, 4
          %v3279 = vrot.slane %v3132, 5
          %v3280 = vsel %vm1101, %v3278, %v3279
          %v3281 = vrot.slane %v3133, 5
          %v3282 = vrot.slane %v3281, 4
          %v3283 = vrot.slane %v3134, 5
          %v3284 = vsel %vm1101, %v3282, %v3283
          %v3285 = vrot.slane %v3283, 4
          %v3286 = vrot.slane %v3135, 5
          %v3287 = vsel %vm1101, %v3285, %v3286
          %v3288 = vrot.slane %v3136, 5
          %v3289 = vrot.slane %v3288, 4
          %v3290 = vrot.slane %v3137, 5
          %v3291 = vsel %vm1101, %v3289, %v3290
          %v3292 = vrot.slane %v3290, 4
          %v3293 = vrot.slane %v3138, 5
          %v3294 = vsel %vm1101, %v3292, %v3293
          %v3295 = vrot.slane %v3139, 5
          %v3296 = vrot.slane %v3295, 4
          %v3297 = vrot.slane %v3140, 5
          %v3298 = vsel %vm1101, %v3296, %v3297
          %v3299 = vrot.slane %v3297, 4
          %v3300 = vrot.slane %v3141, 5
          %v3301 = vsel %vm1101, %v3299, %v3300
          %v3302 = vunpack.c.l.b16 %v3193
          %v3303 = vunpack.c.l.b16 %v3196
          %v3304 = vunpack.c.l.b16 %v3200
          %v3305 = vunpack.c.l.b16 %v3203
          %v3306 = vunpack.c.l.b16 %v3207
          %v3307 = vunpack.c.l.b16 %v3210
          %v3308 = vunpack.c.l.b16 %v3214
          %v3309 = vunpack.c.l.b16 %v3217
          %v3310 = vunpack.c.l.b16 %v3221
          %v3311 = vunpack.c.l.b16 %v3224
          %v3312 = vunpack.c.l.b16 %v3228
          %v3313 = vunpack.c.l.b16 %v3231
          %v3314 = vunpack.c.l.b16 %v3235
          %v3315 = vunpack.c.l.b16 %v3238
          %v3316 = vunpack.c.l.b16 %v3242
          %v3317 = vunpack.c.l.b16 %v3245
          %v3318 = vunpack.c.l.b16 %v3249
          %v3319 = vunpack.c.l.b16 %v3252
          %v3320 = vunpack.c.l.b16 %v3256
          %v3321 = vunpack.c.l.b16 %v3259
          %v3322 = vunpack.c.l.b16 %v3263
          %v3323 = vunpack.c.l.b16 %v3266
          %v3324 = vunpack.c.l.b16 %v3270
          %v3325 = vunpack.c.l.b16 %v3273
          %v3326 = vunpack.c.l.b16 %v3277
          %v3327 = vunpack.c.l.b16 %v3280
          %v3328 = vunpack.c.l.b16 %v3284
          %v3329 = vunpack.c.l.b16 %v3287
          %v3330 = vunpack.c.l.b16 %v3291
          %v3331 = vunpack.c.l.b16 %v3294
          %v3332 = vunpack.c.l.b16 %v3298
          %v3333 = vunpack.c.l.b16 %v3301
          %v3334 = vpack.c.b16 %v3303, %v3302
          %v3335 = vpack.c.b16 %v3305, %v3304
          %v3336 = vpack.c.b16 %v3307, %v3306
          %v3337 = vpack.c.b16 %v3309, %v3308
          %v3338 = vpack.c.b16 %v3311, %v3310
          %v3339 = vpack.c.b16 %v3313, %v3312
          %v3340 = vpack.c.b16 %v3315, %v3314
          %v3341 = vpack.c.b16 %v3317, %v3316
          %v3342 = vpack.c.b16 %v3319, %v3318
          %v3343 = vpack.c.b16 %v3321, %v3320
          %v3344 = vpack.c.b16 %v3323, %v3322
          %v3345 = vpack.c.b16 %v3325, %v3324
          %v3346 = vpack.c.b16 %v3327, %v3326
          %v3347 = vpack.c.b16 %v3329, %v3328
          %v3348 = vpack.c.b16 %v3331, %v3330
          %v3349 = vpack.c.b16 %v3333, %v3332
          %3350 = vrot.lane.b32.xlu0 %v3334, 32
          %v3351 = vpop.permute.xlu0 %3350
          %3352 = vrot.lane.b32.xlu0 %v3335, 32
          %v3353 = vpop.permute.xlu0 %3352
          %3354 = vrot.lane.b32.xlu0 %v3336, 32
          %v3355 = vpop.permute.xlu0 %3354
          %3356 = vrot.lane.b32.xlu0 %v3337, 32
          %v3357 = vpop.permute.xlu0 %3356
          %3358 = vrot.lane.b32.xlu0 %v3338, 32
          %v3359 = vpop.permute.xlu0 %3358
          %3360 = vrot.lane.b32.xlu0 %v3339, 32
          %v3361 = vpop.permute.xlu0 %3360
          %3362 = vrot.lane.b32.xlu0 %v3340, 32
          %v3363 = vpop.permute.xlu0 %3362
          %3364 = vrot.lane.b32.xlu0 %v3341, 32
          %v3365 = vpop.permute.xlu0 %3364
          %3366 = vrot.lane.b32.xlu0 %v3342, 32
          %v3367 = vpop.permute.xlu0 %3366
          %3368 = vrot.lane.b32.xlu0 %v3343, 32
          %v3369 = vpop.permute.xlu0 %3368
          %3370 = vrot.lane.b32.xlu0 %v3344, 32
          %v3371 = vpop.permute.xlu0 %3370
          %3372 = vrot.lane.b32.xlu0 %v3345, 32
          %v3373 = vpop.permute.xlu0 %3372
          %3374 = vrot.lane.b32.xlu0 %v3346, 32
          %v3375 = vpop.permute.xlu0 %3374
          %3376 = vrot.lane.b32.xlu0 %v3347, 32
          %v3377 = vpop.permute.xlu0 %3376
          %3378 = vrot.lane.b32.xlu0 %v3348, 32
          %v3379 = vpop.permute.xlu0 %3378
          %3380 = vrot.lane.b32.xlu0 %v3349, 32
          %v3381 = vpop.permute.xlu0 %3380
          %vm3398 = vcmask 294144
          %3399 = vst.msk [vmem:[#allocation2] sm:$0xff] %vm3398, %v3351
          %3400 = vst.msk [vmem:[#allocation2 + $0x8] sm:$0xff] %vm3398, %v3353
          %3401 = vst.msk [vmem:[#allocation2 + $0x10] sm:$0xff] %vm3398, %v3355
          %3402 = vst.msk [vmem:[#allocation2 + $0x18] sm:$0xff] %vm3398, %v3357
          %3403 = vst.msk [vmem:[#allocation2 + $0x20] sm:$0xff] %vm3398, %v3359
          %3404 = vst.msk [vmem:[#allocation2 + $0x28] sm:$0xff] %vm3398, %v3361
          %3405 = vst.msk [vmem:[#allocation2 + $0x30] sm:$0xff] %vm3398, %v3363
          %3406 = vst.msk [vmem:[#allocation2 + $0x38] sm:$0xff] %vm3398, %v3365
          %3407 = vst.msk [vmem:[#allocation2 + $0x40] sm:$0xff] %vm3398, %v3367
          %3408 = vst.msk [vmem:[#allocation2 + $0x48] sm:$0xff] %vm3398, %v3369
          %3409 = vst.msk [vmem:[#allocation2 + $0x50] sm:$0xff] %vm3398, %v3371
          %3410 = vst.msk [vmem:[#allocation2 + $0x58] sm:$0xff] %vm3398, %v3373
          %3411 = vst.msk [vmem:[#allocation2 + $0x60] sm:$0xff] %vm3398, %v3375
          %3412 = vst.msk [vmem:[#allocation2 + $0x68] sm:$0xff] %vm3398, %v3377
          %3413 = vst.msk [vmem:[#allocation2 + $0x70] sm:$0xff] %vm3398, %v3379
          %3414 = vst.msk [vmem:[#allocation2 + $0x78] sm:$0xff] %vm3398, %v3381
        $region56: #{tpu_custom_call.1} parent=35 // pred_fallthru
          _
        %v3415 = vld [vmem:[#allocation2] sm:$0xff]
        %v3416 = vld [vmem:[#allocation2 + $0x8] sm:$0xff]
        %v3417 = vld [vmem:[#allocation2 + $0x10] sm:$0xff]
        %v3418 = vld [vmem:[#allocation2 + $0x18] sm:$0xff]
        %v3419 = vld [vmem:[#allocation2 + $0x20] sm:$0xff]
        %v3420 = vld [vmem:[#allocation2 + $0x28] sm:$0xff]
        %v3421 = vld [vmem:[#allocation2 + $0x30] sm:$0xff]
        %v3422 = vld [vmem:[#allocation2 + $0x38] sm:$0xff]
        %v3423 = vld [vmem:[#allocation2 + $0x40] sm:$0xff]
        %v3424 = vld [vmem:[#allocation2 + $0x48] sm:$0xff]
        %v3425 = vld [vmem:[#allocation2 + $0x50] sm:$0xff]
        %v3426 = vld [vmem:[#allocation2 + $0x58] sm:$0xff]
        %v3427 = vld [vmem:[#allocation2 + $0x60] sm:$0xff]
        %v3428 = vld [vmem:[#allocation2 + $0x68] sm:$0xff]
        %v3429 = vld [vmem:[#allocation2 + $0x70] sm:$0xff]
        %v3430 = vld [vmem:[#allocation2 + $0x78] sm:$0xff]
        %v3431 = vld [vmem:[#allocation6] sm:$0xf]
        %v3432 = vld [vmem:[#allocation6 + $0x4] sm:$0xf]
        %v3433 = vld [vmem:[#allocation6 + $0x8] sm:$0xf]
        %v3434 = vld [vmem:[#allocation6 + $0xc] sm:$0xf]
        %v3435 = vld [vmem:[#allocation6 + $0x10] sm:$0x3]
        %v3441 = vunpack.c.l.b16 %v3431
        %v3442 = vunpack.c.l.b16 %v3432
        %v3443 = vunpack.c.l.b16 %v3433
        %v3444 = vunpack.c.l.b16 %v3434
        %v3445 = vunpack.c.l.b16 %v3435
        %v3446 = vpack.c.b16 %v3442, %v3441
        %v3447 = vpack.c.b16 %v3444, %v3443
        %v3448 = vpack.c.b16 %v3445, %v3445
        %vm3451 = vcmask 293888
        %v3453 = vsel %vm3451, %v3415, 0
        %v3456 = vsel %vm3451, %v3416, 0
        %v3459 = vsel %vm3451, %v3417, 0
        %v3462 = vsel %vm3451, %v3418, 0
        %v3465 = vsel %vm3451, %v3419, 0
        %v3468 = vsel %vm3451, %v3420, 0
        %v3471 = vsel %vm3451, %v3421, 0
        %v3474 = vsel %vm3451, %v3422, 0
        %v3477 = vsel %vm3451, %v3423, 0
        %v3480 = vsel %vm3451, %v3424, 0
        %v3483 = vsel %vm3451, %v3425, 0
        %v3486 = vsel %vm3451, %v3426, 0
        %v3489 = vsel %vm3451, %v3427, 0
        %v3492 = vsel %vm3451, %v3428, 0
        %v3495 = vsel %vm3451, %v3429, 0
        %v3498 = vsel %vm3451, %v3430, 0
        %vm3500 = vcmask 1041408
        %v3502 = vsel %vm3500, %v3448, 0
        %3504 = vmatprep.subr.bf16.mxu0 0
        %3505 = vmatpush1.bf16.msra.mxu0 %v3446
        %3506 = vmatprep.subr.bf16.mxu0 0
        %3507 = vmatpush1.bf16.msra.mxu0 %v3447
        %3508 = vmatprep.subr.bf16.mxu0 0
        %3509 = vmatpush1.bf16.msra.mxu0 %v3502
        %3510 = vmatprep.subr.bf16.mxu0 0
        %3511 = vmatpush1.bf16.msra.mxu0 0
        %3512 = vmatprep.subr.bf16.mxu0 0
        %3513 = vmatpush1.bf16.msra.mxu0 0
        %3514 = vmatprep.subr.bf16.mxu0 0
        %3515 = vmatpush1.bf16.msra.mxu0 0
        %3516 = vmatprep.subr.bf16.mxu0 0
        %3517 = vmatpush1.bf16.msra.mxu0 0
        %3518 = vmatprep.subr.bf16.mxu0 0
        %3519 = vmatpush1.bf16.msra.mxu0 0
        %3520 = vmatprep.subr.bf16.mxu0 0
        %3521 = vmatpush1.bf16.msra.mxu0 0
        %3522 = vmatprep.subr.bf16.mxu0 0
        %3523 = vmatpush1.bf16.msra.mxu0 0
        %3524 = vmatprep.subr.bf16.mxu0 0
        %3525 = vmatpush1.bf16.msra.mxu0 0
        %3526 = vmatprep.subr.bf16.mxu0 0
        %3527 = vmatpush1.bf16.msra.mxu0 0
        %3528 = vmatprep.subr.bf16.mxu0 0
        %3529 = vmatpush1.bf16.msra.mxu0 0
        %3530 = vmatprep.subr.bf16.mxu0 0
        %3531 = vmatpush1.bf16.msra.mxu0 0
        %3532 = vmatprep.subr.bf16.mxu0 0
        %3533 = vmatpush1.bf16.msra.mxu0 0
        %3534 = vmatprep.subr.bf16.mxu0 0
        %3535 = vmatpush1.bf16.msra.mxu0 0
        %3536 = vmatprep.mubr.bf16.mxu0 0
        %3537 = vmatmul.mubr.bf16.gmra.mrb[0].mxu0 %v3453
        %v3538 = vpop.f32.mrb[0].mxu0
        %v3539 = vadd.f32 0.0, %v3538
        %v3540 = vpop.f32.mrb[0].mxu0
        %v3541 = vpop.f32.mrb[0].mxu0
        %v3542 = vadd.f32 0.0, %v3541
        %v3543 = vpop.f32.mrb[0].mxu0
        %3544 = vmatprep.mubr.bf16.mxu0 0
        %3545 = vmatmul.mubr.bf16.gmra.mrb[0].mxu0 %v3456
        %v3546 = vpop.f32.mrb[0].mxu0
        %v3547 = vadd.f32 0.0, %v3546
        %v3548 = vpop.f32.mrb[0].mxu0
        %v3549 = vpop.f32.mrb[0].mxu0
        %v3550 = vadd.f32 0.0, %v3549
        %v3551 = vpop.f32.mrb[0].mxu0
        %3552 = vmatprep.mubr.bf16.mxu0 0
        %3553 = vmatmul.mubr.bf16.gmra.mrb[0].mxu0 %v3459
        %v3554 = vpop.f32.mrb[0].mxu0
        %v3555 = vadd.f32 0.0, %v3554
        %v3556 = vpop.f32.mrb[0].mxu0
        %v3557 = vpop.f32.mrb[0].mxu0
        %v3558 = vadd.f32 0.0, %v3557
        %v3559 = vpop.f32.mrb[0].mxu0
        %3560 = vmatprep.mubr.bf16.mxu0 0
        %3561 = vmatmul.mubr.bf16.gmra.mrb[0].mxu0 %v3462
        %v3562 = vpop.f32.mrb[0].mxu0
        %v3563 = vadd.f32 0.0, %v3562
        %v3564 = vpop.f32.mrb[0].mxu0
        %v3565 = vpop.f32.mrb[0].mxu0
        %v3566 = vadd.f32 0.0, %v3565
        %v3567 = vpop.f32.mrb[0].mxu0
        %3568 = vmatprep.mubr.bf16.mxu0 0
        %3569 = vmatmul.mubr.bf16.gmra.mrb[0].mxu0 %v3465
        %v3570 = vpop.f32.mrb[0].mxu0
        %v3571 = vadd.f32 0.0, %v3570
        %v3572 = vpop.f32.mrb[0].mxu0
        %v3573 = vpop.f32.mrb[0].mxu0
        %v3574 = vadd.f32 0.0, %v3573
        %v3575 = vpop.f32.mrb[0].mxu0
        %3576 = vmatprep.mubr.bf16.mxu0 0
        %3577 = vmatmul.mubr.bf16.gmra.mrb[0].mxu0 %v3468
        %v3578 = vpop.f32.mrb[0].mxu0
        %v3579 = vadd.f32 0.0, %v3578
        %v3580 = vpop.f32.mrb[0].mxu0
        %v3581 = vpop.f32.mrb[0].mxu0
        %v3582 = vadd.f32 0.0, %v3581
        %v3583 = vpop.f32.mrb[0].mxu0
        %3584 = vmatprep.mubr.bf16.mxu0 0
        %3585 = vmatmul.mubr.bf16.gmra.mrb[0].mxu0 %v3471
        %v3586 = vpop.f32.mrb[0].mxu0
        %v3587 = vadd.f32 0.0, %v3586
        %v3588 = vpop.f32.mrb[0].mxu0
        %v3589 = vpop.f32.mrb[0].mxu0
        %v3590 = vadd.f32 0.0, %v3589
        %v3591 = vpop.f32.mrb[0].mxu0
        %3592 = vmatprep.mubr.bf16.mxu0 0
        %3593 = vmatmul.mubr.bf16.gmra.mrb[0].mxu0 %v3474
        %v3594 = vpop.f32.mrb[0].mxu0
        %v3595 = vadd.f32 0.0, %v3594
        %v3596 = vpop.f32.mrb[0].mxu0
        %v3597 = vpop.f32.mrb[0].mxu0
        %v3598 = vadd.f32 0.0, %v3597
        %v3599 = vpop.f32.mrb[0].mxu0
        %3600 = vmatprep.mubr.bf16.mxu0 0
        %3601 = vmatmul.mubr.bf16.gmra.mrb[0].mxu0 %v3477
        %v3602 = vpop.f32.mrb[0].mxu0
        %v3603 = vadd.f32 0.0, %v3602
        %v3604 = vpop.f32.mrb[0].mxu0
        %v3605 = vpop.f32.mrb[0].mxu0
        %v3606 = vadd.f32 0.0, %v3605
        %v3607 = vpop.f32.mrb[0].mxu0
        %3608 = vmatprep.mubr.bf16.mxu0 0
        %3609 = vmatmul.mubr.bf16.gmra.mrb[0].mxu0 %v3480
        %v3610 = vpop.f32.mrb[0].mxu0
        %v3611 = vadd.f32 0.0, %v3610
        %v3612 = vpop.f32.mrb[0].mxu0
        %v3613 = vpop.f32.mrb[0].mxu0
        %v3614 = vadd.f32 0.0, %v3613
        %v3615 = vpop.f32.mrb[0].mxu0
        %3616 = vmatprep.mubr.bf16.mxu0 0
        %3617 = vmatmul.mubr.bf16.gmra.mrb[0].mxu0 %v3483
        %v3618 = vpop.f32.mrb[0].mxu0
        %v3619 = vadd.f32 0.0, %v3618
        %v3620 = vpop.f32.mrb[0].mxu0
        %v3621 = vpop.f32.mrb[0].mxu0
        %v3622 = vadd.f32 0.0, %v3621
        %v3623 = vpop.f32.mrb[0].mxu0
        %3624 = vmatprep.mubr.bf16.mxu0 0
        %3625 = vmatmul.mubr.bf16.gmra.mrb[0].mxu0 %v3486
        %v3626 = vpop.f32.mrb[0].mxu0
        %v3627 = vadd.f32 0.0, %v3626
        %v3628 = vpop.f32.mrb[0].mxu0
        %v3629 = vpop.f32.mrb[0].mxu0
        %v3630 = vadd.f32 0.0, %v3629
        %v3631 = vpop.f32.mrb[0].mxu0
        %3632 = vmatprep.mubr.bf16.mxu0 0
        %3633 = vmatmul.mubr.bf16.gmra.mrb[0].mxu0 %v3489
        %v3634 = vpop.f32.mrb[0].mxu0
        %v3635 = vadd.f32 0.0, %v3634
        %v3636 = vpop.f32.mrb[0].mxu0
        %v3637 = vpop.f32.mrb[0].mxu0
        %v3638 = vadd.f32 0.0, %v3637
        %v3639 = vpop.f32.mrb[0].mxu0
        %3640 = vmatprep.mubr.bf16.mxu0 0
        %3641 = vmatmul.mubr.bf16.gmra.mrb[0].mxu0 %v3492
        %v3642 = vpop.f32.mrb[0].mxu0
        %v3643 = vadd.f32 0.0, %v3642
        %v3644 = vpop.f32.mrb[0].mxu0
        %v3645 = vpop.f32.mrb[0].mxu0
        %v3646 = vadd.f32 0.0, %v3645
        %v3647 = vpop.f32.mrb[0].mxu0
        %3648 = vmatprep.mubr.bf16.mxu0 0
        %3649 = vmatmul.mubr.bf16.gmra.mrb[0].mxu0 %v3495
        %v3650 = vpop.f32.mrb[0].mxu0
        %v3651 = vadd.f32 0.0, %v3650
        %v3652 = vpop.f32.mrb[0].mxu0
        %v3653 = vpop.f32.mrb[0].mxu0
        %v3654 = vadd.f32 0.0, %v3653
        %v3655 = vpop.f32.mrb[0].mxu0
        %3656 = vmatprep.mubr.bf16.mxu0 0
        %3657 = vmatmul.mubr.bf16.gmra.mrb[0].mxu0 %v3498
        %v3658 = vpop.f32.mrb[0].mxu0
        %v3659 = vadd.f32 0.0, %v3658
        %v3660 = vpop.f32.mrb[0].mxu0
        %v3661 = vpop.f32.mrb[0].mxu0
        %v3662 = vadd.f32 0.0, %v3661
        %v3663 = vpop.f32.mrb[0].mxu0
        %3664 = vdwg.mxu0
        %v3665 = vld [vmem:[#allocation8] sm:$0x1]
        %v3667 = vlaneseq
        %v3668 = vshrl.u32 %v3667, 7
        %v3669 = vsub.s32 0, %v3668
        %v3670 = vrot.slane %v3665, %v3669
        %v3672 = vmul.f32 %v3539, %v3670
        %v3673 = vmul.f32 %v3542, %v3670
        %v3674 = vmul.f32 %v3547, %v3670
        %v3675 = vmul.f32 %v3550, %v3670
        %v3676 = vmul.f32 %v3555, %v3670
        %v3677 = vmul.f32 %v3558, %v3670
        %v3678 = vmul.f32 %v3563, %v3670
        %v3679 = vmul.f32 %v3566, %v3670
        %v3680 = vmul.f32 %v3571, %v3670
        %v3681 = vmul.f32 %v3574, %v3670
        %v3682 = vmul.f32 %v3579, %v3670
        %v3683 = vmul.f32 %v3582, %v3670
        %v3684 = vmul.f32 %v3587, %v3670
        %v3685 = vmul.f32 %v3590, %v3670
        %v3686 = vmul.f32 %v3595, %v3670
        %v3687 = vmul.f32 %v3598, %v3670
        %v3688 = vmul.f32 %v3603, %v3670
        %v3689 = vmul.f32 %v3606, %v3670
        %v3690 = vmul.f32 %v3611, %v3670
        %v3691 = vmul.f32 %v3614, %v3670
        %v3692 = vmul.f32 %v3619, %v3670
        %v3693 = vmul.f32 %v3622, %v3670
        %v3694 = vmul.f32 %v3627, %v3670
        %v3695 = vmul.f32 %v3630, %v3670
        %v3696 = vmul.f32 %v3635, %v3670
        %v3697 = vmul.f32 %v3638, %v3670
        %v3698 = vmul.f32 %v3643, %v3670
        %v3699 = vmul.f32 %v3646, %v3670
        %v3700 = vmul.f32 %v3651, %v3670
        %v3701 = vmul.f32 %v3654, %v3670
        %v3702 = vmul.f32 %v3659, %v3670
        %v3703 = vmul.f32 %v3662, %v3670
        %v3704 = vld [vmem:[#allocation9] sm:$0x1]
        %v3706 = vlaneseq
        %v3707 = vshrl.u32 %v3706, 7
        %v3708 = vsub.s32 0, %v3707
        %v3709 = vrot.slane %v3704, %v3708
        %v3711 = vadd.f32 %v3672, %v3709
        %v3712 = vadd.f32 %v3673, %v3709
        %v3713 = vadd.f32 %v3674, %v3709
        %v3714 = vadd.f32 %v3675, %v3709
        %v3715 = vadd.f32 %v3676, %v3709
        %v3716 = vadd.f32 %v3677, %v3709
        %v3717 = vadd.f32 %v3678, %v3709
        %v3718 = vadd.f32 %v3679, %v3709
        %v3719 = vadd.f32 %v3680, %v3709
        %v3720 = vadd.f32 %v3681, %v3709
        %v3721 = vadd.f32 %v3682, %v3709
        %v3722 = vadd.f32 %v3683, %v3709
        %v3723 = vadd.f32 %v3684, %v3709
        %v3724 = vadd.f32 %v3685, %v3709
        %v3725 = vadd.f32 %v3686, %v3709
        %v3726 = vadd.f32 %v3687, %v3709
        %v3727 = vadd.f32 %v3688, %v3709
        %v3728 = vadd.f32 %v3689, %v3709
        %v3729 = vadd.f32 %v3690, %v3709
        %v3730 = vadd.f32 %v3691, %v3709
        %v3731 = vadd.f32 %v3692, %v3709
        %v3732 = vadd.f32 %v3693, %v3709
        %v3733 = vadd.f32 %v3694, %v3709
        %v3734 = vadd.f32 %v3695, %v3709
        %v3735 = vadd.f32 %v3696, %v3709
        %v3736 = vadd.f32 %v3697, %v3709
        %v3737 = vadd.f32 %v3698, %v3709
        %v3738 = vadd.f32 %v3699, %v3709
        %v3739 = vadd.f32 %v3700, %v3709
        %v3740 = vadd.f32 %v3701, %v3709
        %v3741 = vadd.f32 %v3702, %v3709
        %v3742 = vadd.f32 %v3703, %v3709
        %v3743 = vmax.f32 %v3711, 0.0
        %v3744 = vmax.f32 %v3712, 0.0
        %v3745 = vmax.f32 %v3713, 0.0
        %v3746 = vmax.f32 %v3714, 0.0
        %v3747 = vmax.f32 %v3715, 0.0
        %v3748 = vmax.f32 %v3716, 0.0
        %v3749 = vmax.f32 %v3717, 0.0
        %v3750 = vmax.f32 %v3718, 0.0
        %v3751 = vmax.f32 %v3719, 0.0
        %v3752 = vmax.f32 %v3720, 0.0
        %v3753 = vmax.f32 %v3721, 0.0
        %v3754 = vmax.f32 %v3722, 0.0
        %v3755 = vmax.f32 %v3723, 0.0
        %v3756 = vmax.f32 %v3724, 0.0
        %v3757 = vmax.f32 %v3725, 0.0
        %v3758 = vmax.f32 %v3726, 0.0
        %v3759 = vmax.f32 %v3727, 0.0
        %v3760 = vmax.f32 %v3728, 0.0
        %v3761 = vmax.f32 %v3729, 0.0
        %v3762 = vmax.f32 %v3730, 0.0
        %v3763 = vmax.f32 %v3731, 0.0
        %v3764 = vmax.f32 %v3732, 0.0
        %v3765 = vmax.f32 %v3733, 0.0
        %v3766 = vmax.f32 %v3734, 0.0
        %v3767 = vmax.f32 %v3735, 0.0
        %v3768 = vmax.f32 %v3736, 0.0
        %v3769 = vmax.f32 %v3737, 0.0
        %v3770 = vmax.f32 %v3738, 0.0
        %v3771 = vmax.f32 %v3739, 0.0
        %v3772 = vmax.f32 %v3740, 0.0
        %v3773 = vmax.f32 %v3741, 0.0
        %v3774 = vmax.f32 %v3742, 0.0
        %v3775 = vpack.c.bf16 %v3744, %v3743
        %v3776 = vpack.c.bf16 %v3746, %v3745
        %v3777 = vpack.c.bf16 %v3748, %v3747
        %v3778 = vpack.c.bf16 %v3750, %v3749
        %v3779 = vpack.c.bf16 %v3752, %v3751
        %v3780 = vpack.c.bf16 %v3754, %v3753
        %v3781 = vpack.c.bf16 %v3756, %v3755
        %v3782 = vpack.c.bf16 %v3758, %v3757
        %v3783 = vpack.c.bf16 %v3760, %v3759
        %v3784 = vpack.c.bf16 %v3762, %v3761
        %v3785 = vpack.c.bf16 %v3764, %v3763
        %v3786 = vpack.c.bf16 %v3766, %v3765
        %v3787 = vpack.c.bf16 %v3768, %v3767
        %v3788 = vpack.c.bf16 %v3770, %v3769
        %v3789 = vpack.c.bf16 %v3772, %v3771
        %v3790 = vpack.c.bf16 %v3774, %v3773
        %v3807 = vunpack.c.l.b16 %v3775
        %v3808 = vunpack.c.h.b16 %v3775
        %v3809 = vunpack.c.l.b16 %v3776
        %v3810 = vunpack.c.h.b16 %v3776
        %v3811 = vunpack.c.l.b16 %v3777
        %v3812 = vunpack.c.h.b16 %v3777
        %v3813 = vunpack.c.l.b16 %v3778
        %v3814 = vunpack.c.h.b16 %v3778
        %v3815 = vunpack.c.l.b16 %v3779
        %v3816 = vunpack.c.h.b16 %v3779
        %v3817 = vunpack.c.l.b16 %v3780
        %v3818 = vunpack.c.h.b16 %v3780
        %v3819 = vunpack.c.l.b16 %v3781
        %v3820 = vunpack.c.h.b16 %v3781
        %v3821 = vunpack.c.l.b16 %v3782
        %v3822 = vunpack.c.h.b16 %v3782
        %v3823 = vunpack.c.l.b16 %v3783
        %v3824 = vunpack.c.h.b16 %v3783
        %v3825 = vunpack.c.l.b16 %v3784
        %v3826 = vunpack.c.h.b16 %v3784
        %v3827 = vunpack.c.l.b16 %v3785
        %v3828 = vunpack.c.h.b16 %v3785
        %v3829 = vunpack.c.l.b16 %v3786
        %v3830 = vunpack.c.h.b16 %v3786
        %v3831 = vunpack.c.l.b16 %v3787
        %v3832 = vunpack.c.h.b16 %v3787
        %v3833 = vunpack.c.l.b16 %v3788
        %v3834 = vunpack.c.h.b16 %v3788
        %v3835 = vunpack.c.l.b16 %v3789
        %v3836 = vunpack.c.h.b16 %v3789
        %v3837 = vunpack.c.l.b16 %v3790
        %v3838 = vunpack.c.h.b16 %v3790
        %v3839 = vpack.c.b16 %v3807, %v3807
        %v3840 = vpack.c.b16 %v3808, %v3808
        %v3841 = vpack.c.b16 %v3809, %v3809
        %v3842 = vpack.c.b16 %v3810, %v3810
        %v3843 = vpack.c.b16 %v3811, %v3811
        %v3844 = vpack.c.b16 %v3812, %v3812
        %v3845 = vpack.c.b16 %v3813, %v3813
        %v3846 = vpack.c.b16 %v3814, %v3814
        %v3847 = vpack.c.b16 %v3815, %v3815
        %v3848 = vpack.c.b16 %v3816, %v3816
        %v3849 = vpack.c.b16 %v3817, %v3817
        %v3850 = vpack.c.b16 %v3818, %v3818
        %v3851 = vpack.c.b16 %v3819, %v3819
        %v3852 = vpack.c.b16 %v3820, %v3820
        %v3853 = vpack.c.b16 %v3821, %v3821
        %v3854 = vpack.c.b16 %v3822, %v3822
        %v3855 = vpack.c.b16 %v3823, %v3823
        %v3856 = vpack.c.b16 %v3824, %v3824
        %v3857 = vpack.c.b16 %v3825, %v3825
        %v3858 = vpack.c.b16 %v3826, %v3826
        %v3859 = vpack.c.b16 %v3827, %v3827
        %v3860 = vpack.c.b16 %v3828, %v3828
        %v3861 = vpack.c.b16 %v3829, %v3829
        %v3862 = vpack.c.b16 %v3830, %v3830
        %v3863 = vpack.c.b16 %v3831, %v3831
        %v3864 = vpack.c.b16 %v3832, %v3832
        %v3865 = vpack.c.b16 %v3833, %v3833
        %v3866 = vpack.c.b16 %v3834, %v3834
        %v3867 = vpack.c.b16 %v3835, %v3835
        %v3868 = vpack.c.b16 %v3836, %v3836
        %v3869 = vpack.c.b16 %v3837, %v3837
        %v3870 = vpack.c.b16 %v3838, %v3838
        %3903 = vst [vmem:[%s303] sm:$0xf] %v3839
        %3904 = vst [vmem:[%s303 + $0x4] sm:$0xf] %v3840
        %3905 = vst [vmem:[%s303 + $0x8] sm:$0xf] %v3841
        %3906 = vst [vmem:[%s303 + $0xc] sm:$0xf] %v3842
        %3907 = vst [vmem:[%s303 + $0x10] sm:$0xf] %v3843
        %3908 = vst [vmem:[%s303 + $0x14] sm:$0xf] %v3844
        %3909 = vst [vmem:[%s303 + $0x18] sm:$0xf] %v3845
        %3910 = vst [vmem:[%s303 + $0x1c] sm:$0xf] %v3846
        %3911 = vst [vmem:[%s303 + $0x20] sm:$0xf] %v3847
        %3912 = vst [vmem:[%s303 + $0x24] sm:$0xf] %v3848
        %3913 = vst [vmem:[%s303 + $0x28] sm:$0xf] %v3849
        %3914 = vst [vmem:[%s303 + $0x2c] sm:$0xf] %v3850
        %3915 = vst [vmem:[%s303 + $0x30] sm:$0xf] %v3851
        %3916 = vst [vmem:[%s303 + $0x34] sm:$0xf] %v3852
        %3917 = vst [vmem:[%s303 + $0x38] sm:$0xf] %v3853
        %3918 = vst [vmem:[%s303 + $0x3c] sm:$0xf] %v3854
        %3919 = vst [vmem:[%s303 + $0x40] sm:$0xf] %v3855
        %3920 = vst [vmem:[%s303 + $0x44] sm:$0xf] %v3856
        %3921 = vst [vmem:[%s303 + $0x48] sm:$0xf] %v3857
        %3922 = vst [vmem:[%s303 + $0x4c] sm:$0xf] %v3858
        %3923 = vst [vmem:[%s303 + $0x50] sm:$0xf] %v3859
        %3924 = vst [vmem:[%s303 + $0x54] sm:$0xf] %v3860
        %3925 = vst [vmem:[%s303 + $0x58] sm:$0xf] %v3861
        %3926 = vst [vmem:[%s303 + $0x5c] sm:$0xf] %v3862
        %3927 = vst [vmem:[%s303 + $0x60] sm:$0xf] %v3863
        %3928 = vst [vmem:[%s303 + $0x64] sm:$0xf] %v3864
        %3929 = vst [vmem:[%s303 + $0x68] sm:$0xf] %v3865
        %3930 = vst [vmem:[%s303 + $0x6c] sm:$0xf] %v3866
        %3931 = vst [vmem:[%s303 + $0x70] sm:$0xf] %v3867
        %3932 = vst [vmem:[%s303 + $0x74] sm:$0xf] %v3868
        %3933 = vst [vmem:[%s303 + $0x78] sm:$0xf] %v3869
        %3934 = vst [vmem:[%s303 + $0x7c] sm:$0xf] %v3870
        %s3935 = sand.u32 %s160, 1
        %s3936 = scalar_lea.sflag [#allocation5], %s3935
        %s3937 = sand.u32 %s160, 1
        %s3938 = smul.addr %s3937, 128
        %s3939 = scalar_lea.vmem [#allocation11], %s3938
        // Predicated region
        $region57: #{tpu_custom_call.1} parent=35 // pred_check
          %p3940 = pneg %p170
        $region58: #{tpu_custom_call.1} parent=35 // pred_check_branch
          %3942 = sbr.rel (%p3940) target = $region60
        $region59: #{tpu_custom_call.1} parent=35 // pred_region
          %s3943 = smul.u32 32, %s29
          %s3945 = ssub.s32 2048, 2048
          %3946 = vsyncadd %s3936, %s3945
          %s3947 = sadd.s32 %s30, %s3943
          %s3948 = smul.addr %s28, 32
          %s3949 = sadd.s32 %s3947, %s3948
          %s3950 = smul.addr %s3949, 64
          %s3951 = scalar_lea.hbm %s4, %s3950
          %s3952 = sshll.u32 %s3939, 4
          %s3953 = int_to_ptr.vmem [resolvable:$true] %s3952
          %3958 = dma.vmem_to_hbm [thread:$0]  %s3953, 2048, %s3951, %s3936, 64, 64, 4
        $region60: #{tpu_custom_call.1} parent=35 // pred_fallthru
          _
      $region36: #{tpu_custom_call.1} parent=5 // pred_fallthru
        _
      %p3959 = scmp.le.s32.totalorder 2, %s18
      // Predicated region
      $region61: #{tpu_custom_call.1} parent=5 // pred_check
        %p3960 = pneg %p3959
      $region62: #{tpu_custom_call.1} parent=5 // pred_check_branch
        %3962 = sbr.rel (%p3960) target = $region64
      $region63: #{tpu_custom_call.1} parent=5 // pred_region
        %s3963 = ssub.s32 %s18, 2
        // Predicated region
        $region65: #{tpu_custom_call.1} parent=63 // pred_check
          %p3964 = pneg %p176
        $region66: #{tpu_custom_call.1} parent=63 // pred_check_branch
          %3966 = sbr.rel (%p3964) target = $region68
        $region67: #{tpu_custom_call.1} parent=63 // pred_region
          %s3967 = sand.u32 %s161, 1
          %s3968 = scalar_lea.sflag [#allocation5], %s3967
          %s3969 = sand.u32 %s161, 1
          %s3970 = smul.addr %s3969, 128
          %s3971 = scalar_lea.vmem [#allocation11], %s3970
          %3972 = dma.done %s3968, 2048
        $region68: #{tpu_custom_call.1} parent=63 // pred_fallthru
          _
      $region64: #{tpu_custom_call.1} parent=5 // pred_fallthru
        _
    $region6: #{tpu_custom_call.1} parent=1 // loop_footer
      %s22 = sadd.s32 1, %s18
    $region7: #{tpu_custom_call.1} parent=1 // loop_footer_branch
      %17 = sbr.rel target = $region3
    $region8: #{tpu_custom_call.1} parent=1 // loop_exit
      _
    %3973 = vsyncpa [#allocation4], 1
    %s3974 = scalar_lea.sflag [#allocation4], 1
    %3975 = vsyncpa %s3974, 1
    %3976 = vsyncpa [#allocation7], 1
    %3977 = vsyncpa [#allocation10], 1
    %3978 = vsyncpa [#allocation5], 1
    %s3979 = scalar_lea.sflag [#allocation5], 1
    %3980 = vsyncpa %s3979, 1

</llo_original>
